<compile_context>
chip_gen: v5e
topology: v5e:2x2
jax: 0.10.0
libtpu: 0.0.40
codegen_flags: <defaults>
</compile_context>

<pallas_src>
import functools

import jax
import jax.numpy as jnp
from jax.experimental import pallas as pl
from jax.experimental.pallas import tpu as pltpu

NEG_SLOPE = 0.1
LANE = 128
SUBLANE = 8


def _leaky(v):
    return jnp.where(v > 0, v, NEG_SLOPE * v)


def _round_up(n, m):
    return ((n + m - 1) // m) * m


def _tpu_parallel_blocks():
    """How many batch blocks to expose to the 'parallel' grid axis:
    1 per TensorCore on the chip (perf-only heuristic; correctness never
    depends on it)."""
    try:
        kind = (jax.devices()[0].device_kind or "").lower()
    except Exception:
        return 1
    if "lite" in kind or "v5e" in kind or "v6" in kind:
        return 1            # single TensorCore per device
    if "v7" in kind or "v5p" in kind or "v4" in kind:
        return 2            # 2 TensorCores (v7x / megacore) -> one block each
    return 1


# ---------------------------------------------------------------- kernel ----

def mlp_resblock_kernel(block_num,
                        x_ref,
                        in_w_ref, in_b_ref,
                        blk_w1_ref, blk_b1_ref,
                        blk_w2_ref, blk_b2_ref,
                        out_w1_ref, out_b1_ref,
                        out_w2_ref, out_b2_ref,
                        o_ref):
    # Matmuls run on the MXU in the weights' dtype (bf16) with f32 accumulation;
    # all elementwise work (bias, LeakyReLU, residual) stays in f32.
    def mm(a, w):
        return jnp.dot(a.astype(w.dtype), w, preferred_element_type=jnp.float32)

    # in_mlp: Linear(in_ch, ch) + LeakyReLU(0.1)
    x = _leaky(mm(x_ref[...], in_w_ref[...]) + in_b_ref[...])

    # Residual blocks — static Python unroll (block_num is a compile-time int).
    for i in range(block_num):
        x0 = x
        h = _leaky(mm(x, blk_w1_ref[i]) + blk_b1_ref[i])
        h = mm(h, blk_w2_ref[i]) + blk_b2_ref[i]
        x = _leaky(h + x0)

    # out_mlp: Linear(ch, ch) + LeakyReLU(0.1) + Linear(ch, out_ch)
    h = _leaky(mm(x, out_w1_ref[...]) + out_b1_ref[...])
    o_ref[...] = (mm(h, out_w2_ref[...]) + out_b2_ref[...]).astype(o_ref.dtype)


# --------------------------------------------------------------- wrapper ----

def pack_params(params, block_num, matmul_dtype=jnp.bfloat16):
    """Zero-pad feature dims (including in_ch) to multiples of 128 lanes.
    Exactness is preserved: padded weight rows/columns and biases are zero, and
    LeakyReLU(0)=0 / 0+0=0 keeps padded lanes zero through the residual path.
    Weights are cast to the MXU matmul dtype; biases stay f32 for the f32
    elementwise path."""
    in_ch, ch = params["in_w"].shape
    out_ch = params["out_w2"].shape[1]
    in_ch_p = _round_up(in_ch, LANE)
    ch_p = _round_up(ch, LANE)
    out_ch_p = _round_up(out_ch, LANE)

    def padw(w, shape):
        pads = [(0, s - d) for d, s in zip(w.shape, shape)]
        return jnp.pad(w, pads)

    packed = {
        "in_w":   padw(params["in_w"],   (in_ch_p, ch_p)).astype(matmul_dtype),
        "in_b":   padw(params["in_b"],   (1, ch_p)).astype(jnp.float32),
        "blk_w1": padw(params["blk_w1"], (block_num, ch_p, ch_p)).astype(matmul_dtype),
        "blk_b1": padw(params["blk_b1"], (block_num, 1, ch_p)).astype(jnp.float32),
        "blk_w2": padw(params["blk_w2"], (block_num, ch_p, ch_p)).astype(matmul_dtype),
        "blk_b2": padw(params["blk_b2"], (block_num, 1, ch_p)).astype(jnp.float32),
        "out_w1": padw(params["out_w1"], (ch_p, ch_p)).astype(matmul_dtype),
        "out_b1": padw(params["out_b1"], (1, ch_p)).astype(jnp.float32),
        "out_w2": padw(params["out_w2"], (ch_p, out_ch_p)).astype(matmul_dtype),
        "out_b2": padw(params["out_b2"], (1, out_ch_p)).astype(jnp.float32),
    }
    meta = dict(in_ch=in_ch, ch=ch, out_ch=out_ch,
                in_ch_p=in_ch_p, ch_p=ch_p, out_ch_p=out_ch_p)
    return packed, meta


def prepare_input(x, meta):
    """One-time lane padding of the input features to in_ch_p=128.  Done once
    upstream (alongside pack_params), not per kernel call, so there is no
    per-call pad/HBM round trip."""
    B, in_ch = x.shape
    assert in_ch == meta["in_ch"]
    pad = meta["in_ch_p"] - in_ch
    if pad:
        x = jnp.pad(x, ((0, 0), (0, pad)))
    return x


def mlp_resblock_pallas(x_padded, packed, meta, block_num, *,
                        tb=None, out_dtype=jnp.float32,
                        single_buffer_weights=True):
    """x_padded: [B, in_ch_p] f32 (from prepare_input). Returns the padded
    output [B_pad, out_ch_p]; consumers should keep the padded layout and
    slice (or fuse the slice) downstream."""
    B, in_ch_p = x_padded.shape
    assert in_ch_p == meta["in_ch_p"]
    ch_p, out_ch_p = meta["ch_p"], meta["out_ch_p"]
    in_ch, ch, out_ch = meta["in_ch"], meta["ch"], meta["out_ch"]

    # Generation-aware batch tile: whole batch in one grid step on single-TC
    # chips (v5e/v6e); one block per TensorCore on v7x / megacore.
    if tb is None:
        tb = max(SUBLANE, _round_up(pl.cdiv(B, _tpu_parallel_blocks()), SUBLANE))
    b_pad = _round_up(B, tb)
    if b_pad != B:
        # Rare path: prefer batch sizes divisible by tb (pre-pad upstream).
        x_padded = jnp.pad(x_padded, ((0, b_pad - B), (0, 0)))
    grid = (b_pad // tb,)

    operands = (
        x_padded,
        packed["in_w"], packed["in_b"],
        packed["blk_w1"], packed["blk_b1"],
        packed["blk_w2"], packed["blk_b2"],
        packed["out_w1"], packed["out_b1"],
        packed["out_w2"], packed["out_b2"],
    )

    def resident(arr, single_buffer):
        # Whole-array block with a constant index map: stays VMEM-resident,
        # no re-DMA across grid steps. Single-buffered when supported (the
        # block index never changes, so a second buffer is pure VMEM waste).
        shape = arr.shape
        idx = lambda i, _n=len(shape): (0,) * _n
        if single_buffer:
            return pl.BlockSpec(shape, idx, pipeline_mode=pl.Buffered(1))
        return pl.BlockSpec(shape, idx)

    # Advisory cost estimate: real (unpadded) FLOPs, actual (padded) bytes moved.
    flops = 2 * B * (in_ch * ch
                     + block_num * 2 * ch * ch
                     + ch * ch
                     + ch * out_ch)
    bytes_accessed = (B * in_ch_p * x_padded.dtype.itemsize
                      + b_pad * out_ch_p * jnp.dtype(out_dtype).itemsize
                      + sum(int(v.size) * v.dtype.itemsize for v in packed.values()))

    def build_and_call(single_buffer):
        in_specs = [pl.BlockSpec((tb, in_ch_p), lambda i: (i, 0))]
        in_specs += [resident(op, single_buffer) for op in operands[1:]]
        out_specs = pl.BlockSpec((tb, out_ch_p), lambda i: (i, 0))

        return pl.pallas_call(
            functools.partial(mlp_resblock_kernel, block_num),
            out_shape=jax.ShapeDtypeStruct((b_pad, out_ch_p), out_dtype),
            grid_spec=pltpu.PrefetchScalarGridSpec(
                num_scalar_prefetch=0,
                grid=grid,
                in_specs=in_specs,
                out_specs=out_specs,
            ),
            compiler_params=pltpu.CompilerParams(
                dimension_semantics=("parallel",),   # megacore/v7x sharding
                vmem_limit_bytes=32 * 1024 * 1024,   # explicit budget (fits all gens)
            ),
            cost_estimate=pl.CostEstimate(
                flops=int(flops), transcendentals=0,
                bytes_accessed=int(bytes_accessed)),
        )(*operands)

    if single_buffer_weights:
        try:
            return build_and_call(True)
        except Exception:
            # pl.Buffered(1) not accepted by this jax version: fall back to the
            # default double-buffered specs (perf-neutral at these sizes).
            pass
    return build_and_call(False)


# ------------------------------------------------------------ references ----

def init_params(key, in_ch, ch, out_ch, block_num):
    """Deterministic synthetic parameters. Weights stored as [in, out]
    (i.e. PyTorch's W.T) so the kernel uses x @ W directly."""
    ks = jax.random.split(key, 8)
    scale = 0.1
    return {
        "in_w": scale * jax.random.normal(ks[0], (in_ch, ch), jnp.float32),
        "in_b": scale * jax.random.normal(ks[1], (1, ch), jnp.float32),
        "blk_w1": scale * jax.random.normal(ks[2], (block_num, ch, ch), jnp.float32),
        "blk_b1": scale * jax.random.normal(ks[3], (block_num, 1, ch), jnp.float32),
        "blk_w2": scale * jax.random.normal(ks[4], (block_num, ch, ch), jnp.float32),
        "blk_b2": scale * jax.random.normal(ks[5], (block_num, 1, ch), jnp.float32),
        "out_w1": scale * jax.random.normal(ks[6], (ch, ch), jnp.float32),
        "out_b1": scale * jax.random.normal(ks[7], (1, ch), jnp.float32),
        "out_w2": scale * jax.random.normal(jax.random.fold_in(key, 100),
                                            (ch, out_ch), jnp.float32),
        "out_b2": scale * jax.random.normal(jax.random.fold_in(key, 101),
                                            (1, out_ch), jnp.float32),
    }


def mlp_resblock_ref_f32(x, p, block_num):
    """Pure-JAX f32 reference mirroring the PyTorch forward exactly."""
    x = _leaky(x @ p["in_w"] + p["in_b"])
    for i in range(block_num):
        x0 = x
        h = _leaky(x @ p["blk_w1"][i] + p["blk_b1"][i])
        h = h @ p["blk_w2"][i] + p["blk_b2"][i]
        x = _leaky(h + x0)
    h = _leaky(x @ p["out_w1"] + p["out_b1"])
    return h @ p["out_w2"] + p["out_b2"]


def mlp_resblock_ref_bf16(x, p, block_num):
    """Same math as the kernel: bf16 matmul inputs, f32 accumulation/elementwise."""
    def mm(a, w):
        return jnp.dot(a.astype(jnp.bfloat16), w.astype(jnp.bfloat16),
                       preferred_element_type=jnp.float32)
    x = _leaky(mm(x, p["in_w"]) + p["in_b"])
    for i in range(block_num):
        x0 = x
        h = _leaky(mm(x, p["blk_w1"][i]) + p["blk_b1"][i])
        h = mm(h, p["blk_w2"][i]) + p["blk_b2"][i]
        x = _leaky(h + x0)
    h = _leaky(mm(x, p["out_w1"]) + p["out_b1"])
    return mm(h, p["out_w2"]) + p["out_b2"]


# ---------------------------------------------------------------- main ------

if __name__ == "__main__":
    B, IN_CH, CH, OUT_CH, BLOCK_NUM = 256, 16, 32, 8, 3

    key = jax.random.PRNGKey(0)
    kx, kp = jax.random.split(key)
    x = jax.random.normal(kx, (B, IN_CH), jnp.float32)
    params = init_params(kp, IN_CH, CH, OUT_CH, BLOCK_NUM)

    # One-time packing / lane padding (upstream of the hot path).
    packed, meta = pack_params(params, BLOCK_NUM)
    x_p = prepare_input(x, meta)

    y_pad = mlp_resblock_pallas(x_p, packed, meta, BLOCK_NUM)
    y_pad = jax.block_until_ready(y_pad)
    assert y_pad.shape[0] >= B and y_pad.shape[1] == meta["out_ch_p"]
    assert y_pad.dtype == jnp.float32

    # Consumers would keep the padded layout; slice only for verification here.
    y = y_pad[:B, :OUT_CH]

    # Exact-math reference (same bf16-matmul / f32-accumulate recipe).
    y_bf16 = mlp_resblock_ref_bf16(x, params, BLOCK_NUM)
    assert jnp.allclose(y, y_bf16, atol=1e-2, rtol=1e-2), "mismatch vs bf16 reference"

    # Loose sanity check vs. the full-f32 PyTorch-equivalent reference.
    y_f32 = mlp_resblock_ref_f32(x, params, BLOCK_NUM)
    assert jnp.allclose(y, y_f32, atol=5e-2, rtol=5e-2), "mismatch vs f32 reference"

    print("KERNEL_OK")
</pallas_src>

<mosaic_0001>
module attributes {stable_mosaic.version = 11 : i64} {
  func.func @mlp_resblock_kernel(%arg0: i32, %arg1: memref<256x128xf32, #tpu.memory_space<vmem>>, %arg2: memref<128x128xbf16, #tpu.memory_space<vmem>>, %arg3: memref<1x128xf32, #tpu.memory_space<vmem>>, %arg4: memref<3x128x128xbf16, #tpu.memory_space<vmem>>, %arg5: memref<3x1x128xf32, #tpu.memory_space<vmem>>, %arg6: memref<3x128x128xbf16, #tpu.memory_space<vmem>>, %arg7: memref<3x1x128xf32, #tpu.memory_space<vmem>>, %arg8: memref<128x128xbf16, #tpu.memory_space<vmem>>, %arg9: memref<1x128xf32, #tpu.memory_space<vmem>>, %arg10: memref<128x128xbf16, #tpu.memory_space<vmem>>, %arg11: memref<1x128xf32, #tpu.memory_space<vmem>>, %arg12: memref<256x128xf32, #tpu.memory_space<vmem>>) attributes {dimension_semantics = [#tpu.dimension_semantics<parallel>], iteration_bounds = array<i64: 1>, scalar_prefetch = 0 : i64, scratch_operands = 0 : i64, tpu.core_type = #tpu.core_type<tc>, window_params = [{transform_indices = @transform_0, window_bounds = array<i64: 256, 128>}, {pipeline_mode = #tpu.pipeline_mode<synchronous>, transform_indices = @transform_1, window_bounds = array<i64: 128, 128>}, {pipeline_mode = #tpu.pipeline_mode<synchronous>, transform_indices = @transform_2, window_bounds = array<i64: 1, 128>}, {pipeline_mode = #tpu.pipeline_mode<synchronous>, transform_indices = @transform_3, window_bounds = array<i64: 3, 128, 128>}, {pipeline_mode = #tpu.pipeline_mode<synchronous>, transform_indices = @transform_4, window_bounds = array<i64: 3, 1, 128>}, {pipeline_mode = #tpu.pipeline_mode<synchronous>, transform_indices = @transform_5, window_bounds = array<i64: 3, 128, 128>}, {pipeline_mode = #tpu.pipeline_mode<synchronous>, transform_indices = @transform_6, window_bounds = array<i64: 3, 1, 128>}, {pipeline_mode = #tpu.pipeline_mode<synchronous>, transform_indices = @transform_7, window_bounds = array<i64: 128, 128>}, {pipeline_mode = #tpu.pipeline_mode<synchronous>, transform_indices = @transform_8, window_bounds = array<i64: 1, 128>}, {pipeline_mode = #tpu.pipeline_mode<synchronous>, transform_indices = @transform_9, window_bounds = array<i64: 128, 128>}, {pipeline_mode = #tpu.pipeline_mode<synchronous>, transform_indices = @transform_10, window_bounds = array<i64: 1, 128>}, {transform_indices = @transform_11, window_bounds = array<i64: 256, 128>}]} {
    %c0 = arith.constant 0 : index
    %c0_0 = arith.constant 0 : index
    %0 = vector.load %arg1[%c0, %c0_0] : memref<256x128xf32, #tpu.memory_space<vmem>>, vector<256x128xf32>
    %c0_1 = arith.constant 0 : index
    %c0_2 = arith.constant 0 : index
    %1 = vector.load %arg2[%c0_1, %c0_2] : memref<128x128xbf16, #tpu.memory_space<vmem>>, vector<128x128xbf16>
    %2 = arith.truncf %0 : vector<256x128xf32> to vector<256x128xbf16>
    %cst = arith.constant dense<0.000000e+00> : vector<256x128xf32>
    %3 = tpu.matmul %2, %1, %cst {dimension_numbers = #tpu.dot_dimension_numbers<[1], [0], [0], [1], [0, 0, 1, 1], [], []>} : vector<256x128xbf16>, vector<128x128xbf16>, vector<256x128xf32> -> vector<256x128xf32>
    %c0_3 = arith.constant 0 : index
    %c0_4 = arith.constant 0 : index
    %4 = vector.load %arg3[%c0_3, %c0_4] : memref<1x128xf32, #tpu.memory_space<vmem>>, vector<1x128xf32>
    %5 = vector.broadcast %4 : vector<1x128xf32> to vector<256x128xf32>
    %6 = arith.addf %3, %5 : vector<256x128xf32>
    %cst_5 = arith.constant 0.000000e+00 : f32
    %7 = vector.broadcast %cst_5 : f32 to vector<256x128xf32>
    %8 = arith.cmpf ogt, %6, %7 : vector<256x128xf32>
    %cst_6 = arith.constant 1.000000e-01 : f32
    %9 = vector.broadcast %cst_6 : f32 to vector<256x128xf32>
    %10 = arith.mulf %9, %6 : vector<256x128xf32>
    %11 = arith.select %8, %6, %10 : vector<256x128xi1>, vector<256x128xf32>
    %c0_7 = arith.constant 0 : index
    %c0_8 = arith.constant 0 : index
    %c0_9 = arith.constant 0 : index
    %12 = vector.load %arg4[%c0_7, %c0_8, %c0_9] : memref<3x128x128xbf16, #tpu.memory_space<vmem>>, vector<1x128x128xbf16>
    %13 = vector.shape_cast %12 : vector<1x128x128xbf16> to vector<128x128xbf16>
    %14 = arith.truncf %11 : vector<256x128xf32> to vector<256x128xbf16>
    %cst_10 = arith.constant dense<0.000000e+00> : vector<256x128xf32>
    %15 = tpu.matmul %14, %13, %cst_10 {dimension_numbers = #tpu.dot_dimension_numbers<[1], [0], [0], [1], [0, 0, 1, 1], [], []>} : vector<256x128xbf16>, vector<128x128xbf16>, vector<256x128xf32> -> vector<256x128xf32>
    %c0_11 = arith.constant 0 : index
    %c0_12 = arith.constant 0 : index
    %c0_13 = arith.constant 0 : index
    %16 = vector.load %arg5[%c0_11, %c0_12, %c0_13] : memref<3x1x128xf32, #tpu.memory_space<vmem>>, vector<1x1x128xf32>
    %17 = vector.shape_cast %16 : vector<1x1x128xf32> to vector<1x128xf32>
    %18 = vector.broadcast %17 : vector<1x128xf32> to vector<256x128xf32>
    %19 = arith.addf %15, %18 : vector<256x128xf32>
    %cst_14 = arith.constant 0.000000e+00 : f32
    %20 = vector.broadcast %cst_14 : f32 to vector<256x128xf32>
    %21 = arith.cmpf ogt, %19, %20 : vector<256x128xf32>
    %cst_15 = arith.constant 1.000000e-01 : f32
    %22 = vector.broadcast %cst_15 : f32 to vector<256x128xf32>
    %23 = arith.mulf %22, %19 : vector<256x128xf32>
    %24 = arith.select %21, %19, %23 : vector<256x128xi1>, vector<256x128xf32>
    %c0_16 = arith.constant 0 : index
    %c0_17 = arith.constant 0 : index
    %c0_18 = arith.constant 0 : index
    %25 = vector.load %arg6[%c0_16, %c0_17, %c0_18] : memref<3x128x128xbf16, #tpu.memory_space<vmem>>, vector<1x128x128xbf16>
    %26 = vector.shape_cast %25 : vector<1x128x128xbf16> to vector<128x128xbf16>
    %27 = arith.truncf %24 : vector<256x128xf32> to vector<256x128xbf16>
    %cst_19 = arith.constant dense<0.000000e+00> : vector<256x128xf32>
    %28 = tpu.matmul %27, %26, %cst_19 {dimension_numbers = #tpu.dot_dimension_numbers<[1], [0], [0], [1], [0, 0, 1, 1], [], []>} : vector<256x128xbf16>, vector<128x128xbf16>, vector<256x128xf32> -> vector<256x128xf32>
    %c0_20 = arith.constant 0 : index
    %c0_21 = arith.constant 0 : index
    %c0_22 = arith.constant 0 : index
    %29 = vector.load %arg7[%c0_20, %c0_21, %c0_22] : memref<3x1x128xf32, #tpu.memory_space<vmem>>, vector<1x1x128xf32>
    %30 = vector.shape_cast %29 : vector<1x1x128xf32> to vector<1x128xf32>
    %31 = vector.broadcast %30 : vector<1x128xf32> to vector<256x128xf32>
    %32 = arith.addf %28, %31 : vector<256x128xf32>
    %33 = arith.addf %32, %11 : vector<256x128xf32>
    %cst_23 = arith.constant 0.000000e+00 : f32
    %34 = vector.broadcast %cst_23 : f32 to vector<256x128xf32>
    %35 = arith.cmpf ogt, %33, %34 : vector<256x128xf32>
    %cst_24 = arith.constant 1.000000e-01 : f32
    %36 = vector.broadcast %cst_24 : f32 to vector<256x128xf32>
    %37 = arith.mulf %36, %33 : vector<256x128xf32>
    %38 = arith.select %35, %33, %37 : vector<256x128xi1>, vector<256x128xf32>
    %c1 = arith.constant 1 : index
    %c0_25 = arith.constant 0 : index
    %c0_26 = arith.constant 0 : index
    %39 = vector.load %arg4[%c1, %c0_25, %c0_26] : memref<3x128x128xbf16, #tpu.memory_space<vmem>>, vector<1x128x128xbf16>
    %40 = vector.shape_cast %39 : vector<1x128x128xbf16> to vector<128x128xbf16>
    %41 = arith.truncf %38 : vector<256x128xf32> to vector<256x128xbf16>
    %cst_27 = arith.constant dense<0.000000e+00> : vector<256x128xf32>
    %42 = tpu.matmul %41, %40, %cst_27 {dimension_numbers = #tpu.dot_dimension_numbers<[1], [0], [0], [1], [0, 0, 1, 1], [], []>} : vector<256x128xbf16>, vector<128x128xbf16>, vector<256x128xf32> -> vector<256x128xf32>
    %c1_28 = arith.constant 1 : index
    %c0_29 = arith.constant 0 : index
    %c0_30 = arith.constant 0 : index
    %43 = vector.load %arg5[%c1_28, %c0_29, %c0_30] : memref<3x1x128xf32, #tpu.memory_space<vmem>>, vector<1x1x128xf32>
    %44 = vector.shape_cast %43 : vector<1x1x128xf32> to vector<1x128xf32>
    %45 = vector.broadcast %44 : vector<1x128xf32> to vector<256x128xf32>
    %46 = arith.addf %42, %45 : vector<256x128xf32>
    %cst_31 = arith.constant 0.000000e+00 : f32
    %47 = vector.broadcast %cst_31 : f32 to vector<256x128xf32>
    %48 = arith.cmpf ogt, %46, %47 : vector<256x128xf32>
    %cst_32 = arith.constant 1.000000e-01 : f32
    %49 = vector.broadcast %cst_32 : f32 to vector<256x128xf32>
    %50 = arith.mulf %49, %46 : vector<256x128xf32>
    %51 = arith.select %48, %46, %50 : vector<256x128xi1>, vector<256x128xf32>
    %c1_33 = arith.constant 1 : index
    %c0_34 = arith.constant 0 : index
    %c0_35 = arith.constant 0 : index
    %52 = vector.load %arg6[%c1_33, %c0_34, %c0_35] : memref<3x128x128xbf16, #tpu.memory_space<vmem>>, vector<1x128x128xbf16>
    %53 = vector.shape_cast %52 : vector<1x128x128xbf16> to vector<128x128xbf16>
    %54 = arith.truncf %51 : vector<256x128xf32> to vector<256x128xbf16>
    %cst_36 = arith.constant dense<0.000000e+00> : vector<256x128xf32>
    %55 = tpu.matmul %54, %53, %cst_36 {dimension_numbers = #tpu.dot_dimension_numbers<[1], [0], [0], [1], [0, 0, 1, 1], [], []>} : vector<256x128xbf16>, vector<128x128xbf16>, vector<256x128xf32> -> vector<256x128xf32>
    %c1_37 = arith.constant 1 : index
    %c0_38 = arith.constant 0 : index
    %c0_39 = arith.constant 0 : index
    %56 = vector.load %arg7[%c1_37, %c0_38, %c0_39] : memref<3x1x128xf32, #tpu.memory_space<vmem>>, vector<1x1x128xf32>
    %57 = vector.shape_cast %56 : vector<1x1x128xf32> to vector<1x128xf32>
    %58 = vector.broadcast %57 : vector<1x128xf32> to vector<256x128xf32>
    %59 = arith.addf %55, %58 : vector<256x128xf32>
    %60 = arith.addf %59, %38 : vector<256x128xf32>
    %cst_40 = arith.constant 0.000000e+00 : f32
    %61 = vector.broadcast %cst_40 : f32 to vector<256x128xf32>
    %62 = arith.cmpf ogt, %60, %61 : vector<256x128xf32>
    %cst_41 = arith.constant 1.000000e-01 : f32
    %63 = vector.broadcast %cst_41 : f32 to vector<256x128xf32>
    %64 = arith.mulf %63, %60 : vector<256x128xf32>
    %65 = arith.select %62, %60, %64 : vector<256x128xi1>, vector<256x128xf32>
    %c2 = arith.constant 2 : index
    %c0_42 = arith.constant 0 : index
    %c0_43 = arith.constant 0 : index
    %66 = vector.load %arg4[%c2, %c0_42, %c0_43] : memref<3x128x128xbf16, #tpu.memory_space<vmem>>, vector<1x128x128xbf16>
    %67 = vector.shape_cast %66 : vector<1x128x128xbf16> to vector<128x128xbf16>
    %68 = arith.truncf %65 : vector<256x128xf32> to vector<256x128xbf16>
    %cst_44 = arith.constant dense<0.000000e+00> : vector<256x128xf32>
    %69 = tpu.matmul %68, %67, %cst_44 {dimension_numbers = #tpu.dot_dimension_numbers<[1], [0], [0], [1], [0, 0, 1, 1], [], []>} : vector<256x128xbf16>, vector<128x128xbf16>, vector<256x128xf32> -> vector<256x128xf32>
    %c2_45 = arith.constant 2 : index
    %c0_46 = arith.constant 0 : index
    %c0_47 = arith.constant 0 : index
    %70 = vector.load %arg5[%c2_45, %c0_46, %c0_47] : memref<3x1x128xf32, #tpu.memory_space<vmem>>, vector<1x1x128xf32>
    %71 = vector.shape_cast %70 : vector<1x1x128xf32> to vector<1x128xf32>
    %72 = vector.broadcast %71 : vector<1x128xf32> to vector<256x128xf32>
    %73 = arith.addf %69, %72 : vector<256x128xf32>
    %cst_48 = arith.constant 0.000000e+00 : f32
    %74 = vector.broadcast %cst_48 : f32 to vector<256x128xf32>
    %75 = arith.cmpf ogt, %73, %74 : vector<256x128xf32>
    %cst_49 = arith.constant 1.000000e-01 : f32
    %76 = vector.broadcast %cst_49 : f32 to vector<256x128xf32>
    %77 = arith.mulf %76, %73 : vector<256x128xf32>
    %78 = arith.select %75, %73, %77 : vector<256x128xi1>, vector<256x128xf32>
    %c2_50 = arith.constant 2 : index
    %c0_51 = arith.constant 0 : index
    %c0_52 = arith.constant 0 : index
    %79 = vector.load %arg6[%c2_50, %c0_51, %c0_52] : memref<3x128x128xbf16, #tpu.memory_space<vmem>>, vector<1x128x128xbf16>
    %80 = vector.shape_cast %79 : vector<1x128x128xbf16> to vector<128x128xbf16>
    %81 = arith.truncf %78 : vector<256x128xf32> to vector<256x128xbf16>
    %cst_53 = arith.constant dense<0.000000e+00> : vector<256x128xf32>
    %82 = tpu.matmul %81, %80, %cst_53 {dimension_numbers = #tpu.dot_dimension_numbers<[1], [0], [0], [1], [0, 0, 1, 1], [], []>} : vector<256x128xbf16>, vector<128x128xbf16>, vector<256x128xf32> -> vector<256x128xf32>
    %c2_54 = arith.constant 2 : index
    %c0_55 = arith.constant 0 : index
    %c0_56 = arith.constant 0 : index
    %83 = vector.load %arg7[%c2_54, %c0_55, %c0_56] : memref<3x1x128xf32, #tpu.memory_space<vmem>>, vector<1x1x128xf32>
    %84 = vector.shape_cast %83 : vector<1x1x128xf32> to vector<1x128xf32>
    %85 = vector.broadcast %84 : vector<1x128xf32> to vector<256x128xf32>
    %86 = arith.addf %82, %85 : vector<256x128xf32>
    %87 = arith.addf %86, %65 : vector<256x128xf32>
    %cst_57 = arith.constant 0.000000e+00 : f32
    %88 = vector.broadcast %cst_57 : f32 to vector<256x128xf32>
    %89 = arith.cmpf ogt, %87, %88 : vector<256x128xf32>
    %cst_58 = arith.constant 1.000000e-01 : f32
    %90 = vector.broadcast %cst_58 : f32 to vector<256x128xf32>
    %91 = arith.mulf %90, %87 : vector<256x128xf32>
    %92 = arith.select %89, %87, %91 : vector<256x128xi1>, vector<256x128xf32>
    %c0_59 = arith.constant 0 : index
    %c0_60 = arith.constant 0 : index
    %93 = vector.load %arg8[%c0_59, %c0_60] : memref<128x128xbf16, #tpu.memory_space<vmem>>, vector<128x128xbf16>
    %94 = arith.truncf %92 : vector<256x128xf32> to vector<256x128xbf16>
    %cst_61 = arith.constant dense<0.000000e+00> : vector<256x128xf32>
    %95 = tpu.matmul %94, %93, %cst_61 {dimension_numbers = #tpu.dot_dimension_numbers<[1], [0], [0], [1], [0, 0, 1, 1], [], []>} : vector<256x128xbf16>, vector<128x128xbf16>, vector<256x128xf32> -> vector<256x128xf32>
    %c0_62 = arith.constant 0 : index
    %c0_63 = arith.constant 0 : index
    %96 = vector.load %arg9[%c0_62, %c0_63] : memref<1x128xf32, #tpu.memory_space<vmem>>, vector<1x128xf32>
    %97 = vector.broadcast %96 : vector<1x128xf32> to vector<256x128xf32>
    %98 = arith.addf %95, %97 : vector<256x128xf32>
    %cst_64 = arith.constant 0.000000e+00 : f32
    %99 = vector.broadcast %cst_64 : f32 to vector<256x128xf32>
    %100 = arith.cmpf ogt, %98, %99 : vector<256x128xf32>
    %cst_65 = arith.constant 1.000000e-01 : f32
    %101 = vector.broadcast %cst_65 : f32 to vector<256x128xf32>
    %102 = arith.mulf %101, %98 : vector<256x128xf32>
    %103 = arith.select %100, %98, %102 : vector<256x128xi1>, vector<256x128xf32>
    %c0_66 = arith.constant 0 : index
    %c0_67 = arith.constant 0 : index
    %104 = vector.load %arg10[%c0_66, %c0_67] : memref<128x128xbf16, #tpu.memory_space<vmem>>, vector<128x128xbf16>
    %105 = arith.truncf %103 : vector<256x128xf32> to vector<256x128xbf16>
    %cst_68 = arith.constant dense<0.000000e+00> : vector<256x128xf32>
    %106 = tpu.matmul %105, %104, %cst_68 {dimension_numbers = #tpu.dot_dimension_numbers<[1], [0], [0], [1], [0, 0, 1, 1], [], []>} : vector<256x128xbf16>, vector<128x128xbf16>, vector<256x128xf32> -> vector<256x128xf32>
    %c0_69 = arith.constant 0 : index
    %c0_70 = arith.constant 0 : index
    %107 = vector.load %arg11[%c0_69, %c0_70] : memref<1x128xf32, #tpu.memory_space<vmem>>, vector<1x128xf32>
    %108 = vector.broadcast %107 : vector<1x128xf32> to vector<256x128xf32>
    %109 = arith.addf %106, %108 : vector<256x128xf32>
    %c0_71 = arith.constant 0 : index
    %c0_72 = arith.constant 0 : index
    %110 = vector.load %arg12[%c0_71, %c0_72] : memref<256x128xf32, #tpu.memory_space<vmem>>, vector<256x128xf32>
    tpu.vector_store %arg12[%c0_71, %c0_72], %109 {strides = array<i32>} : memref<256x128xf32, #tpu.memory_space<vmem>>, vector<256x128xf32>,
    return
  }
  func.func @transform_0(%arg0: i32) -> (i32, i32) {
    %c0_i32 = arith.constant 0 : i32
    %c0_i32_0 = arith.constant 0 : i32
    return %arg0, %c0_i32 : i32, i32
  }
  func.func @transform_1(%arg0: i32) -> (i32, i32) {
    %c0_i32 = arith.constant 0 : i32
    %c0_i32_0 = arith.constant 0 : i32
    %c0_i32_1 = arith.constant 0 : i32
    return %c0_i32, %c0_i32_0 : i32, i32
  }
  func.func @transform_2(%arg0: i32) -> (i32, i32) {
    %c0_i32 = arith.constant 0 : i32
    %c0_i32_0 = arith.constant 0 : i32
    %c0_i32_1 = arith.constant 0 : i32
    return %c0_i32, %c0_i32_0 : i32, i32
  }
  func.func @transform_3(%arg0: i32) -> (i32, i32, i32) {
    %c0_i32 = arith.constant 0 : i32
    %c0_i32_0 = arith.constant 0 : i32
    %c0_i32_1 = arith.constant 0 : i32
    %c0_i32_2 = arith.constant 0 : i32
    return %c0_i32, %c0_i32_0, %c0_i32_1 : i32, i32, i32
  }
  func.func @transform_4(%arg0: i32) -> (i32, i32, i32) {
    %c0_i32 = arith.constant 0 : i32
    %c0_i32_0 = arith.constant 0 : i32
    %c0_i32_1 = arith.constant 0 : i32
    %c0_i32_2 = arith.constant 0 : i32
    return %c0_i32, %c0_i32_0, %c0_i32_1 : i32, i32, i32
  }
  func.func @transform_5(%arg0: i32) -> (i32, i32, i32) {
    %c0_i32 = arith.constant 0 : i32
    %c0_i32_0 = arith.constant 0 : i32
    %c0_i32_1 = arith.constant 0 : i32
    %c0_i32_2 = arith.constant 0 : i32
    return %c0_i32, %c0_i32_0, %c0_i32_1 : i32, i32, i32
  }
  func.func @transform_6(%arg0: i32) -> (i32, i32, i32) {
    %c0_i32 = arith.constant 0 : i32
    %c0_i32_0 = arith.constant 0 : i32
    %c0_i32_1 = arith.constant 0 : i32
    %c0_i32_2 = arith.constant 0 : i32
    return %c0_i32, %c0_i32_0, %c0_i32_1 : i32, i32, i32
  }
  func.func @transform_7(%arg0: i32) -> (i32, i32) {
    %c0_i32 = arith.constant 0 : i32
    %c0_i32_0 = arith.constant 0 : i32
    %c0_i32_1 = arith.constant 0 : i32
    return %c0_i32, %c0_i32_0 : i32, i32
  }
  func.func @transform_8(%arg0: i32) -> (i32, i32) {
    %c0_i32 = arith.constant 0 : i32
    %c0_i32_0 = arith.constant 0 : i32
    %c0_i32_1 = arith.constant 0 : i32
    return %c0_i32, %c0_i32_0 : i32, i32
  }
  func.func @transform_9(%arg0: i32) -> (i32, i32) {
    %c0_i32 = arith.constant 0 : i32
    %c0_i32_0 = arith.constant 0 : i32
    %c0_i32_1 = arith.constant 0 : i32
    return %c0_i32, %c0_i32_0 : i32, i32
  }
  func.func @transform_10(%arg0: i32) -> (i32, i32) {
    %c0_i32 = arith.constant 0 : i32
    %c0_i32_0 = arith.constant 0 : i32
    %c0_i32_1 = arith.constant 0 : i32
    return %c0_i32, %c0_i32_0 : i32, i32
  }
  func.func @transform_11(%arg0: i32) -> (i32, i32) {
    %c0_i32 = arith.constant 0 : i32
    %c0_i32_0 = arith.constant 0 : i32
    return %arg0, %c0_i32 : i32, i32
  }
}

module attributes {stable_mosaic.version = 11 : i64} {
  func.func @mlp_resblock_kernel(%arg0: i32, %arg1: memref<256x128xf32, #tpu.memory_space<vmem>>, %arg2: memref<128x128xbf16, #tpu.memory_space<vmem>>, %arg3: memref<1x128xf32, #tpu.memory_space<vmem>>, %arg4: memref<3x128x128xbf16, #tpu.memory_space<vmem>>, %arg5: memref<3x1x128xf32, #tpu.memory_space<vmem>>, %arg6: memref<3x128x128xbf16, #tpu.memory_space<vmem>>, %arg7: memref<3x1x128xf32, #tpu.memory_space<vmem>>, %arg8: memref<128x128xbf16, #tpu.memory_space<vmem>>, %arg9: memref<1x128xf32, #tpu.memory_space<vmem>>, %arg10: memref<128x128xbf16, #tpu.memory_space<vmem>>, %arg11: memref<1x128xf32, #tpu.memory_space<vmem>>, %arg12: memref<256x128xf32, #tpu.memory_space<vmem>>) attributes {dimension_semantics = [#tpu.dimension_semantics<parallel>], iteration_bounds = array<i64: 1>, scalar_prefetch = 0 : i64, scratch_operands = 0 : i64, tpu.core_type = #tpu.core_type<tc>, window_params = [{transform_indices = @transform_0, window_bounds = array<i64: 256, 128>}, {pipeline_mode = #tpu.pipeline_mode<synchronous>, transform_indices = @transform_1, window_bounds = array<i64: 128, 128>}, {pipeline_mode = #tpu.pipeline_mode<synchronous>, transform_indices = @transform_2, window_bounds = array<i64: 1, 128>}, {pipeline_mode = #tpu.pipeline_mode<synchronous>, transform_indices = @transform_3, window_bounds = array<i64: 3, 128, 128>}, {pipeline_mode = #tpu.pipeline_mode<synchronous>, transform_indices = @transform_4, window_bounds = array<i64: 3, 1, 128>}, {pipeline_mode = #tpu.pipeline_mode<synchronous>, transform_indices = @transform_5, window_bounds = array<i64: 3, 128, 128>}, {pipeline_mode = #tpu.pipeline_mode<synchronous>, transform_indices = @transform_6, window_bounds = array<i64: 3, 1, 128>}, {pipeline_mode = #tpu.pipeline_mode<synchronous>, transform_indices = @transform_7, window_bounds = array<i64: 128, 128>}, {pipeline_mode = #tpu.pipeline_mode<synchronous>, transform_indices = @transform_8, window_bounds = array<i64: 1, 128>}, {pipeline_mode = #tpu.pipeline_mode<synchronous>, transform_indices = @transform_9, window_bounds = array<i64: 128, 128>}, {pipeline_mode = #tpu.pipeline_mode<synchronous>, transform_indices = @transform_10, window_bounds = array<i64: 1, 128>}, {transform_indices = @transform_11, window_bounds = array<i64: 256, 128>}]} {
    %c0 = arith.constant 0 : index
    %c0_0 = arith.constant 0 : index
    %0 = vector.load %arg1[%c0, %c0_0] : memref<256x128xf32, #tpu.memory_space<vmem>>, vector<256x128xf32>
    %c0_1 = arith.constant 0 : index
    %c0_2 = arith.constant 0 : index
    %1 = vector.load %arg2[%c0_1, %c0_2] : memref<128x128xbf16, #tpu.memory_space<vmem>>, vector<128x128xbf16>
    %2 = arith.truncf %0 : vector<256x128xf32> to vector<256x128xbf16>
    %cst = arith.constant dense<0.000000e+00> : vector<256x128xf32>
    %3 = tpu.matmul %2, %1, %cst {dimension_numbers = #tpu.dot_dimension_numbers<[1], [0], [0], [1], [0, 0, 1, 1], [], []>} : vector<256x128xbf16>, vector<128x128xbf16>, vector<256x128xf32> -> vector<256x128xf32>
    %c0_3 = arith.constant 0 : index
    %c0_4 = arith.constant 0 : index
    %4 = vector.load %arg3[%c0_3, %c0_4] : memref<1x128xf32, #tpu.memory_space<vmem>>, vector<1x128xf32>
    %5 = vector.broadcast %4 : vector<1x128xf32> to vector<256x128xf32>
    %6 = arith.addf %3, %5 : vector<256x128xf32>
    %cst_5 = arith.constant 0.000000e+00 : f32
    %7 = vector.broadcast %cst_5 : f32 to vector<256x128xf32>
    %8 = arith.cmpf ogt, %6, %7 : vector<256x128xf32>
    %cst_6 = arith.constant 1.000000e-01 : f32
    %9 = vector.broadcast %cst_6 : f32 to vector<256x128xf32>
    %10 = arith.mulf %9, %6 : vector<256x128xf32>
    %11 = arith.select %8, %6, %10 : vector<256x128xi1>, vector<256x128xf32>
    %c0_7 = arith.constant 0 : index
    %c0_8 = arith.constant 0 : index
    %c0_9 = arith.constant 0 : index
    %12 = vector.load %arg4[%c0_7, %c0_8, %c0_9] : memref<3x128x128xbf16, #tpu.memory_space<vmem>>, vector<1x128x128xbf16>
    %13 = vector.shape_cast %12 : vector<1x128x128xbf16> to vector<128x128xbf16>
    %14 = arith.truncf %11 : vector<256x128xf32> to vector<256x128xbf16>
    %cst_10 = arith.constant dense<0.000000e+00> : vector<256x128xf32>
    %15 = tpu.matmul %14, %13, %cst_10 {dimension_numbers = #tpu.dot_dimension_numbers<[1], [0], [0], [1], [0, 0, 1, 1], [], []>} : vector<256x128xbf16>, vector<128x128xbf16>, vector<256x128xf32> -> vector<256x128xf32>
    %c0_11 = arith.constant 0 : index
    %c0_12 = arith.constant 0 : index
    %c0_13 = arith.constant 0 : index
    %16 = vector.load %arg5[%c0_11, %c0_12, %c0_13] : memref<3x1x128xf32, #tpu.memory_space<vmem>>, vector<1x1x128xf32>
    %17 = vector.shape_cast %16 : vector<1x1x128xf32> to vector<1x128xf32>
    %18 = vector.broadcast %17 : vector<1x128xf32> to vector<256x128xf32>
    %19 = arith.addf %15, %18 : vector<256x128xf32>
    %cst_14 = arith.constant 0.000000e+00 : f32
    %20 = vector.broadcast %cst_14 : f32 to vector<256x128xf32>
    %21 = arith.cmpf ogt, %19, %20 : vector<256x128xf32>
    %cst_15 = arith.constant 1.000000e-01 : f32
    %22 = vector.broadcast %cst_15 : f32 to vector<256x128xf32>
    %23 = arith.mulf %22, %19 : vector<256x128xf32>
    %24 = arith.select %21, %19, %23 : vector<256x128xi1>, vector<256x128xf32>
    %c0_16 = arith.constant 0 : index
    %c0_17 = arith.constant 0 : index
    %c0_18 = arith.constant 0 : index
    %25 = vector.load %arg6[%c0_16, %c0_17, %c0_18] : memref<3x128x128xbf16, #tpu.memory_space<vmem>>, vector<1x128x128xbf16>
    %26 = vector.shape_cast %25 : vector<1x128x128xbf16> to vector<128x128xbf16>
    %27 = arith.truncf %24 : vector<256x128xf32> to vector<256x128xbf16>
    %cst_19 = arith.constant dense<0.000000e+00> : vector<256x128xf32>
    %28 = tpu.matmul %27, %26, %cst_19 {dimension_numbers = #tpu.dot_dimension_numbers<[1], [0], [0], [1], [0, 0, 1, 1], [], []>} : vector<256x128xbf16>, vector<128x128xbf16>, vector<256x128xf32> -> vector<256x128xf32>
    %c0_20 = arith.constant 0 : index
    %c0_21 = arith.constant 0 : index
    %c0_22 = arith.constant 0 : index
    %29 = vector.load %arg7[%c0_20, %c0_21, %c0_22] : memref<3x1x128xf32, #tpu.memory_space<vmem>>, vector<1x1x128xf32>
    %30 = vector.shape_cast %29 : vector<1x1x128xf32> to vector<1x128xf32>
    %31 = vector.broadcast %30 : vector<1x128xf32> to vector<256x128xf32>
    %32 = arith.addf %28, %31 : vector<256x128xf32>
    %33 = arith.addf %32, %11 : vector<256x128xf32>
    %cst_23 = arith.constant 0.000000e+00 : f32
    %34 = vector.broadcast %cst_23 : f32 to vector<256x128xf32>
    %35 = arith.cmpf ogt, %33, %34 : vector<256x128xf32>
    %cst_24 = arith.constant 1.000000e-01 : f32
    %36 = vector.broadcast %cst_24 : f32 to vector<256x128xf32>
    %37 = arith.mulf %36, %33 : vector<256x128xf32>
    %38 = arith.select %35, %33, %37 : vector<256x128xi1>, vector<256x128xf32>
    %c1 = arith.constant 1 : index
    %c0_25 = arith.constant 0 : index
    %c0_26 = arith.constant 0 : index
    %39 = vector.load %arg4[%c1, %c0_25, %c0_26] : memref<3x128x128xbf16, #tpu.memory_space<vmem>>, vector<1x128x128xbf16>
    %40 = vector.shape_cast %39 : vector<1x128x128xbf16> to vector<128x128xbf16>
    %41 = arith.truncf %38 : vector<256x128xf32> to vector<256x128xbf16>
    %cst_27 = arith.constant dense<0.000000e+00> : vector<256x128xf32>
    %42 = tpu.matmul %41, %40, %cst_27 {dimension_numbers = #tpu.dot_dimension_numbers<[1], [0], [0], [1], [0, 0, 1, 1], [], []>} : vector<256x128xbf16>, vector<128x128xbf16>, vector<256x128xf32> -> vector<256x128xf32>
    %c1_28 = arith.constant 1 : index
    %c0_29 = arith.constant 0 : index
    %c0_30 = arith.constant 0 : index
    %43 = vector.load %arg5[%c1_28, %c0_29, %c0_30] : memref<3x1x128xf32, #tpu.memory_space<vmem>>, vector<1x1x128xf32>
    %44 = vector.shape_cast %43 : vector<1x1x128xf32> to vector<1x128xf32>
    %45 = vector.broadcast %44 : vector<1x128xf32> to vector<256x128xf32>
    %46 = arith.addf %42, %45 : vector<256x128xf32>
    %cst_31 = arith.constant 0.000000e+00 : f32
    %47 = vector.broadcast %cst_31 : f32 to vector<256x128xf32>
    %48 = arith.cmpf ogt, %46, %47 : vector<256x128xf32>
    %cst_32 = arith.constant 1.000000e-01 : f32
    %49 = vector.broadcast %cst_32 : f32 to vector<256x128xf32>
    %50 = arith.mulf %49, %46 : vector<256x128xf32>
    %51 = arith.select %48, %46, %50 : vector<256x128xi1>, vector<256x128xf32>
    %c1_33 = arith.constant 1 : index
    %c0_34 = arith.constant 0 : index
    %c0_35 = arith.constant 0 : index
    %52 = vector.load %arg6[%c1_33, %c0_34, %c0_35] : memref<3x128x128xbf16, #tpu.memory_space<vmem>>, vector<1x128x128xbf16>
    %53 = vector.shape_cast %52 : vector<1x128x128xbf16> to vector<128x128xbf16>
    %54 = arith.truncf %51 : vector<256x128xf32> to vector<256x128xbf16>
    %cst_36 = arith.constant dense<0.000000e+00> : vector<256x128xf32>
    %55 = tpu.matmul %54, %53, %cst_36 {dimension_numbers = #tpu.dot_dimension_numbers<[1], [0], [0], [1], [0, 0, 1, 1], [], []>} : vector<256x128xbf16>, vector<128x128xbf16>, vector<256x128xf32> -> vector<256x128xf32>
    %c1_37 = arith.constant 1 : index
    %c0_38 = arith.constant 0 : index
    %c0_39 = arith.constant 0 : index
    %56 = vector.load %arg7[%c1_37, %c0_38, %c0_39] : memref<3x1x128xf32, #tpu.memory_space<vmem>>, vector<1x1x128xf32>
    %57 = vector.shape_cast %56 : vector<1x1x128xf32> to vector<1x128xf32>
    %58 = vector.broadcast %57 : vector<1x128xf32> to vector<256x128xf32>
    %59 = arith.addf %55, %58 : vector<256x128xf32>
    %60 = arith.addf %59, %38 : vector<256x128xf32>
    %cst_40 = arith.constant 0.000000e+00 : f32
    %61 = vector.broadcast %cst_40 : f32 to vector<256x128xf32>
    %62 = arith.cmpf ogt, %60, %61 : vector<256x128xf32>
    %cst_41 = arith.constant 1.000000e-01 : f32
    %63 = vector.broadcast %cst_41 : f32 to vector<256x128xf32>
    %64 = arith.mulf %63, %60 : vector<256x128xf32>
    %65 = arith.select %62, %60, %64 : vector<256x128xi1>, vector<256x128xf32>
    %c2 = arith.constant 2 : index
    %c0_42 = arith.constant 0 : index
    %c0_43 = arith.constant 0 : index
    %66 = vector.load %arg4[%c2, %c0_42, %c0_43] : memref<3x128x128xbf16, #tpu.memory_space<vmem>>, vector<1x128x128xbf16>
    %67 = vector.shape_cast %66 : vector<1x128x128xbf16> to vector<128x128xbf16>
    %68 = arith.truncf %65 : vector<256x128xf32> to vector<256x128xbf16>
    %cst_44 = arith.constant dense<0.000000e+00> : vector<256x128xf32>
    %69 = tpu.matmul %68, %67, %cst_44 {dimension_numbers = #tpu.dot_dimension_numbers<[1], [0], [0], [1], [0, 0, 1, 1], [], []>} : vector<256x128xbf16>, vector<128x128xbf16>, vector<256x128xf32> -> vector<256x128xf32>
    %c2_45 = arith.constant 2 : index
    %c0_46 = arith.constant 0 : index
    %c0_47 = arith.constant 0 : index
    %70 = vector.load %arg5[%c2_45, %c0_46, %c0_47] : memref<3x1x128xf32, #tpu.memory_space<vmem>>, vector<1x1x128xf32>
    %71 = vector.shape_cast %70 : vector<1x1x128xf32> to vector<1x128xf32>
    %72 = vector.broadcast %71 : vector<1x128xf32> to vector<256x128xf32>
    %73 = arith.addf %69, %72 : vector<256x128xf32>
    %cst_48 = arith.constant 0.000000e+00 : f32
    %74 = vector.broadcast %cst_48 : f32 to vector<256x128xf32>
    %75 = arith.cmpf ogt, %73, %74 : vector<256x128xf32>
    %cst_49 = arith.constant 1.000000e-01 : f32
    %76 = vector.broadcast %cst_49 : f32 to vector<256x128xf32>
    %77 = arith.mulf %76, %73 : vector<256x128xf32>
    %78 = arith.select %75, %73, %77 : vector<256x128xi1>, vector<256x128xf32>
    %c2_50 = arith.constant 2 : index
    %c0_51 = arith.constant 0 : index
    %c0_52 = arith.constant 0 : index
    %79 = vector.load %arg6[%c2_50, %c0_51, %c0_52] : memref<3x128x128xbf16, #tpu.memory_space<vmem>>, vector<1x128x128xbf16>
    %80 = vector.shape_cast %79 : vector<1x128x128xbf16> to vector<128x128xbf16>
    %81 = arith.truncf %78 : vector<256x128xf32> to vector<256x128xbf16>
    %cst_53 = arith.constant dense<0.000000e+00> : vector<256x128xf32>
    %82 = tpu.matmul %81, %80, %cst_53 {dimension_numbers = #tpu.dot_dimension_numbers<[1], [0], [0], [1], [0, 0, 1, 1], [], []>} : vector<256x128xbf16>, vector<128x128xbf16>, vector<256x128xf32> -> vector<256x128xf32>
    %c2_54 = arith.constant 2 : index
    %c0_55 = arith.constant 0 : index
    %c0_56 = arith.constant 0 : index
    %83 = vector.load %arg7[%c2_54, %c0_55, %c0_56] : memref<3x1x128xf32, #tpu.memory_space<vmem>>, vector<1x1x128xf32>
    %84 = vector.shape_cast %83 : vector<1x1x128xf32> to vector<1x128xf32>
    %85 = vector.broadcast %84 : vector<1x128xf32> to vector<256x128xf32>
    %86 = arith.addf %82, %85 : vector<256x128xf32>
    %87 = arith.addf %86, %65 : vector<256x128xf32>
    %cst_57 = arith.constant 0.000000e+00 : f32
    %88 = vector.broadcast %cst_57 : f32 to vector<256x128xf32>
    %89 = arith.cmpf ogt, %87, %88 : vector<256x128xf32>
    %cst_58 = arith.constant 1.000000e-01 : f32
    %90 = vector.broadcast %cst_58 : f32 to vector<256x128xf32>
    %91 = arith.mulf %90, %87 : vector<256x128xf32>
    %92 = arith.select %89, %87, %91 : vector<256x128xi1>, vector<256x128xf32>
    %c0_59 = arith.constant 0 : index
    %c0_60 = arith.constant 0 : index
    %93 = vector.load %arg8[%c0_59, %c0_60] : memref<128x128xbf16, #tpu.memory_space<vmem>>, vector<128x128xbf16>
    %94 = arith.truncf %92 : vector<256x128xf32> to vector<256x128xbf16>
    %cst_61 = arith.constant dense<0.000000e+00> : vector<256x128xf32>
    %95 = tpu.matmul %94, %93, %cst_61 {dimension_numbers = #tpu.dot_dimension_numbers<[1], [0], [0], [1], [0, 0, 1, 1], [], []>} : vector<256x128xbf16>, vector<128x128xbf16>, vector<256x128xf32> -> vector<256x128xf32>
    %c0_62 = arith.constant 0 : index
    %c0_63 = arith.constant 0 : index
    %96 = vector.load %arg9[%c0_62, %c0_63] : memref<1x128xf32, #tpu.memory_space<vmem>>, vector<1x128xf32>
    %97 = vector.broadcast %96 : vector<1x128xf32> to vector<256x128xf32>
    %98 = arith.addf %95, %97 : vector<256x128xf32>
    %cst_64 = arith.constant 0.000000e+00 : f32
    %99 = vector.broadcast %cst_64 : f32 to vector<256x128xf32>
    %100 = arith.cmpf ogt, %98, %99 : vector<256x128xf32>
    %cst_65 = arith.constant 1.000000e-01 : f32
    %101 = vector.broadcast %cst_65 : f32 to vector<256x128xf32>
    %102 = arith.mulf %101, %98 : vector<256x128xf32>
    %103 = arith.select %100, %98, %102 : vector<256x128xi1>, vector<256x128xf32>
    %c0_66 = arith.constant 0 : index
    %c0_67 = arith.constant 0 : index
    %104 = vector.load %arg10[%c0_66, %c0_67] : memref<128x128xbf16, #tpu.memory_space<vmem>>, vector<128x128xbf16>
    %105 = arith.truncf %103 : vector<256x128xf32> to vector<256x128xbf16>
    %cst_68 = arith.constant dense<0.000000e+00> : vector<256x128xf32>
    %106 = tpu.matmul %105, %104, %cst_68 {dimension_numbers = #tpu.dot_dimension_numbers<[1], [0], [0], [1], [0, 0, 1, 1], [], []>} : vector<256x128xbf16>, vector<128x128xbf16>, vector<256x128xf32> -> vector<256x128xf32>
    %c0_69 = arith.constant 0 : index
    %c0_70 = arith.constant 0 : index
    %107 = vector.load %arg11[%c0_69, %c0_70] : memref<1x128xf32, #tpu.memory_space<vmem>>, vector<1x128xf32>
    %108 = vector.broadcast %107 : vector<1x128xf32> to vector<256x128xf32>
    %109 = arith.addf %106, %108 : vector<256x128xf32>
    %c0_71 = arith.constant 0 : index
    %c0_72 = arith.constant 0 : index
    %110 = vector.load %arg12[%c0_71, %c0_72] : memref<256x128xf32, #tpu.memory_space<vmem>>, vector<256x128xf32>
    tpu.vector_store %arg12[%c0_71, %c0_72], %109 {strides = array<i32>} : memref<256x128xf32, #tpu.memory_space<vmem>>, vector<256x128xf32>,
    return
  }
  func.func @transform_0(%arg0: i32) -> (i32, i32) {
    %c0_i32 = arith.constant 0 : i32
    %c0_i32_0 = arith.constant 0 : i32
    return %arg0, %c0_i32 : i32, i32
  }
  func.func @transform_1(%arg0: i32) -> (i32, i32) {
    %c0_i32 = arith.constant 0 : i32
    %c0_i32_0 = arith.constant 0 : i32
    %c0_i32_1 = arith.constant 0 : i32
    return %c0_i32, %c0_i32_0 : i32, i32
  }
  func.func @transform_2(%arg0: i32) -> (i32, i32) {
    %c0_i32 = arith.constant 0 : i32
    %c0_i32_0 = arith.constant 0 : i32
    %c0_i32_1 = arith.constant 0 : i32
    return %c0_i32, %c0_i32_0 : i32, i32
  }
  func.func @transform_3(%arg0: i32) -> (i32, i32, i32) {
    %c0_i32 = arith.constant 0 : i32
    %c0_i32_0 = arith.constant 0 : i32
    %c0_i32_1 = arith.constant 0 : i32
    %c0_i32_2 = arith.constant 0 : i32
    return %c0_i32, %c0_i32_0, %c0_i32_1 : i32, i32, i32
  }
  func.func @transform_4(%arg0: i32) -> (i32, i32, i32) {
    %c0_i32 = arith.constant 0 : i32
    %c0_i32_0 = arith.constant 0 : i32
    %c0_i32_1 = arith.constant 0 : i32
    %c0_i32_2 = arith.constant 0 : i32
    return %c0_i32, %c0_i32_0, %c0_i32_1 : i32, i32, i32
  }
  func.func @transform_5(%arg0: i32) -> (i32, i32, i32) {
    %c0_i32 = arith.constant 0 : i32
    %c0_i32_0 = arith.constant 0 : i32
    %c0_i32_1 = arith.constant 0 : i32
    %c0_i32_2 = arith.constant 0 : i32
    return %c0_i32, %c0_i32_0, %c0_i32_1 : i32, i32, i32
  }
  func.func @transform_6(%arg0: i32) -> (i32, i32, i32) {
    %c0_i32 = arith.constant 0 : i32
    %c0_i32_0 = arith.constant 0 : i32
    %c0_i32_1 = arith.constant 0 : i32
    %c0_i32_2 = arith.constant 0 : i32
    return %c0_i32, %c0_i32_0, %c0_i32_1 : i32, i32, i32
  }
  func.func @transform_7(%arg0: i32) -> (i32, i32) {
    %c0_i32 = arith.constant 0 : i32
    %c0_i32_0 = arith.constant 0 : i32
    %c0_i32_1 = arith.constant 0 : i32
    return %c0_i32, %c0_i32_0 : i32, i32
  }
  func.func @transform_8(%arg0: i32) -> (i32, i32) {
    %c0_i32 = arith.constant 0 : i32
    %c0_i32_0 = arith.constant 0 : i32
    %c0_i32_1 = arith.constant 0 : i32
    return %c0_i32, %c0_i32_0 : i32, i32
  }
  func.func @transform_9(%arg0: i32) -> (i32, i32) {
    %c0_i32 = arith.constant 0 : i32
    %c0_i32_0 = arith.constant 0 : i32
    %c0_i32_1 = arith.constant 0 : i32
    return %c0_i32, %c0_i32_0 : i32, i32
  }
  func.func @transform_10(%arg0: i32) -> (i32, i32) {
    %c0_i32 = arith.constant 0 : i32
    %c0_i32_0 = arith.constant 0 : i32
    %c0_i32_1 = arith.constant 0 : i32
    return %c0_i32, %c0_i32_0 : i32, i32
  }
  func.func @transform_11(%arg0: i32) -> (i32, i32) {
    %c0_i32 = arith.constant 0 : i32
    %c0_i32_0 = arith.constant 0 : i32
    return %arg0, %c0_i32 : i32, i32
  }
}

</mosaic_0001>

<llo_original>
// kernel: tpu_custom_call.1
$region0: #{tpu_custom_call.1}
  #allocation0 [shape = 'u32[]', space=smem, size = 0x4, offset = 0x4, fixed_abs, tag = 'smem constant byte address 0x4 - core index']
  #allocation1 [shape = 'u32[72,128]{1,0:T(1,128)}', space=vmem, size = 0x9000, scoped, tag = 'internal scratch']
  %s0 = inlined_call_operand.hbm [shape: f32[256,128], index: 0, kind: input, shape index: {}]
  %s1 = inlined_call_operand.hbm [shape: bf16[128,128], index: 1, kind: input, shape index: {}]
  %s2 = inlined_call_operand.hbm [shape: f32[1,128], index: 2, kind: input, shape index: {}]
  %s3 = inlined_call_operand.hbm [shape: bf16[3,128,128], index: 3, kind: input, shape index: {}]
  %s4 = inlined_call_operand.vmem [shape: f32[3,1,128], index: 4, kind: input, shape index: {}]
  %s5 = inlined_call_operand.hbm [shape: bf16[3,128,128], index: 5, kind: input, shape index: {}]
  %s6 = inlined_call_operand.hbm [shape: f32[3,1,128], index: 6, kind: input, shape index: {}]
  %s7 = inlined_call_operand.hbm [shape: bf16[128,128], index: 7, kind: input, shape index: {}]
  %s8 = inlined_call_operand.vmem [shape: f32[1,128], index: 8, kind: input, shape index: {}]
  %s9 = inlined_call_operand.hbm [shape: bf16[128,128], index: 9, kind: input, shape index: {}]
  %s10 = inlined_call_operand.vmem [shape: f32[1,128], index: 10, kind: input, shape index: {}]
  %s11 = inlined_call_operand.hbm [shape: f32[256,128], index: 11, kind: output, shape index: {}]
  %s12 = sld [smem:[#allocation0]]
  $region86: #{tpu_custom_call.1} parent=0
    _
  %s14 = ssub.s32 1, %s12
  %s15 = scalar_select 0, %s14, %s12
  $region1: #{tpu_custom_call.1} parent=0
    #allocation2 [shape = 'u8[131072]{0}', space=vmem, size = 0x20000, scoped, tag = 'input window, operand 0, single buffered']
    #allocation3 [shape = 's32[1]{0}', space=sflag, size = 0x4, scoped, tag = 'scoped memory for tpu_custom_call.1']
    #allocation4 [shape = 's32[1]{0}', space=sflag, size = 0x4, scoped, tag = 'scoped memory for tpu_custom_call.1']
    #allocation5 [shape = 'u8[32768]{0}', space=vmem, size = 0x8000, scoped, tag = 'input window, operand 1, single buffered']
    #allocation6 [shape = 's32[1]{0}', space=sflag, size = 0x4, scoped, tag = 'scoped memory for tpu_custom_call.1']
    #allocation7 [shape = 'u8[512]{0}', space=vmem, size = 0x400, scoped, tag = 'input window, operand 2, single buffered']
    #allocation8 [shape = 'u8[98304]{0}', space=vmem, size = 0x18000, scoped, tag = 'input window, operand 3, single buffered']
    #allocation9 [shape = 's32[1]{0}', space=sflag, size = 0x4, scoped, tag = 'scoped memory for tpu_custom_call.1']
    #allocation10 [shape = 'u8[98304]{0}', space=vmem, size = 0x18000, scoped, tag = 'input window, operand 5, single buffered']
    #allocation11 [shape = 'u8[1536]{0}', space=vmem, size = 0x800, scoped, tag = 'input window, operand 6, single buffered']
    #allocation12 [shape = 's32[1]{0}', space=sflag, size = 0x4, scoped, tag = 'scoped memory for tpu_custom_call.1']
    #allocation13 [shape = 'u8[32768]{0}', space=vmem, size = 0x8000, scoped, tag = 'input window, operand 7, single buffered']
    #allocation14 [shape = 'u8[32768]{0}', space=vmem, size = 0x8000, scoped, tag = 'input window, operand 9, single buffered']
    #allocation15 [shape = 's32[1]{0}', space=sflag, size = 0x4, scoped, tag = 'scoped memory for tpu_custom_call.1']
    #allocation16 [shape = 'u8[131072]{0}', space=vmem, size = 0x20000, scoped, tag = 'output window, operand 0, single buffered']
    %16 = vsyncpa [#allocation3], 0
    %17 = vsyncpa [#allocation6], 0
    %18 = vsyncpa [#allocation9], 0
    %19 = vsyncpa [#allocation12], 0
    %20 = vsyncpa [#allocation15], 0
    %21 = vsyncpa [#allocation4], 0
    // Predicated region
    $region2: #{tpu_custom_call.1} parent=1 // pred_check
      _
    $region3: #{tpu_custom_call.1} parent=1 // pred_check_branch
      %23 = sbr.rel (0) target = $region5
    $region4: #{tpu_custom_call.1} parent=1 // pred_region
      %25 = vsyncadd [#allocation3], 0
      %s26 = sshll.u32 %s0, 4
      %s27 = int_to_ptr.hbm [resolvable:$true] %s26
      %s28 = sshll.u32 [#allocation2], 4
      %s29 = int_to_ptr.vmem [resolvable:$true] %s28
      %34 = dma.hbm_to_vmem [thread:$0]  %s27, 4096, %s29, [#allocation3], 128, 128, 8
    $region5: #{tpu_custom_call.1} parent=1 // pred_fallthru
      _
    // Predicated region
    $region6: #{tpu_custom_call.1} parent=1 // pred_check
      _
    $region7: #{tpu_custom_call.1} parent=1 // pred_check_branch
      %36 = sbr.rel (0) target = $region9
    $region8: #{tpu_custom_call.1} parent=1 // pred_region
      %38 = vsyncadd [#allocation6], 0
      %s39 = sshll.u32 %s1, 4
      %s40 = int_to_ptr.hbm [resolvable:$true] %s39
      %s41 = sshll.u32 [#allocation5], 4
      %s42 = int_to_ptr.vmem [resolvable:$true] %s41
      %47 = dma.hbm_to_vmem [thread:$0]  %s40, 1024, %s42, [#allocation6], 64, 64, 4
    $region9: #{tpu_custom_call.1} parent=1 // pred_fallthru
      _
    // Predicated region
    $region10: #{tpu_custom_call.1} parent=1 // pred_check
      _
    $region11: #{tpu_custom_call.1} parent=1 // pred_check_branch
      %49 = sbr.rel (0) target = $region13
    $region12: #{tpu_custom_call.1} parent=1 // pred_region
      %51 = vsyncadd [#allocation6], 0
      %s53 = sshll.u32 %s2, 4
      %s54 = int_to_ptr.hbm [resolvable:$true] %s53
      %s55 = sshll.u32 [#allocation7], 4
      %s56 = int_to_ptr.vmem [resolvable:$true] %s55
      %58 = dma.hbm_to_vmem [thread:$0]  %s54, 16, %s56, [#allocation6]
    $region13: #{tpu_custom_call.1} parent=1 // pred_fallthru
      _
    // Predicated region
    $region14: #{tpu_custom_call.1} parent=1 // pred_check
      _
    $region15: #{tpu_custom_call.1} parent=1 // pred_check_branch
      %60 = sbr.rel (0) target = $region17
    $region16: #{tpu_custom_call.1} parent=1 // pred_region
      %62 = vsyncadd [#allocation9], 0
      %s63 = sshll.u32 %s3, 4
      %s64 = int_to_ptr.hbm [resolvable:$true] %s63
      %s65 = sshll.u32 [#allocation8], 4
      %s66 = int_to_ptr.vmem [resolvable:$true] %s65
      %71 = dma.hbm_to_vmem [thread:$0]  %s64, 3072, %s66, [#allocation9], 64, 64, 4
    $region17: #{tpu_custom_call.1} parent=1 // pred_fallthru
      _
    // Predicated region
    $region18: #{tpu_custom_call.1} parent=1 // pred_check
      _
    $region19: #{tpu_custom_call.1} parent=1 // pred_check_branch
      %73 = sbr.rel (0) target = $region21
    $region20: #{tpu_custom_call.1} parent=1 // pred_region
      _
    $region21: #{tpu_custom_call.1} parent=1 // pred_fallthru
      _
    // Predicated region
    $region22: #{tpu_custom_call.1} parent=1 // pred_check
      _
    $region23: #{tpu_custom_call.1} parent=1 // pred_check_branch
      %75 = sbr.rel (0) target = $region25
    $region24: #{tpu_custom_call.1} parent=1 // pred_region
      %77 = vsyncadd [#allocation9], 0
      %s78 = sshll.u32 %s5, 4
      %s79 = int_to_ptr.hbm [resolvable:$true] %s78
      %s80 = sshll.u32 [#allocation10], 4
      %s81 = int_to_ptr.vmem [resolvable:$true] %s80
      %86 = dma.hbm_to_vmem [thread:$0]  %s79, 3072, %s81, [#allocation9], 64, 64, 4
    $region25: #{tpu_custom_call.1} parent=1 // pred_fallthru
      _
    // Predicated region
    $region26: #{tpu_custom_call.1} parent=1 // pred_check
      _
    $region27: #{tpu_custom_call.1} parent=1 // pred_check_branch
      %88 = sbr.rel (0) target = $region29
    $region28: #{tpu_custom_call.1} parent=1 // pred_region
      %90 = vsyncadd [#allocation12], 0
      %s91 = sshll.u32 %s6, 4
      %s92 = int_to_ptr.hbm [resolvable:$true] %s91
      %s93 = sshll.u32 [#allocation11], 4
      %s94 = int_to_ptr.vmem [resolvable:$true] %s93
      %99 = dma.hbm_to_vmem [thread:$0]  %s92, 48, %s94, [#allocation12], 16, 16, 1
    $region29: #{tpu_custom_call.1} parent=1 // pred_fallthru
      _
    // Predicated region
    $region30: #{tpu_custom_call.1} parent=1 // pred_check
      _
    $region31: #{tpu_custom_call.1} parent=1 // pred_check_branch
      %101 = sbr.rel (0) target = $region33
    $region32: #{tpu_custom_call.1} parent=1 // pred_region
      %103 = vsyncadd [#allocation12], 0
      %s104 = sshll.u32 %s7, 4
      %s105 = int_to_ptr.hbm [resolvable:$true] %s104
      %s106 = sshll.u32 [#allocation13], 4
      %s107 = int_to_ptr.vmem [resolvable:$true] %s106
      %112 = dma.hbm_to_vmem [thread:$0]  %s105, 1024, %s107, [#allocation12], 64, 64, 4
    $region33: #{tpu_custom_call.1} parent=1 // pred_fallthru
      _
    // Predicated region
    $region34: #{tpu_custom_call.1} parent=1 // pred_check
      _
    $region35: #{tpu_custom_call.1} parent=1 // pred_check_branch
      %114 = sbr.rel (0) target = $region37
    $region36: #{tpu_custom_call.1} parent=1 // pred_region
      _
    $region37: #{tpu_custom_call.1} parent=1 // pred_fallthru
      _
    // Predicated region
    $region38: #{tpu_custom_call.1} parent=1 // pred_check
      _
    $region39: #{tpu_custom_call.1} parent=1 // pred_check_branch
      %116 = sbr.rel (0) target = $region41
    $region40: #{tpu_custom_call.1} parent=1 // pred_region
      %118 = vsyncadd [#allocation15], 0
      %s119 = sshll.u32 %s9, 4
      %s120 = int_to_ptr.hbm [resolvable:$true] %s119
      %s121 = sshll.u32 [#allocation14], 4
      %s122 = int_to_ptr.vmem [resolvable:$true] %s121
      %127 = dma.hbm_to_vmem [thread:$0]  %s120, 1024, %s122, [#allocation15], 64, 64, 4
    $region41: #{tpu_custom_call.1} parent=1 // pred_fallthru
      _
    // Predicated region
    $region42: #{tpu_custom_call.1} parent=1 // pred_check
      _
    $region43: #{tpu_custom_call.1} parent=1 // pred_check_branch
      %129 = sbr.rel (0) target = $region45
    $region44: #{tpu_custom_call.1} parent=1 // pred_region
      _
    $region45: #{tpu_custom_call.1} parent=1 // pred_fallthru
      _
    // Predicated region
    $region46: #{tpu_custom_call.1} parent=1 // pred_check
      _
    $region47: #{tpu_custom_call.1} parent=1 // pred_check_branch
      %131 = sbr.rel (0) target = $region49
    $region48: #{tpu_custom_call.1} parent=1 // pred_region
      %133 = dma.done [#allocation3], 4096
    $region49: #{tpu_custom_call.1} parent=1 // pred_fallthru
      _
    // Predicated region
    $region50: #{tpu_custom_call.1} parent=1 // pred_check
      _
    $region51: #{tpu_custom_call.1} parent=1 // pred_check_branch
      %135 = sbr.rel (0) target = $region53
    $region52: #{tpu_custom_call.1} parent=1 // pred_region
      %137 = dma.done [#allocation6], 1024
    $region53: #{tpu_custom_call.1} parent=1 // pred_fallthru
      _
    // Predicated region
    $region54: #{tpu_custom_call.1} parent=1 // pred_check
      _
    $region55: #{tpu_custom_call.1} parent=1 // pred_check_branch
      %139 = sbr.rel (0) target = $region57
    $region56: #{tpu_custom_call.1} parent=1 // pred_region
      %141 = dma.done [#allocation6], 16
    $region57: #{tpu_custom_call.1} parent=1 // pred_fallthru
      _
    // Predicated region
    $region58: #{tpu_custom_call.1} parent=1 // pred_check
      _
    $region59: #{tpu_custom_call.1} parent=1 // pred_check_branch
      %143 = sbr.rel (0) target = $region61
    $region60: #{tpu_custom_call.1} parent=1 // pred_region
      %145 = dma.done [#allocation9], 3072
    $region61: #{tpu_custom_call.1} parent=1 // pred_fallthru
      _
    // Predicated region
    $region62: #{tpu_custom_call.1} parent=1 // pred_check
      _
    $region63: #{tpu_custom_call.1} parent=1 // pred_check_branch
      %147 = sbr.rel (0) target = $region65
    $region64: #{tpu_custom_call.1} parent=1 // pred_region
      %149 = dma.done [#allocation9], 3072
    $region65: #{tpu_custom_call.1} parent=1 // pred_fallthru
      _
    // Predicated region
    $region66: #{tpu_custom_call.1} parent=1 // pred_check
      _
    $region67: #{tpu_custom_call.1} parent=1 // pred_check_branch
      %151 = sbr.rel (0) target = $region69
    $region68: #{tpu_custom_call.1} parent=1 // pred_region
      %153 = dma.done [#allocation12], 48
    $region69: #{tpu_custom_call.1} parent=1 // pred_fallthru
      _
    // Predicated region
    $region70: #{tpu_custom_call.1} parent=1 // pred_check
      _
    $region71: #{tpu_custom_call.1} parent=1 // pred_check_branch
      %155 = sbr.rel (0) target = $region73
    $region72: #{tpu_custom_call.1} parent=1 // pred_region
      %157 = dma.done [#allocation12], 1024
    $region73: #{tpu_custom_call.1} parent=1 // pred_fallthru
      _
    // Predicated region
    $region74: #{tpu_custom_call.1} parent=1 // pred_check
      _
    $region75: #{tpu_custom_call.1} parent=1 // pred_check_branch
      %159 = sbr.rel (0) target = $region77
    $region76: #{tpu_custom_call.1} parent=1 // pred_region
      %161 = dma.done [#allocation15], 1024
    $region77: #{tpu_custom_call.1} parent=1 // pred_fallthru
      _
    %v162 = vld [vmem:[#allocation2] sm:$0xff]
    %v163 = vld [vmem:[#allocation2 + $0x8] sm:$0xff]
    %v164 = vld [vmem:[#allocation2 + $0x10] sm:$0xff]
    %v165 = vld [vmem:[#allocation2 + $0x18] sm:$0xff]
    %v166 = vld [vmem:[#allocation2 + $0x20] sm:$0xff]
    %v167 = vld [vmem:[#allocation2 + $0x28] sm:$0xff]
    %v168 = vld [vmem:[#allocation2 + $0x30] sm:$0xff]
    %v169 = vld [vmem:[#allocation2 + $0x38] sm:$0xff]
    %v170 = vld [vmem:[#allocation2 + $0x40] sm:$0xff]
    %v171 = vld [vmem:[#allocation2 + $0x48] sm:$0xff]
    %v172 = vld [vmem:[#allocation2 + $0x50] sm:$0xff]
    %v173 = vld [vmem:[#allocation2 + $0x58] sm:$0xff]
    %v174 = vld [vmem:[#allocation2 + $0x60] sm:$0xff]
    %v175 = vld [vmem:[#allocation2 + $0x68] sm:$0xff]
    %v176 = vld [vmem:[#allocation2 + $0x70] sm:$0xff]
    %v177 = vld [vmem:[#allocation2 + $0x78] sm:$0xff]
    %v178 = vld [vmem:[#allocation2 + $0x80] sm:$0xff]
    %v179 = vld [vmem:[#allocation2 + $0x88] sm:$0xff]
    %v180 = vld [vmem:[#allocation2 + $0x90] sm:$0xff]
    %v181 = vld [vmem:[#allocation2 + $0x98] sm:$0xff]
    %v182 = vld [vmem:[#allocation2 + $0xa0] sm:$0xff]
    %v183 = vld [vmem:[#allocation2 + $0xa8] sm:$0xff]
    %v184 = vld [vmem:[#allocation2 + $0xb0] sm:$0xff]
    %v185 = vld [vmem:[#allocation2 + $0xb8] sm:$0xff]
    %v186 = vld [vmem:[#allocation2 + $0xc0] sm:$0xff]
    %v187 = vld [vmem:[#allocation2 + $0xc8] sm:$0xff]
    %v188 = vld [vmem:[#allocation2 + $0xd0] sm:$0xff]
    %v189 = vld [vmem:[#allocation2 + $0xd8] sm:$0xff]
    %v190 = vld [vmem:[#allocation2 + $0xe0] sm:$0xff]
    %v191 = vld [vmem:[#allocation2 + $0xe8] sm:$0xff]
    %v192 = vld [vmem:[#allocation2 + $0xf0] sm:$0xff]
    %v193 = vld [vmem:[#allocation2 + $0xf8] sm:$0xff]
    %v194 = vld [vmem:[#allocation5] sm:$0xf]
    %v195 = vld [vmem:[#allocation5 + $0x4] sm:$0xf]
    %v196 = vld [vmem:[#allocation5 + $0x8] sm:$0xf]
    %v197 = vld [vmem:[#allocation5 + $0xc] sm:$0xf]
    %v198 = vld [vmem:[#allocation5 + $0x10] sm:$0xf]
    %v199 = vld [vmem:[#allocation5 + $0x14] sm:$0xf]
    %v200 = vld [vmem:[#allocation5 + $0x18] sm:$0xf]
    %v201 = vld [vmem:[#allocation5 + $0x1c] sm:$0xf]
    %v202 = vld [vmem:[#allocation5 + $0x20] sm:$0xf]
    %v203 = vld [vmem:[#allocation5 + $0x24] sm:$0xf]
    %v204 = vld [vmem:[#allocation5 + $0x28] sm:$0xf]
    %v205 = vld [vmem:[#allocation5 + $0x2c] sm:$0xf]
    %v206 = vld [vmem:[#allocation5 + $0x30] sm:$0xf]
    %v207 = vld [vmem:[#allocation5 + $0x34] sm:$0xf]
    %v208 = vld [vmem:[#allocation5 + $0x38] sm:$0xf]
    %v209 = vld [vmem:[#allocation5 + $0x3c] sm:$0xf]
    %v210 = vpack.c.bf16 %v163, %v162
    %v211 = vpack.c.bf16 %v165, %v164
    %v212 = vpack.c.bf16 %v167, %v166
    %v213 = vpack.c.bf16 %v169, %v168
    %v214 = vpack.c.bf16 %v171, %v170
    %v215 = vpack.c.bf16 %v173, %v172
    %v216 = vpack.c.bf16 %v175, %v174
    %v217 = vpack.c.bf16 %v177, %v176
    %v218 = vpack.c.bf16 %v179, %v178
    %v219 = vpack.c.bf16 %v181, %v180
    %v220 = vpack.c.bf16 %v183, %v182
    %v221 = vpack.c.bf16 %v185, %v184
    %v222 = vpack.c.bf16 %v187, %v186
    %v223 = vpack.c.bf16 %v189, %v188
    %v224 = vpack.c.bf16 %v191, %v190
    %v225 = vpack.c.bf16 %v193, %v192
    %v226 = vld [vmem:[#allocation7] sm:$0x1]
    %v228 = vperm.slane %v226, 0
    %v246 = vunpack.c.l.b16 %v194
    %v247 = vunpack.c.l.b16 %v195
    %v248 = vunpack.c.l.b16 %v196
    %v249 = vunpack.c.l.b16 %v197
    %v250 = vunpack.c.l.b16 %v198
    %v251 = vunpack.c.l.b16 %v199
    %v252 = vunpack.c.l.b16 %v200
    %v253 = vunpack.c.l.b16 %v201
    %v254 = vunpack.c.l.b16 %v202
    %v255 = vunpack.c.l.b16 %v203
    %v256 = vunpack.c.l.b16 %v204
    %v257 = vunpack.c.l.b16 %v205
    %v258 = vunpack.c.l.b16 %v206
    %v259 = vunpack.c.l.b16 %v207
    %v260 = vunpack.c.l.b16 %v208
    %v261 = vunpack.c.l.b16 %v209
    %v262 = vpack.c.b16 %v247, %v246
    %v263 = vpack.c.b16 %v249, %v248
    %v264 = vpack.c.b16 %v251, %v250
    %v265 = vpack.c.b16 %v253, %v252
    %v266 = vpack.c.b16 %v255, %v254
    %v267 = vpack.c.b16 %v257, %v256
    %v268 = vpack.c.b16 %v259, %v258
    %v269 = vpack.c.b16 %v261, %v260
    %278 = vmatpush.bf16.msra.mxu0 %v269
    %279 = vmatpush.bf16.msra.mxu0 %v268
    %280 = vmatpush.bf16.msra.mxu0 %v267
    %281 = vmatpush.bf16.msra.mxu0 %v266
    %282 = vmatpush.bf16.msra.mxu0 %v265
    %283 = vmatpush.bf16.msra.mxu0 %v264
    %284 = vmatpush.bf16.msra.mxu0 %v263
    %285 = vmatpush.bf16.msra.mxu0 %v262
    %286 = vmatmul.bf16.gmra.mxu0 %v210
    %v287 = vpop.f32.mrf.mxu0
    %v288 = vadd.f32 %v228, %v287
    %v289 = vpop.f32.mrf.mxu0
    %v290 = vadd.f32 %v228, %v289
    %291 = vmatmul.bf16.gmra.mxu0 %v211
    %v292 = vpop.f32.mrf.mxu0
    %v293 = vadd.f32 %v228, %v292
    %v294 = vpop.f32.mrf.mxu0
    %v295 = vadd.f32 %v228, %v294
    %296 = vmatmul.bf16.gmra.mxu0 %v212
    %v297 = vpop.f32.mrf.mxu0
    %v298 = vadd.f32 %v228, %v297
    %v299 = vpop.f32.mrf.mxu0
    %v300 = vadd.f32 %v228, %v299
    %301 = vmatmul.bf16.gmra.mxu0 %v213
    %v302 = vpop.f32.mrf.mxu0
    %v303 = vadd.f32 %v228, %v302
    %v304 = vpop.f32.mrf.mxu0
    %v305 = vadd.f32 %v228, %v304
    %306 = vmatmul.bf16.gmra.mxu0 %v214
    %v307 = vpop.f32.mrf.mxu0
    %v308 = vadd.f32 %v228, %v307
    %v309 = vpop.f32.mrf.mxu0
    %v310 = vadd.f32 %v228, %v309
    %311 = vmatmul.bf16.gmra.mxu0 %v215
    %v312 = vpop.f32.mrf.mxu0
    %v313 = vadd.f32 %v228, %v312
    %v314 = vpop.f32.mrf.mxu0
    %v315 = vadd.f32 %v228, %v314
    %316 = vmatmul.bf16.gmra.mxu0 %v216
    %v317 = vpop.f32.mrf.mxu0
    %v318 = vadd.f32 %v228, %v317
    %v319 = vpop.f32.mrf.mxu0
    %v320 = vadd.f32 %v228, %v319
    %321 = vmatmul.bf16.gmra.mxu0 %v217
    %v322 = vpop.f32.mrf.mxu0
    %v323 = vadd.f32 %v228, %v322
    %v324 = vpop.f32.mrf.mxu0
    %v325 = vadd.f32 %v228, %v324
    %326 = vmatmul.bf16.gmra.mxu0 %v218
    %v327 = vpop.f32.mrf.mxu0
    %v328 = vadd.f32 %v228, %v327
    %v329 = vpop.f32.mrf.mxu0
    %v330 = vadd.f32 %v228, %v329
    %331 = vmatmul.bf16.gmra.mxu0 %v219
    %v332 = vpop.f32.mrf.mxu0
    %v333 = vadd.f32 %v228, %v332
    %v334 = vpop.f32.mrf.mxu0
    %v335 = vadd.f32 %v228, %v334
    %336 = vmatmul.bf16.gmra.mxu0 %v220
    %v337 = vpop.f32.mrf.mxu0
    %v338 = vadd.f32 %v228, %v337
    %v339 = vpop.f32.mrf.mxu0
    %v340 = vadd.f32 %v228, %v339
    %341 = vmatmul.bf16.gmra.mxu0 %v221
    %v342 = vpop.f32.mrf.mxu0
    %v343 = vadd.f32 %v228, %v342
    %v344 = vpop.f32.mrf.mxu0
    %v345 = vadd.f32 %v228, %v344
    %346 = vmatmul.bf16.gmra.mxu0 %v222
    %v347 = vpop.f32.mrf.mxu0
    %v348 = vadd.f32 %v228, %v347
    %v349 = vpop.f32.mrf.mxu0
    %v350 = vadd.f32 %v228, %v349
    %351 = vmatmul.bf16.gmra.mxu0 %v223
    %v352 = vpop.f32.mrf.mxu0
    %v353 = vadd.f32 %v228, %v352
    %v354 = vpop.f32.mrf.mxu0
    %v355 = vadd.f32 %v228, %v354
    %356 = vmatmul.bf16.gmra.mxu0 %v224
    %v357 = vpop.f32.mrf.mxu0
    %v358 = vadd.f32 %v228, %v357
    %v359 = vpop.f32.mrf.mxu0
    %v360 = vadd.f32 %v228, %v359
    %361 = vmatmul.bf16.gmra.mxu0 %v225
    %v362 = vpop.f32.mrf.mxu0
    %v363 = vadd.f32 %v228, %v362
    %v364 = vpop.f32.mrf.mxu0
    %v365 = vadd.f32 %v228, %v364
    %366 = vdwg.mxu0
    %vm367 = vcmp.gt.f32.partialorder %v288, 0.0
    %vm368 = vcmp.gt.f32.partialorder %v290, 0.0
    %vm369 = vcmp.gt.f32.partialorder %v293, 0.0
    %vm370 = vcmp.gt.f32.partialorder %v295, 0.0
    %vm371 = vcmp.gt.f32.partialorder %v298, 0.0
    %vm372 = vcmp.gt.f32.partialorder %v300, 0.0
    %vm373 = vcmp.gt.f32.partialorder %v303, 0.0
    %vm374 = vcmp.gt.f32.partialorder %v305, 0.0
    %vm375 = vcmp.gt.f32.partialorder %v308, 0.0
    %vm376 = vcmp.gt.f32.partialorder %v310, 0.0
    %vm377 = vcmp.gt.f32.partialorder %v313, 0.0
    %vm378 = vcmp.gt.f32.partialorder %v315, 0.0
    %vm379 = vcmp.gt.f32.partialorder %v318, 0.0
    %vm380 = vcmp.gt.f32.partialorder %v320, 0.0
    %vm381 = vcmp.gt.f32.partialorder %v323, 0.0
    %vm382 = vcmp.gt.f32.partialorder %v325, 0.0
    %vm383 = vcmp.gt.f32.partialorder %v328, 0.0
    %vm384 = vcmp.gt.f32.partialorder %v330, 0.0
    %vm385 = vcmp.gt.f32.partialorder %v333, 0.0
    %vm386 = vcmp.gt.f32.partialorder %v335, 0.0
    %vm387 = vcmp.gt.f32.partialorder %v338, 0.0
    %vm388 = vcmp.gt.f32.partialorder %v340, 0.0
    %vm389 = vcmp.gt.f32.partialorder %v343, 0.0
    %vm390 = vcmp.gt.f32.partialorder %v345, 0.0
    %vm391 = vcmp.gt.f32.partialorder %v348, 0.0
    %vm392 = vcmp.gt.f32.partialorder %v350, 0.0
    %vm393 = vcmp.gt.f32.partialorder %v353, 0.0
    %vm394 = vcmp.gt.f32.partialorder %v355, 0.0
    %vm395 = vcmp.gt.f32.partialorder %v358, 0.0
    %vm396 = vcmp.gt.f32.partialorder %v360, 0.0
    %vm397 = vcmp.gt.f32.partialorder %v363, 0.0
    %vm398 = vcmp.gt.f32.partialorder %v365, 0.0
    %v399 = vmul.f32 %v288, 0.1
    %v400 = vmul.f32 %v290, 0.1
    %v401 = vmul.f32 %v293, 0.1
    %v402 = vmul.f32 %v295, 0.1
    %v403 = vmul.f32 %v298, 0.1
    %v404 = vmul.f32 %v300, 0.1
    %v405 = vmul.f32 %v303, 0.1
    %v406 = vmul.f32 %v305, 0.1
    %v407 = vmul.f32 %v308, 0.1
    %v408 = vmul.f32 %v310, 0.1
    %v409 = vmul.f32 %v313, 0.1
    %v410 = vmul.f32 %v315, 0.1
    %v411 = vmul.f32 %v318, 0.1
    %v412 = vmul.f32 %v320, 0.1
    %v413 = vmul.f32 %v323, 0.1
    %v414 = vmul.f32 %v325, 0.1
    %v415 = vmul.f32 %v328, 0.1
    %v416 = vmul.f32 %v330, 0.1
    %v417 = vmul.f32 %v333, 0.1
    %v418 = vmul.f32 %v335, 0.1
    %v419 = vmul.f32 %v338, 0.1
    %v420 = vmul.f32 %v340, 0.1
    %v421 = vmul.f32 %v343, 0.1
    %v422 = vmul.f32 %v345, 0.1
    %v423 = vmul.f32 %v348, 0.1
    %v424 = vmul.f32 %v350, 0.1
    %v425 = vmul.f32 %v353, 0.1
    %v426 = vmul.f32 %v355, 0.1
    %v427 = vmul.f32 %v358, 0.1
    %v428 = vmul.f32 %v360, 0.1
    %v429 = vmul.f32 %v363, 0.1
    %v430 = vmul.f32 %v365, 0.1
    %v431 = vsel %vm367, %v288, %v399
    %v432 = vsel %vm368, %v290, %v400
    %v433 = vsel %vm369, %v293, %v401
    %v434 = vsel %vm370, %v295, %v402
    %v435 = vsel %vm371, %v298, %v403
    %v436 = vsel %vm372, %v300, %v404
    %v437 = vsel %vm373, %v303, %v405
    %v438 = vsel %vm374, %v305, %v406
    %v439 = vsel %vm375, %v308, %v407
    %v440 = vsel %vm376, %v310, %v408
    %v441 = vsel %vm377, %v313, %v409
    %v442 = vsel %vm378, %v315, %v410
    %v443 = vsel %vm379, %v318, %v411
    %v444 = vsel %vm380, %v320, %v412
    %v445 = vsel %vm381, %v323, %v413
    %v446 = vsel %vm382, %v325, %v414
    %v447 = vsel %vm383, %v328, %v415
    %v448 = vsel %vm384, %v330, %v416
    %v449 = vsel %vm385, %v333, %v417
    %v450 = vsel %vm386, %v335, %v418
    %v451 = vsel %vm387, %v338, %v419
    %v452 = vsel %vm388, %v340, %v420
    %v453 = vsel %vm389, %v343, %v421
    %v454 = vsel %vm390, %v345, %v422
    %v455 = vsel %vm391, %v348, %v423
    %v456 = vsel %vm392, %v350, %v424
    %v457 = vsel %vm393, %v353, %v425
    %v458 = vsel %vm394, %v355, %v426
    %v459 = vsel %vm395, %v358, %v427
    %v460 = vsel %vm396, %v360, %v428
    %v461 = vsel %vm397, %v363, %v429
    %v462 = vsel %vm398, %v365, %v430
    %v463 = vld [vmem:[#allocation8] sm:$0xf]
    %v464 = vld [vmem:[#allocation8 + $0x4] sm:$0xf]
    %v465 = vld [vmem:[#allocation8 + $0x8] sm:$0xf]
    %v466 = vld [vmem:[#allocation8 + $0xc] sm:$0xf]
    %v467 = vld [vmem:[#allocation8 + $0x10] sm:$0xf]
    %v468 = vld [vmem:[#allocation8 + $0x14] sm:$0xf]
    %v469 = vld [vmem:[#allocation8 + $0x18] sm:$0xf]
    %v470 = vld [vmem:[#allocation8 + $0x1c] sm:$0xf]
    %v471 = vld [vmem:[#allocation8 + $0x20] sm:$0xf]
    %v472 = vld [vmem:[#allocation8 + $0x24] sm:$0xf]
    %v473 = vld [vmem:[#allocation8 + $0x28] sm:$0xf]
    %v474 = vld [vmem:[#allocation8 + $0x2c] sm:$0xf]
    %v475 = vld [vmem:[#allocation8 + $0x30] sm:$0xf]
    %v476 = vld [vmem:[#allocation8 + $0x34] sm:$0xf]
    %v477 = vld [vmem:[#allocation8 + $0x38] sm:$0xf]
    %v478 = vld [vmem:[#allocation8 + $0x3c] sm:$0xf]
    %v479 = vpack.c.bf16 %v432, %v431
    %v480 = vpack.c.bf16 %v434, %v433
    %v481 = vpack.c.bf16 %v436, %v435
    %v482 = vpack.c.bf16 %v438, %v437
    %v483 = vpack.c.bf16 %v440, %v439
    %v484 = vpack.c.bf16 %v442, %v441
    %v485 = vpack.c.bf16 %v444, %v443
    %v486 = vpack.c.bf16 %v446, %v445
    %v487 = vpack.c.bf16 %v448, %v447
    %v488 = vpack.c.bf16 %v450, %v449
    %v489 = vpack.c.bf16 %v452, %v451
    %v490 = vpack.c.bf16 %v454, %v453
    %v491 = vpack.c.bf16 %v456, %v455
    %v492 = vpack.c.bf16 %v458, %v457
    %v493 = vpack.c.bf16 %v460, %v459
    %v494 = vpack.c.bf16 %v462, %v461
    %v495 = vld [vmem:[%s4] sm:$0x1]
    %v497 = vperm.slane %v495, 0
    %v515 = vunpack.c.l.b16 %v463
    %v516 = vunpack.c.l.b16 %v464
    %v517 = vunpack.c.l.b16 %v465
    %v518 = vunpack.c.l.b16 %v466
    %v519 = vunpack.c.l.b16 %v467
    %v520 = vunpack.c.l.b16 %v468
    %v521 = vunpack.c.l.b16 %v469
    %v522 = vunpack.c.l.b16 %v470
    %v523 = vunpack.c.l.b16 %v471
    %v524 = vunpack.c.l.b16 %v472
    %v525 = vunpack.c.l.b16 %v473
    %v526 = vunpack.c.l.b16 %v474
    %v527 = vunpack.c.l.b16 %v475
    %v528 = vunpack.c.l.b16 %v476
    %v529 = vunpack.c.l.b16 %v477
    %v530 = vunpack.c.l.b16 %v478
    %v531 = vpack.c.b16 %v516, %v515
    %v532 = vpack.c.b16 %v518, %v517
    %v533 = vpack.c.b16 %v520, %v519
    %v534 = vpack.c.b16 %v522, %v521
    %v535 = vpack.c.b16 %v524, %v523
    %v536 = vpack.c.b16 %v526, %v525
    %v537 = vpack.c.b16 %v528, %v527
    %v538 = vpack.c.b16 %v530, %v529
    %547 = vmatpush.bf16.msra.mxu0 %v538
    %548 = vmatpush.bf16.msra.mxu0 %v537
    %549 = vmatpush.bf16.msra.mxu0 %v536
    %550 = vmatpush.bf16.msra.mxu0 %v535
    %551 = vmatpush.bf16.msra.mxu0 %v534
    %552 = vmatpush.bf16.msra.mxu0 %v533
    %553 = vmatpush.bf16.msra.mxu0 %v532
    %554 = vmatpush.bf16.msra.mxu0 %v531
    %555 = vmatmul.bf16.gmra.mxu0 %v479
    %v556 = vpop.f32.mrf.mxu0
    %v557 = vadd.f32 %v497, %v556
    %v558 = vpop.f32.mrf.mxu0
    %v559 = vadd.f32 %v497, %v558
    %560 = vmatmul.bf16.gmra.mxu0 %v480
    %v561 = vpop.f32.mrf.mxu0
    %v562 = vadd.f32 %v497, %v561
    %v563 = vpop.f32.mrf.mxu0
    %v564 = vadd.f32 %v497, %v563
    %565 = vmatmul.bf16.gmra.mxu0 %v481
    %v566 = vpop.f32.mrf.mxu0
    %v567 = vadd.f32 %v497, %v566
    %v568 = vpop.f32.mrf.mxu0
    %v569 = vadd.f32 %v497, %v568
    %570 = vmatmul.bf16.gmra.mxu0 %v482
    %v571 = vpop.f32.mrf.mxu0
    %v572 = vadd.f32 %v497, %v571
    %v573 = vpop.f32.mrf.mxu0
    %v574 = vadd.f32 %v497, %v573
    %575 = vmatmul.bf16.gmra.mxu0 %v483
    %v576 = vpop.f32.mrf.mxu0
    %v577 = vadd.f32 %v497, %v576
    %v578 = vpop.f32.mrf.mxu0
    %v579 = vadd.f32 %v497, %v578
    %580 = vmatmul.bf16.gmra.mxu0 %v484
    %v581 = vpop.f32.mrf.mxu0
    %v582 = vadd.f32 %v497, %v581
    %v583 = vpop.f32.mrf.mxu0
    %v584 = vadd.f32 %v497, %v583
    %585 = vmatmul.bf16.gmra.mxu0 %v485
    %v586 = vpop.f32.mrf.mxu0
    %v587 = vadd.f32 %v497, %v586
    %v588 = vpop.f32.mrf.mxu0
    %v589 = vadd.f32 %v497, %v588
    %590 = vmatmul.bf16.gmra.mxu0 %v486
    %v591 = vpop.f32.mrf.mxu0
    %v592 = vadd.f32 %v497, %v591
    %v593 = vpop.f32.mrf.mxu0
    %v594 = vadd.f32 %v497, %v593
    %595 = vmatmul.bf16.gmra.mxu0 %v487
    %v596 = vpop.f32.mrf.mxu0
    %v597 = vadd.f32 %v497, %v596
    %v598 = vpop.f32.mrf.mxu0
    %v599 = vadd.f32 %v497, %v598
    %600 = vmatmul.bf16.gmra.mxu0 %v488
    %v601 = vpop.f32.mrf.mxu0
    %v602 = vadd.f32 %v497, %v601
    %v603 = vpop.f32.mrf.mxu0
    %v604 = vadd.f32 %v497, %v603
    %605 = vmatmul.bf16.gmra.mxu0 %v489
    %v606 = vpop.f32.mrf.mxu0
    %v607 = vadd.f32 %v497, %v606
    %v608 = vpop.f32.mrf.mxu0
    %v609 = vadd.f32 %v497, %v608
    %610 = vmatmul.bf16.gmra.mxu0 %v490
    %v611 = vpop.f32.mrf.mxu0
    %v612 = vadd.f32 %v497, %v611
    %v613 = vpop.f32.mrf.mxu0
    %v614 = vadd.f32 %v497, %v613
    %615 = vmatmul.bf16.gmra.mxu0 %v491
    %v616 = vpop.f32.mrf.mxu0
    %v617 = vadd.f32 %v497, %v616
    %v618 = vpop.f32.mrf.mxu0
    %v619 = vadd.f32 %v497, %v618
    %620 = vmatmul.bf16.gmra.mxu0 %v492
    %v621 = vpop.f32.mrf.mxu0
    %v622 = vadd.f32 %v497, %v621
    %v623 = vpop.f32.mrf.mxu0
    %v624 = vadd.f32 %v497, %v623
    %625 = vmatmul.bf16.gmra.mxu0 %v493
    %v626 = vpop.f32.mrf.mxu0
    %v627 = vadd.f32 %v497, %v626
    %v628 = vpop.f32.mrf.mxu0
    %v629 = vadd.f32 %v497, %v628
    %630 = vmatmul.bf16.gmra.mxu0 %v494
    %v631 = vpop.f32.mrf.mxu0
    %v632 = vadd.f32 %v497, %v631
    %v633 = vpop.f32.mrf.mxu0
    %v634 = vadd.f32 %v497, %v633
    %635 = vdwg.mxu0
    %vm636 = vcmp.gt.f32.partialorder %v557, 0.0
    %vm637 = vcmp.gt.f32.partialorder %v559, 0.0
    %vm638 = vcmp.gt.f32.partialorder %v562, 0.0
    %vm639 = vcmp.gt.f32.partialorder %v564, 0.0
    %vm640 = vcmp.gt.f32.partialorder %v567, 0.0
    %vm641 = vcmp.gt.f32.partialorder %v569, 0.0
    %vm642 = vcmp.gt.f32.partialorder %v572, 0.0
    %vm643 = vcmp.gt.f32.partialorder %v574, 0.0
    %vm644 = vcmp.gt.f32.partialorder %v577, 0.0
    %vm645 = vcmp.gt.f32.partialorder %v579, 0.0
    %vm646 = vcmp.gt.f32.partialorder %v582, 0.0
    %vm647 = vcmp.gt.f32.partialorder %v584, 0.0
    %vm648 = vcmp.gt.f32.partialorder %v587, 0.0
    %vm649 = vcmp.gt.f32.partialorder %v589, 0.0
    %vm650 = vcmp.gt.f32.partialorder %v592, 0.0
    %vm651 = vcmp.gt.f32.partialorder %v594, 0.0
    %vm652 = vcmp.gt.f32.partialorder %v597, 0.0
    %vm653 = vcmp.gt.f32.partialorder %v599, 0.0
    %vm654 = vcmp.gt.f32.partialorder %v602, 0.0
    %vm655 = vcmp.gt.f32.partialorder %v604, 0.0
    %vm656 = vcmp.gt.f32.partialorder %v607, 0.0
    %vm657 = vcmp.gt.f32.partialorder %v609, 0.0
    %vm658 = vcmp.gt.f32.partialorder %v612, 0.0
    %vm659 = vcmp.gt.f32.partialorder %v614, 0.0
    %vm660 = vcmp.gt.f32.partialorder %v617, 0.0
    %vm661 = vcmp.gt.f32.partialorder %v619, 0.0
    %vm662 = vcmp.gt.f32.partialorder %v622, 0.0
    %vm663 = vcmp.gt.f32.partialorder %v624, 0.0
    %vm664 = vcmp.gt.f32.partialorder %v627, 0.0
    %vm665 = vcmp.gt.f32.partialorder %v629, 0.0
    %vm666 = vcmp.gt.f32.partialorder %v632, 0.0
    %vm667 = vcmp.gt.f32.partialorder %v634, 0.0
    %v668 = vmul.f32 %v557, 0.1
    %v669 = vmul.f32 %v559, 0.1
    %v670 = vmul.f32 %v562, 0.1
    %v671 = vmul.f32 %v564, 0.1
    %v672 = vmul.f32 %v567, 0.1
    %v673 = vmul.f32 %v569, 0.1
    %v674 = vmul.f32 %v572, 0.1
    %v675 = vmul.f32 %v574, 0.1
    %v676 = vmul.f32 %v577, 0.1
    %v677 = vmul.f32 %v579, 0.1
    %v678 = vmul.f32 %v582, 0.1
    %v679 = vmul.f32 %v584, 0.1
    %v680 = vmul.f32 %v587, 0.1
    %v681 = vmul.f32 %v589, 0.1
    %v682 = vmul.f32 %v592, 0.1
    %v683 = vmul.f32 %v594, 0.1
    %v684 = vmul.f32 %v597, 0.1
    %v685 = vmul.f32 %v599, 0.1
    %v686 = vmul.f32 %v602, 0.1
    %v687 = vmul.f32 %v604, 0.1
    %v688 = vmul.f32 %v607, 0.1
    %v689 = vmul.f32 %v609, 0.1
    %v690 = vmul.f32 %v612, 0.1
    %v691 = vmul.f32 %v614, 0.1
    %v692 = vmul.f32 %v617, 0.1
    %v693 = vmul.f32 %v619, 0.1
    %v694 = vmul.f32 %v622, 0.1
    %v695 = vmul.f32 %v624, 0.1
    %v696 = vmul.f32 %v627, 0.1
    %v697 = vmul.f32 %v629, 0.1
    %v698 = vmul.f32 %v632, 0.1
    %v699 = vmul.f32 %v634, 0.1
    %v700 = vsel %vm636, %v557, %v668
    %v701 = vsel %vm637, %v559, %v669
    %v702 = vsel %vm638, %v562, %v670
    %v703 = vsel %vm639, %v564, %v671
    %v704 = vsel %vm640, %v567, %v672
    %v705 = vsel %vm641, %v569, %v673
    %v706 = vsel %vm642, %v572, %v674
    %v707 = vsel %vm643, %v574, %v675
    %v708 = vsel %vm644, %v577, %v676
    %v709 = vsel %vm645, %v579, %v677
    %v710 = vsel %vm646, %v582, %v678
    %v711 = vsel %vm647, %v584, %v679
    %v712 = vsel %vm648, %v587, %v680
    %v713 = vsel %vm649, %v589, %v681
    %v714 = vsel %vm650, %v592, %v682
    %v715 = vsel %vm651, %v594, %v683
    %v716 = vsel %vm652, %v597, %v684
    %v717 = vsel %vm653, %v599, %v685
    %v718 = vsel %vm654, %v602, %v686
    %v719 = vsel %vm655, %v604, %v687
    %v720 = vsel %vm656, %v607, %v688
    %v721 = vsel %vm657, %v609, %v689
    %v722 = vsel %vm658, %v612, %v690
    %v723 = vsel %vm659, %v614, %v691
    %v724 = vsel %vm660, %v617, %v692
    %v725 = vsel %vm661, %v619, %v693
    %v726 = vsel %vm662, %v622, %v694
    %v727 = vsel %vm663, %v624, %v695
    %v728 = vsel %vm664, %v627, %v696
    %v729 = vsel %vm665, %v629, %v697
    %v730 = vsel %vm666, %v632, %v698
    %v731 = vsel %vm667, %v634, %v699
    %v732 = vld [vmem:[#allocation10] sm:$0xf]
    %v733 = vld [vmem:[#allocation10 + $0x4] sm:$0xf]
    %v734 = vld [vmem:[#allocation10 + $0x8] sm:$0xf]
    %v735 = vld [vmem:[#allocation10 + $0xc] sm:$0xf]
    %v736 = vld [vmem:[#allocation10 + $0x10] sm:$0xf]
    %v737 = vld [vmem:[#allocation10 + $0x14] sm:$0xf]
    %v738 = vld [vmem:[#allocation10 + $0x18] sm:$0xf]
    %v739 = vld [vmem:[#allocation10 + $0x1c] sm:$0xf]
    %v740 = vld [vmem:[#allocation10 + $0x20] sm:$0xf]
    %v741 = vld [vmem:[#allocation10 + $0x24] sm:$0xf]
    %v742 = vld [vmem:[#allocation10 + $0x28] sm:$0xf]
    %v743 = vld [vmem:[#allocation10 + $0x2c] sm:$0xf]
    %v744 = vld [vmem:[#allocation10 + $0x30] sm:$0xf]
    %v745 = vld [vmem:[#allocation10 + $0x34] sm:$0xf]
    %v746 = vld [vmem:[#allocation10 + $0x38] sm:$0xf]
    %v747 = vld [vmem:[#allocation10 + $0x3c] sm:$0xf]
    %v748 = vpack.c.bf16 %v701, %v700
    %v749 = vpack.c.bf16 %v703, %v702
    %v750 = vpack.c.bf16 %v705, %v704
    %v751 = vpack.c.bf16 %v707, %v706
    %v752 = vpack.c.bf16 %v709, %v708
    %v753 = vpack.c.bf16 %v711, %v710
    %v754 = vpack.c.bf16 %v713, %v712
    %v755 = vpack.c.bf16 %v715, %v714
    %v756 = vpack.c.bf16 %v717, %v716
    %v757 = vpack.c.bf16 %v719, %v718
    %v758 = vpack.c.bf16 %v721, %v720
    %v759 = vpack.c.bf16 %v723, %v722
    %v760 = vpack.c.bf16 %v725, %v724
    %v761 = vpack.c.bf16 %v727, %v726
    %v762 = vpack.c.bf16 %v729, %v728
    %v763 = vpack.c.bf16 %v731, %v730
    %v764 = vld [vmem:[#allocation11] sm:$0x1]
    %v766 = vperm.slane %v764, 0
    %v784 = vunpack.c.l.b16 %v732
    %v785 = vunpack.c.l.b16 %v733
    %v786 = vunpack.c.l.b16 %v734
    %v787 = vunpack.c.l.b16 %v735
    %v788 = vunpack.c.l.b16 %v736
    %v789 = vunpack.c.l.b16 %v737
    %v790 = vunpack.c.l.b16 %v738
    %v791 = vunpack.c.l.b16 %v739
    %v792 = vunpack.c.l.b16 %v740
    %v793 = vunpack.c.l.b16 %v741
    %v794 = vunpack.c.l.b16 %v742
    %v795 = vunpack.c.l.b16 %v743
    %v796 = vunpack.c.l.b16 %v744
    %v797 = vunpack.c.l.b16 %v745
    %v798 = vunpack.c.l.b16 %v746
    %v799 = vunpack.c.l.b16 %v747
    %v800 = vpack.c.b16 %v785, %v784
    %v801 = vpack.c.b16 %v787, %v786
    %v802 = vpack.c.b16 %v789, %v788
    %v803 = vpack.c.b16 %v791, %v790
    %v804 = vpack.c.b16 %v793, %v792
    %v805 = vpack.c.b16 %v795, %v794
    %v806 = vpack.c.b16 %v797, %v796
    %v807 = vpack.c.b16 %v799, %v798
    %816 = vmatpush.bf16.msra.mxu0 %v807
    %817 = vmatpush.bf16.msra.mxu0 %v806
    %818 = vmatpush.bf16.msra.mxu0 %v805
    %819 = vmatpush.bf16.msra.mxu0 %v804
    %820 = vmatpush.bf16.msra.mxu0 %v803
    %821 = vmatpush.bf16.msra.mxu0 %v802
    %822 = vmatpush.bf16.msra.mxu0 %v801
    %823 = vmatpush.bf16.msra.mxu0 %v800
    %824 = vmatmul.bf16.gmra.mxu0 %v748
    %v825 = vpop.f32.mrf.mxu0
    %v826 = vadd.f32 %v766, %v825
    %v827 = vpop.f32.mrf.mxu0
    %v828 = vadd.f32 %v766, %v827
    %829 = vmatmul.bf16.gmra.mxu0 %v749
    %v830 = vpop.f32.mrf.mxu0
    %v831 = vadd.f32 %v766, %v830
    %v832 = vpop.f32.mrf.mxu0
    %v833 = vadd.f32 %v766, %v832
    %834 = vmatmul.bf16.gmra.mxu0 %v750
    %v835 = vpop.f32.mrf.mxu0
    %v836 = vadd.f32 %v766, %v835
    %v837 = vpop.f32.mrf.mxu0
    %v838 = vadd.f32 %v766, %v837
    %839 = vmatmul.bf16.gmra.mxu0 %v751
    %v840 = vpop.f32.mrf.mxu0
    %v841 = vadd.f32 %v766, %v840
    %v842 = vpop.f32.mrf.mxu0
    %v843 = vadd.f32 %v766, %v842
    %844 = vmatmul.bf16.gmra.mxu0 %v752
    %v845 = vpop.f32.mrf.mxu0
    %v846 = vadd.f32 %v766, %v845
    %v847 = vpop.f32.mrf.mxu0
    %v848 = vadd.f32 %v766, %v847
    %849 = vmatmul.bf16.gmra.mxu0 %v753
    %v850 = vpop.f32.mrf.mxu0
    %v851 = vadd.f32 %v766, %v850
    %v852 = vpop.f32.mrf.mxu0
    %v853 = vadd.f32 %v766, %v852
    %854 = vmatmul.bf16.gmra.mxu0 %v754
    %v855 = vpop.f32.mrf.mxu0
    %v856 = vadd.f32 %v766, %v855
    %v857 = vpop.f32.mrf.mxu0
    %v858 = vadd.f32 %v766, %v857
    %859 = vmatmul.bf16.gmra.mxu0 %v755
    %v860 = vpop.f32.mrf.mxu0
    %v861 = vadd.f32 %v766, %v860
    %v862 = vpop.f32.mrf.mxu0
    %v863 = vadd.f32 %v766, %v862
    %864 = vmatmul.bf16.gmra.mxu0 %v756
    %v865 = vpop.f32.mrf.mxu0
    %v866 = vadd.f32 %v766, %v865
    %v867 = vpop.f32.mrf.mxu0
    %v868 = vadd.f32 %v766, %v867
    %869 = vmatmul.bf16.gmra.mxu0 %v757
    %v870 = vpop.f32.mrf.mxu0
    %v871 = vadd.f32 %v766, %v870
    %v872 = vpop.f32.mrf.mxu0
    %v873 = vadd.f32 %v766, %v872
    %874 = vmatmul.bf16.gmra.mxu0 %v758
    %v875 = vpop.f32.mrf.mxu0
    %v876 = vadd.f32 %v766, %v875
    %v877 = vpop.f32.mrf.mxu0
    %v878 = vadd.f32 %v766, %v877
    %879 = vmatmul.bf16.gmra.mxu0 %v759
    %v880 = vpop.f32.mrf.mxu0
    %v881 = vadd.f32 %v766, %v880
    %v882 = vpop.f32.mrf.mxu0
    %v883 = vadd.f32 %v766, %v882
    %884 = vmatmul.bf16.gmra.mxu0 %v760
    %v885 = vpop.f32.mrf.mxu0
    %v886 = vadd.f32 %v766, %v885
    %v887 = vpop.f32.mrf.mxu0
    %v888 = vadd.f32 %v766, %v887
    %889 = vmatmul.bf16.gmra.mxu0 %v761
    %v890 = vpop.f32.mrf.mxu0
    %v891 = vadd.f32 %v766, %v890
    %v892 = vpop.f32.mrf.mxu0
    %v893 = vadd.f32 %v766, %v892
    %894 = vmatmul.bf16.gmra.mxu0 %v762
    %v895 = vpop.f32.mrf.mxu0
    %v896 = vadd.f32 %v766, %v895
    %v897 = vpop.f32.mrf.mxu0
    %v898 = vadd.f32 %v766, %v897
    %899 = vmatmul.bf16.gmra.mxu0 %v763
    %v900 = vpop.f32.mrf.mxu0
    %v901 = vadd.f32 %v766, %v900
    %v902 = vpop.f32.mrf.mxu0
    %v903 = vadd.f32 %v766, %v902
    %904 = vdwg.mxu0
    %v905 = vadd.f32 %v826, %v431
    %v906 = vadd.f32 %v828, %v432
    %v907 = vadd.f32 %v831, %v433
    %v908 = vadd.f32 %v833, %v434
    %v909 = vadd.f32 %v836, %v435
    %v910 = vadd.f32 %v838, %v436
    %v911 = vadd.f32 %v841, %v437
    %v912 = vadd.f32 %v843, %v438
    %v913 = vadd.f32 %v846, %v439
    %v914 = vadd.f32 %v848, %v440
    %v915 = vadd.f32 %v851, %v441
    %v916 = vadd.f32 %v853, %v442
    %v917 = vadd.f32 %v856, %v443
    %v918 = vadd.f32 %v858, %v444
    %v919 = vadd.f32 %v861, %v445
    %v920 = vadd.f32 %v863, %v446
    %v921 = vadd.f32 %v866, %v447
    %v922 = vadd.f32 %v868, %v448
    %v923 = vadd.f32 %v871, %v449
    %v924 = vadd.f32 %v873, %v450
    %v925 = vadd.f32 %v876, %v451
    %v926 = vadd.f32 %v878, %v452
    %v927 = vadd.f32 %v881, %v453
    %v928 = vadd.f32 %v883, %v454
    %v929 = vadd.f32 %v886, %v455
    %v930 = vadd.f32 %v888, %v456
    %v931 = vadd.f32 %v891, %v457
    %v932 = vadd.f32 %v893, %v458
    %v933 = vadd.f32 %v896, %v459
    %v934 = vadd.f32 %v898, %v460
    %v935 = vadd.f32 %v901, %v461
    %v936 = vadd.f32 %v903, %v462
    %vm937 = vcmp.gt.f32.partialorder %v905, 0.0
    %vm938 = vcmp.gt.f32.partialorder %v906, 0.0
    %vm939 = vcmp.gt.f32.partialorder %v907, 0.0
    %vm940 = vcmp.gt.f32.partialorder %v908, 0.0
    %vm941 = vcmp.gt.f32.partialorder %v909, 0.0
    %vm942 = vcmp.gt.f32.partialorder %v910, 0.0
    %vm943 = vcmp.gt.f32.partialorder %v911, 0.0
    %vm944 = vcmp.gt.f32.partialorder %v912, 0.0
    %vm945 = vcmp.gt.f32.partialorder %v913, 0.0
    %vm946 = vcmp.gt.f32.partialorder %v914, 0.0
    %vm947 = vcmp.gt.f32.partialorder %v915, 0.0
    %vm948 = vcmp.gt.f32.partialorder %v916, 0.0
    %vm949 = vcmp.gt.f32.partialorder %v917, 0.0
    %vm950 = vcmp.gt.f32.partialorder %v918, 0.0
    %vm951 = vcmp.gt.f32.partialorder %v919, 0.0
    %vm952 = vcmp.gt.f32.partialorder %v920, 0.0
    %vm953 = vcmp.gt.f32.partialorder %v921, 0.0
    %vm954 = vcmp.gt.f32.partialorder %v922, 0.0
    %vm955 = vcmp.gt.f32.partialorder %v923, 0.0
    %vm956 = vcmp.gt.f32.partialorder %v924, 0.0
    %vm957 = vcmp.gt.f32.partialorder %v925, 0.0
    %vm958 = vcmp.gt.f32.partialorder %v926, 0.0
    %vm959 = vcmp.gt.f32.partialorder %v927, 0.0
    %vm960 = vcmp.gt.f32.partialorder %v928, 0.0
    %vm961 = vcmp.gt.f32.partialorder %v929, 0.0
    %vm962 = vcmp.gt.f32.partialorder %v930, 0.0
    %vm963 = vcmp.gt.f32.partialorder %v931, 0.0
    %vm964 = vcmp.gt.f32.partialorder %v932, 0.0
    %vm965 = vcmp.gt.f32.partialorder %v933, 0.0
    %vm966 = vcmp.gt.f32.partialorder %v934, 0.0
    %vm967 = vcmp.gt.f32.partialorder %v935, 0.0
    %vm968 = vcmp.gt.f32.partialorder %v936, 0.0
    %v969 = vmul.f32 %v905, 0.1
    %v970 = vmul.f32 %v906, 0.1
    %v971 = vmul.f32 %v907, 0.1
    %v972 = vmul.f32 %v908, 0.1
    %v973 = vmul.f32 %v909, 0.1
    %v974 = vmul.f32 %v910, 0.1
    %v975 = vmul.f32 %v911, 0.1
    %v976 = vmul.f32 %v912, 0.1
    %v977 = vmul.f32 %v913, 0.1
    %v978 = vmul.f32 %v914, 0.1
    %v979 = vmul.f32 %v915, 0.1
    %v980 = vmul.f32 %v916, 0.1
    %v981 = vmul.f32 %v917, 0.1
    %v982 = vmul.f32 %v918, 0.1
    %v983 = vmul.f32 %v919, 0.1
    %v984 = vmul.f32 %v920, 0.1
    %v985 = vmul.f32 %v921, 0.1
    %v986 = vmul.f32 %v922, 0.1
    %v987 = vmul.f32 %v923, 0.1
    %v988 = vmul.f32 %v924, 0.1
    %v989 = vmul.f32 %v925, 0.1
    %v990 = vmul.f32 %v926, 0.1
    %v991 = vmul.f32 %v927, 0.1
    %v992 = vmul.f32 %v928, 0.1
    %v993 = vmul.f32 %v929, 0.1
    %v994 = vmul.f32 %v930, 0.1
    %v995 = vmul.f32 %v931, 0.1
    %v996 = vmul.f32 %v932, 0.1
    %v997 = vmul.f32 %v933, 0.1
    %v998 = vmul.f32 %v934, 0.1
    %v999 = vmul.f32 %v935, 0.1
    %v1000 = vmul.f32 %v936, 0.1
    %v1001 = vsel %vm937, %v905, %v969
    %v1002 = vsel %vm938, %v906, %v970
    %v1003 = vsel %vm939, %v907, %v971
    %v1004 = vsel %vm940, %v908, %v972
    %v1005 = vsel %vm941, %v909, %v973
    %v1006 = vsel %vm942, %v910, %v974
    %v1007 = vsel %vm943, %v911, %v975
    %v1008 = vsel %vm944, %v912, %v976
    %v1009 = vsel %vm945, %v913, %v977
    %v1010 = vsel %vm946, %v914, %v978
    %v1011 = vsel %vm947, %v915, %v979
    %v1012 = vsel %vm948, %v916, %v980
    %v1013 = vsel %vm949, %v917, %v981
    %v1014 = vsel %vm950, %v918, %v982
    %v1015 = vsel %vm951, %v919, %v983
    %v1016 = vsel %vm952, %v920, %v984
    %v1017 = vsel %vm953, %v921, %v985
    %v1018 = vsel %vm954, %v922, %v986
    %v1019 = vsel %vm955, %v923, %v987
    %v1020 = vsel %vm956, %v924, %v988
    %v1021 = vsel %vm957, %v925, %v989
    %v1022 = vsel %vm958, %v926, %v990
    %v1023 = vsel %vm959, %v927, %v991
    %v1024 = vsel %vm960, %v928, %v992
    %v1025 = vsel %vm961, %v929, %v993
    %v1026 = vsel %vm962, %v930, %v994
    %v1027 = vsel %vm963, %v931, %v995
    %v1028 = vsel %vm964, %v932, %v996
    %v1029 = vsel %vm965, %v933, %v997
    %v1030 = vsel %vm966, %v934, %v998
    %v1031 = vsel %vm967, %v935, %v999
    %v1032 = vsel %vm968, %v936, %v1000
    %s1033 = scalar_lea.vmem [#allocation8], 64
    %v1034 = vld [vmem:[%s1033] sm:$0xf]
    %v1035 = vld [vmem:[%s1033 + $0x4] sm:$0xf]
    %v1036 = vld [vmem:[%s1033 + $0x8] sm:$0xf]
    %v1037 = vld [vmem:[%s1033 + $0xc] sm:$0xf]
    %v1038 = vld [vmem:[%s1033 + $0x10] sm:$0xf]
    %v1039 = vld [vmem:[%s1033 + $0x14] sm:$0xf]
    %v1040 = vld [vmem:[%s1033 + $0x18] sm:$0xf]
    %v1041 = vld [vmem:[%s1033 + $0x1c] sm:$0xf]
    %v1042 = vld [vmem:[%s1033 + $0x20] sm:$0xf]
    %v1043 = vld [vmem:[%s1033 + $0x24] sm:$0xf]
    %v1044 = vld [vmem:[%s1033 + $0x28] sm:$0xf]
    %v1045 = vld [vmem:[%s1033 + $0x2c] sm:$0xf]
    %v1046 = vld [vmem:[%s1033 + $0x30] sm:$0xf]
    %v1047 = vld [vmem:[%s1033 + $0x34] sm:$0xf]
    %v1048 = vld [vmem:[%s1033 + $0x38] sm:$0xf]
    %v1049 = vld [vmem:[%s1033 + $0x3c] sm:$0xf]
    %v1050 = vpack.c.bf16 %v1002, %v1001
    %v1051 = vpack.c.bf16 %v1004, %v1003
    %v1052 = vpack.c.bf16 %v1006, %v1005
    %v1053 = vpack.c.bf16 %v1008, %v1007
    %v1054 = vpack.c.bf16 %v1010, %v1009
    %v1055 = vpack.c.bf16 %v1012, %v1011
    %v1056 = vpack.c.bf16 %v1014, %v1013
    %v1057 = vpack.c.bf16 %v1016, %v1015
    %v1058 = vpack.c.bf16 %v1018, %v1017
    %v1059 = vpack.c.bf16 %v1020, %v1019
    %v1060 = vpack.c.bf16 %v1022, %v1021
    %v1061 = vpack.c.bf16 %v1024, %v1023
    %v1062 = vpack.c.bf16 %v1026, %v1025
    %v1063 = vpack.c.bf16 %v1028, %v1027
    %v1064 = vpack.c.bf16 %v1030, %v1029
    %v1065 = vpack.c.bf16 %v1032, %v1031
    %s1066 = scalar_lea.vmem %s4, 1
    %v1067 = vld [vmem:[%s1066] sm:$0x1]
    %v1069 = vperm.slane %v1067, 0
    %v1087 = vunpack.c.l.b16 %v1034
    %v1088 = vunpack.c.l.b16 %v1035
    %v1089 = vunpack.c.l.b16 %v1036
    %v1090 = vunpack.c.l.b16 %v1037
    %v1091 = vunpack.c.l.b16 %v1038
    %v1092 = vunpack.c.l.b16 %v1039
    %v1093 = vunpack.c.l.b16 %v1040
    %v1094 = vunpack.c.l.b16 %v1041
    %v1095 = vunpack.c.l.b16 %v1042
    %v1096 = vunpack.c.l.b16 %v1043
    %v1097 = vunpack.c.l.b16 %v1044
    %v1098 = vunpack.c.l.b16 %v1045
    %v1099 = vunpack.c.l.b16 %v1046
    %v1100 = vunpack.c.l.b16 %v1047
    %v1101 = vunpack.c.l.b16 %v1048
    %v1102 = vunpack.c.l.b16 %v1049
    %v1103 = vpack.c.b16 %v1088, %v1087
    %v1104 = vpack.c.b16 %v1090, %v1089
    %v1105 = vpack.c.b16 %v1092, %v1091
    %v1106 = vpack.c.b16 %v1094, %v1093
    %v1107 = vpack.c.b16 %v1096, %v1095
    %v1108 = vpack.c.b16 %v1098, %v1097
    %v1109 = vpack.c.b16 %v1100, %v1099
    %v1110 = vpack.c.b16 %v1102, %v1101
    %1119 = vmatpush.bf16.msra.mxu0 %v1110
    %1120 = vmatpush.bf16.msra.mxu0 %v1109
    %1121 = vmatpush.bf16.msra.mxu0 %v1108
    %1122 = vmatpush.bf16.msra.mxu0 %v1107
    %1123 = vmatpush.bf16.msra.mxu0 %v1106
    %1124 = vmatpush.bf16.msra.mxu0 %v1105
    %1125 = vmatpush.bf16.msra.mxu0 %v1104
    %1126 = vmatpush.bf16.msra.mxu0 %v1103
    %1127 = vmatmul.bf16.gmra.mxu0 %v1050
    %v1128 = vpop.f32.mrf.mxu0
    %v1129 = vadd.f32 %v1069, %v1128
    %v1130 = vpop.f32.mrf.mxu0
    %v1131 = vadd.f32 %v1069, %v1130
    %1132 = vmatmul.bf16.gmra.mxu0 %v1051
    %v1133 = vpop.f32.mrf.mxu0
    %v1134 = vadd.f32 %v1069, %v1133
    %v1135 = vpop.f32.mrf.mxu0
    %v1136 = vadd.f32 %v1069, %v1135
    %1137 = vmatmul.bf16.gmra.mxu0 %v1052
    %v1138 = vpop.f32.mrf.mxu0
    %v1139 = vadd.f32 %v1069, %v1138
    %v1140 = vpop.f32.mrf.mxu0
    %v1141 = vadd.f32 %v1069, %v1140
    %1142 = vmatmul.bf16.gmra.mxu0 %v1053
    %v1143 = vpop.f32.mrf.mxu0
    %v1144 = vadd.f32 %v1069, %v1143
    %v1145 = vpop.f32.mrf.mxu0
    %v1146 = vadd.f32 %v1069, %v1145
    %1147 = vmatmul.bf16.gmra.mxu0 %v1054
    %v1148 = vpop.f32.mrf.mxu0
    %v1149 = vadd.f32 %v1069, %v1148
    %v1150 = vpop.f32.mrf.mxu0
    %v1151 = vadd.f32 %v1069, %v1150
    %1152 = vmatmul.bf16.gmra.mxu0 %v1055
    %v1153 = vpop.f32.mrf.mxu0
    %v1154 = vadd.f32 %v1069, %v1153
    %v1155 = vpop.f32.mrf.mxu0
    %v1156 = vadd.f32 %v1069, %v1155
    %1157 = vmatmul.bf16.gmra.mxu0 %v1056
    %v1158 = vpop.f32.mrf.mxu0
    %v1159 = vadd.f32 %v1069, %v1158
    %v1160 = vpop.f32.mrf.mxu0
    %v1161 = vadd.f32 %v1069, %v1160
    %1162 = vmatmul.bf16.gmra.mxu0 %v1057
    %v1163 = vpop.f32.mrf.mxu0
    %v1164 = vadd.f32 %v1069, %v1163
    %v1165 = vpop.f32.mrf.mxu0
    %v1166 = vadd.f32 %v1069, %v1165
    %1167 = vmatmul.bf16.gmra.mxu0 %v1058
    %v1168 = vpop.f32.mrf.mxu0
    %v1169 = vadd.f32 %v1069, %v1168
    %v1170 = vpop.f32.mrf.mxu0
    %v1171 = vadd.f32 %v1069, %v1170
    %1172 = vmatmul.bf16.gmra.mxu0 %v1059
    %v1173 = vpop.f32.mrf.mxu0
    %v1174 = vadd.f32 %v1069, %v1173
    %v1175 = vpop.f32.mrf.mxu0
    %v1176 = vadd.f32 %v1069, %v1175
    %1177 = vmatmul.bf16.gmra.mxu0 %v1060
    %v1178 = vpop.f32.mrf.mxu0
    %v1179 = vadd.f32 %v1069, %v1178
    %v1180 = vpop.f32.mrf.mxu0
    %v1181 = vadd.f32 %v1069, %v1180
    %1182 = vmatmul.bf16.gmra.mxu0 %v1061
    %v1183 = vpop.f32.mrf.mxu0
    %v1184 = vadd.f32 %v1069, %v1183
    %v1185 = vpop.f32.mrf.mxu0
    %v1186 = vadd.f32 %v1069, %v1185
    %1187 = vmatmul.bf16.gmra.mxu0 %v1062
    %v1188 = vpop.f32.mrf.mxu0
    %v1189 = vadd.f32 %v1069, %v1188
    %v1190 = vpop.f32.mrf.mxu0
    %v1191 = vadd.f32 %v1069, %v1190
    %1192 = vmatmul.bf16.gmra.mxu0 %v1063
    %v1193 = vpop.f32.mrf.mxu0
    %v1194 = vadd.f32 %v1069, %v1193
    %v1195 = vpop.f32.mrf.mxu0
    %v1196 = vadd.f32 %v1069, %v1195
    %1197 = vmatmul.bf16.gmra.mxu0 %v1064
    %v1198 = vpop.f32.mrf.mxu0
    %v1199 = vadd.f32 %v1069, %v1198
    %v1200 = vpop.f32.mrf.mxu0
    %v1201 = vadd.f32 %v1069, %v1200
    %1202 = vmatmul.bf16.gmra.mxu0 %v1065
    %v1203 = vpop.f32.mrf.mxu0
    %v1204 = vadd.f32 %v1069, %v1203
    %v1205 = vpop.f32.mrf.mxu0
    %v1206 = vadd.f32 %v1069, %v1205
    %1207 = vdwg.mxu0
    %vm1208 = vcmp.gt.f32.partialorder %v1129, 0.0
    %vm1209 = vcmp.gt.f32.partialorder %v1131, 0.0
    %vm1210 = vcmp.gt.f32.partialorder %v1134, 0.0
    %vm1211 = vcmp.gt.f32.partialorder %v1136, 0.0
    %vm1212 = vcmp.gt.f32.partialorder %v1139, 0.0
    %vm1213 = vcmp.gt.f32.partialorder %v1141, 0.0
    %vm1214 = vcmp.gt.f32.partialorder %v1144, 0.0
    %vm1215 = vcmp.gt.f32.partialorder %v1146, 0.0
    %vm1216 = vcmp.gt.f32.partialorder %v1149, 0.0
    %vm1217 = vcmp.gt.f32.partialorder %v1151, 0.0
    %vm1218 = vcmp.gt.f32.partialorder %v1154, 0.0
    %vm1219 = vcmp.gt.f32.partialorder %v1156, 0.0
    %vm1220 = vcmp.gt.f32.partialorder %v1159, 0.0
    %vm1221 = vcmp.gt.f32.partialorder %v1161, 0.0
    %vm1222 = vcmp.gt.f32.partialorder %v1164, 0.0
    %vm1223 = vcmp.gt.f32.partialorder %v1166, 0.0
    %vm1224 = vcmp.gt.f32.partialorder %v1169, 0.0
    %vm1225 = vcmp.gt.f32.partialorder %v1171, 0.0
    %vm1226 = vcmp.gt.f32.partialorder %v1174, 0.0
    %vm1227 = vcmp.gt.f32.partialorder %v1176, 0.0
    %vm1228 = vcmp.gt.f32.partialorder %v1179, 0.0
    %vm1229 = vcmp.gt.f32.partialorder %v1181, 0.0
    %vm1230 = vcmp.gt.f32.partialorder %v1184, 0.0
    %vm1231 = vcmp.gt.f32.partialorder %v1186, 0.0
    %vm1232 = vcmp.gt.f32.partialorder %v1189, 0.0
    %vm1233 = vcmp.gt.f32.partialorder %v1191, 0.0
    %vm1234 = vcmp.gt.f32.partialorder %v1194, 0.0
    %vm1235 = vcmp.gt.f32.partialorder %v1196, 0.0
    %vm1236 = vcmp.gt.f32.partialorder %v1199, 0.0
    %vm1237 = vcmp.gt.f32.partialorder %v1201, 0.0
    %vm1238 = vcmp.gt.f32.partialorder %v1204, 0.0
    %vm1239 = vcmp.gt.f32.partialorder %v1206, 0.0
    %v1240 = vmul.f32 %v1129, 0.1
    %v1241 = vmul.f32 %v1131, 0.1
    %v1242 = vmul.f32 %v1134, 0.1
    %v1243 = vmul.f32 %v1136, 0.1
    %v1244 = vmul.f32 %v1139, 0.1
    %v1245 = vmul.f32 %v1141, 0.1
    %v1246 = vmul.f32 %v1144, 0.1
    %v1247 = vmul.f32 %v1146, 0.1
    %v1248 = vmul.f32 %v1149, 0.1
    %v1249 = vmul.f32 %v1151, 0.1
    %v1250 = vmul.f32 %v1154, 0.1
    %v1251 = vmul.f32 %v1156, 0.1
    %v1252 = vmul.f32 %v1159, 0.1
    %v1253 = vmul.f32 %v1161, 0.1
    %v1254 = vmul.f32 %v1164, 0.1
    %v1255 = vmul.f32 %v1166, 0.1
    %v1256 = vmul.f32 %v1169, 0.1
    %v1257 = vmul.f32 %v1171, 0.1
    %v1258 = vmul.f32 %v1174, 0.1
    %v1259 = vmul.f32 %v1176, 0.1
    %v1260 = vmul.f32 %v1179, 0.1
    %v1261 = vmul.f32 %v1181, 0.1
    %v1262 = vmul.f32 %v1184, 0.1
    %v1263 = vmul.f32 %v1186, 0.1
    %v1264 = vmul.f32 %v1189, 0.1
    %v1265 = vmul.f32 %v1191, 0.1
    %v1266 = vmul.f32 %v1194, 0.1
    %v1267 = vmul.f32 %v1196, 0.1
    %v1268 = vmul.f32 %v1199, 0.1
    %v1269 = vmul.f32 %v1201, 0.1
    %v1270 = vmul.f32 %v1204, 0.1
    %v1271 = vmul.f32 %v1206, 0.1
    %v1272 = vsel %vm1208, %v1129, %v1240
    %v1273 = vsel %vm1209, %v1131, %v1241
    %v1274 = vsel %vm1210, %v1134, %v1242
    %v1275 = vsel %vm1211, %v1136, %v1243
    %v1276 = vsel %vm1212, %v1139, %v1244
    %v1277 = vsel %vm1213, %v1141, %v1245
    %v1278 = vsel %vm1214, %v1144, %v1246
    %v1279 = vsel %vm1215, %v1146, %v1247
    %v1280 = vsel %vm1216, %v1149, %v1248
    %v1281 = vsel %vm1217, %v1151, %v1249
    %v1282 = vsel %vm1218, %v1154, %v1250
    %v1283 = vsel %vm1219, %v1156, %v1251
    %v1284 = vsel %vm1220, %v1159, %v1252
    %v1285 = vsel %vm1221, %v1161, %v1253
    %v1286 = vsel %vm1222, %v1164, %v1254
    %v1287 = vsel %vm1223, %v1166, %v1255
    %v1288 = vsel %vm1224, %v1169, %v1256
    %v1289 = vsel %vm1225, %v1171, %v1257
    %v1290 = vsel %vm1226, %v1174, %v1258
    %v1291 = vsel %vm1227, %v1176, %v1259
    %v1292 = vsel %vm1228, %v1179, %v1260
    %v1293 = vsel %vm1229, %v1181, %v1261
    %v1294 = vsel %vm1230, %v1184, %v1262
    %v1295 = vsel %vm1231, %v1186, %v1263
    %v1296 = vsel %vm1232, %v1189, %v1264
    %v1297 = vsel %vm1233, %v1191, %v1265
    %v1298 = vsel %vm1234, %v1194, %v1266
    %v1299 = vsel %vm1235, %v1196, %v1267
    %v1300 = vsel %vm1236, %v1199, %v1268
    %v1301 = vsel %vm1237, %v1201, %v1269
    %v1302 = vsel %vm1238, %v1204, %v1270
    %v1303 = vsel %vm1239, %v1206, %v1271
    %s1304 = scalar_lea.vmem [#allocation10], 64
    %v1305 = vld [vmem:[%s1304] sm:$0xf]
    %v1306 = vld [vmem:[%s1304 + $0x4] sm:$0xf]
    %v1307 = vld [vmem:[%s1304 + $0x8] sm:$0xf]
    %v1308 = vld [vmem:[%s1304 + $0xc] sm:$0xf]
    %v1309 = vld [vmem:[%s1304 + $0x10] sm:$0xf]
    %v1310 = vld [vmem:[%s1304 + $0x14] sm:$0xf]
    %v1311 = vld [vmem:[%s1304 + $0x18] sm:$0xf]
    %v1312 = vld [vmem:[%s1304 + $0x1c] sm:$0xf]
    %v1313 = vld [vmem:[%s1304 + $0x20] sm:$0xf]
    %v1314 = vld [vmem:[%s1304 + $0x24] sm:$0xf]
    %v1315 = vld [vmem:[%s1304 + $0x28] sm:$0xf]
    %v1316 = vld [vmem:[%s1304 + $0x2c] sm:$0xf]
    %v1317 = vld [vmem:[%s1304 + $0x30] sm:$0xf]
    %v1318 = vld [vmem:[%s1304 + $0x34] sm:$0xf]
    %v1319 = vld [vmem:[%s1304 + $0x38] sm:$0xf]
    %v1320 = vld [vmem:[%s1304 + $0x3c] sm:$0xf]
    %v1321 = vpack.c.bf16 %v1273, %v1272
    %v1322 = vpack.c.bf16 %v1275, %v1274
    %v1323 = vpack.c.bf16 %v1277, %v1276
    %v1324 = vpack.c.bf16 %v1279, %v1278
    %v1325 = vpack.c.bf16 %v1281, %v1280
    %v1326 = vpack.c.bf16 %v1283, %v1282
    %v1327 = vpack.c.bf16 %v1285, %v1284
    %v1328 = vpack.c.bf16 %v1287, %v1286
    %v1329 = vpack.c.bf16 %v1289, %v1288
    %v1330 = vpack.c.bf16 %v1291, %v1290
    %v1331 = vpack.c.bf16 %v1293, %v1292
    %v1332 = vpack.c.bf16 %v1295, %v1294
    %v1333 = vpack.c.bf16 %v1297, %v1296
    %v1334 = vpack.c.bf16 %v1299, %v1298
    %v1335 = vpack.c.bf16 %v1301, %v1300
    %v1336 = vpack.c.bf16 %v1303, %v1302
    %s1337 = scalar_lea.vmem [#allocation11], 1
    %v1338 = vld [vmem:[%s1337] sm:$0x1]
    %v1340 = vperm.slane %v1338, 0
    %v1358 = vunpack.c.l.b16 %v1305
    %v1359 = vunpack.c.l.b16 %v1306
    %v1360 = vunpack.c.l.b16 %v1307
    %v1361 = vunpack.c.l.b16 %v1308
    %v1362 = vunpack.c.l.b16 %v1309
    %v1363 = vunpack.c.l.b16 %v1310
    %v1364 = vunpack.c.l.b16 %v1311
    %v1365 = vunpack.c.l.b16 %v1312
    %v1366 = vunpack.c.l.b16 %v1313
    %v1367 = vunpack.c.l.b16 %v1314
    %v1368 = vunpack.c.l.b16 %v1315
    %v1369 = vunpack.c.l.b16 %v1316
    %v1370 = vunpack.c.l.b16 %v1317
    %v1371 = vunpack.c.l.b16 %v1318
    %v1372 = vunpack.c.l.b16 %v1319
    %v1373 = vunpack.c.l.b16 %v1320
    %v1374 = vpack.c.b16 %v1359, %v1358
    %v1375 = vpack.c.b16 %v1361, %v1360
    %v1376 = vpack.c.b16 %v1363, %v1362
    %v1377 = vpack.c.b16 %v1365, %v1364
    %v1378 = vpack.c.b16 %v1367, %v1366
    %v1379 = vpack.c.b16 %v1369, %v1368
    %v1380 = vpack.c.b16 %v1371, %v1370
    %v1381 = vpack.c.b16 %v1373, %v1372
    %1390 = vmatpush.bf16.msra.mxu0 %v1381
    %1391 = vmatpush.bf16.msra.mxu0 %v1380
    %1392 = vmatpush.bf16.msra.mxu0 %v1379
    %1393 = vmatpush.bf16.msra.mxu0 %v1378
    %1394 = vmatpush.bf16.msra.mxu0 %v1377
    %1395 = vmatpush.bf16.msra.mxu0 %v1376
    %1396 = vmatpush.bf16.msra.mxu0 %v1375
    %1397 = vmatpush.bf16.msra.mxu0 %v1374
    %1398 = vmatmul.bf16.gmra.mxu0 %v1321
    %v1399 = vpop.f32.mrf.mxu0
    %v1400 = vadd.f32 %v1340, %v1399
    %v1401 = vpop.f32.mrf.mxu0
    %v1402 = vadd.f32 %v1340, %v1401
    %1403 = vmatmul.bf16.gmra.mxu0 %v1322
    %v1404 = vpop.f32.mrf.mxu0
    %v1405 = vadd.f32 %v1340, %v1404
    %v1406 = vpop.f32.mrf.mxu0
    %v1407 = vadd.f32 %v1340, %v1406
    %1408 = vmatmul.bf16.gmra.mxu0 %v1323
    %v1409 = vpop.f32.mrf.mxu0
    %v1410 = vadd.f32 %v1340, %v1409
    %v1411 = vpop.f32.mrf.mxu0
    %v1412 = vadd.f32 %v1340, %v1411
    %1413 = vmatmul.bf16.gmra.mxu0 %v1324
    %v1414 = vpop.f32.mrf.mxu0
    %v1415 = vadd.f32 %v1340, %v1414
    %v1416 = vpop.f32.mrf.mxu0
    %v1417 = vadd.f32 %v1340, %v1416
    %1418 = vmatmul.bf16.gmra.mxu0 %v1325
    %v1419 = vpop.f32.mrf.mxu0
    %v1420 = vadd.f32 %v1340, %v1419
    %v1421 = vpop.f32.mrf.mxu0
    %v1422 = vadd.f32 %v1340, %v1421
    %1423 = vmatmul.bf16.gmra.mxu0 %v1326
    %v1424 = vpop.f32.mrf.mxu0
    %v1425 = vadd.f32 %v1340, %v1424
    %v1426 = vpop.f32.mrf.mxu0
    %v1427 = vadd.f32 %v1340, %v1426
    %1428 = vmatmul.bf16.gmra.mxu0 %v1327
    %v1429 = vpop.f32.mrf.mxu0
    %v1430 = vadd.f32 %v1340, %v1429
    %v1431 = vpop.f32.mrf.mxu0
    %v1432 = vadd.f32 %v1340, %v1431
    %1433 = vmatmul.bf16.gmra.mxu0 %v1328
    %v1434 = vpop.f32.mrf.mxu0
    %v1435 = vadd.f32 %v1340, %v1434
    %v1436 = vpop.f32.mrf.mxu0
    %v1437 = vadd.f32 %v1340, %v1436
    %1438 = vmatmul.bf16.gmra.mxu0 %v1329
    %v1439 = vpop.f32.mrf.mxu0
    %v1440 = vadd.f32 %v1340, %v1439
    %v1441 = vpop.f32.mrf.mxu0
    %v1442 = vadd.f32 %v1340, %v1441
    %1443 = vmatmul.bf16.gmra.mxu0 %v1330
    %v1444 = vpop.f32.mrf.mxu0
    %v1445 = vadd.f32 %v1340, %v1444
    %v1446 = vpop.f32.mrf.mxu0
    %v1447 = vadd.f32 %v1340, %v1446
    %1448 = vmatmul.bf16.gmra.mxu0 %v1331
    %v1449 = vpop.f32.mrf.mxu0
    %v1450 = vadd.f32 %v1340, %v1449
    %v1451 = vpop.f32.mrf.mxu0
    %v1452 = vadd.f32 %v1340, %v1451
    %1453 = vmatmul.bf16.gmra.mxu0 %v1332
    %v1454 = vpop.f32.mrf.mxu0
    %v1455 = vadd.f32 %v1340, %v1454
    %v1456 = vpop.f32.mrf.mxu0
    %v1457 = vadd.f32 %v1340, %v1456
    %1458 = vmatmul.bf16.gmra.mxu0 %v1333
    %v1459 = vpop.f32.mrf.mxu0
    %v1460 = vadd.f32 %v1340, %v1459
    %v1461 = vpop.f32.mrf.mxu0
    %v1462 = vadd.f32 %v1340, %v1461
    %1463 = vmatmul.bf16.gmra.mxu0 %v1334
    %v1464 = vpop.f32.mrf.mxu0
    %v1465 = vadd.f32 %v1340, %v1464
    %v1466 = vpop.f32.mrf.mxu0
    %v1467 = vadd.f32 %v1340, %v1466
    %1468 = vmatmul.bf16.gmra.mxu0 %v1335
    %v1469 = vpop.f32.mrf.mxu0
    %v1470 = vadd.f32 %v1340, %v1469
    %v1471 = vpop.f32.mrf.mxu0
    %v1472 = vadd.f32 %v1340, %v1471
    %1473 = vmatmul.bf16.gmra.mxu0 %v1336
    %v1474 = vpop.f32.mrf.mxu0
    %v1475 = vadd.f32 %v1340, %v1474
    %v1476 = vpop.f32.mrf.mxu0
    %v1477 = vadd.f32 %v1340, %v1476
    %1478 = vdwg.mxu0
    %v1479 = vadd.f32 %v1400, %v1001
    %v1480 = vadd.f32 %v1402, %v1002
    %v1481 = vadd.f32 %v1405, %v1003
    %v1482 = vadd.f32 %v1407, %v1004
    %v1483 = vadd.f32 %v1410, %v1005
    %v1484 = vadd.f32 %v1412, %v1006
    %v1485 = vadd.f32 %v1415, %v1007
    %v1486 = vadd.f32 %v1417, %v1008
    %v1487 = vadd.f32 %v1420, %v1009
    %v1488 = vadd.f32 %v1422, %v1010
    %v1489 = vadd.f32 %v1425, %v1011
    %v1490 = vadd.f32 %v1427, %v1012
    %v1491 = vadd.f32 %v1430, %v1013
    %v1492 = vadd.f32 %v1432, %v1014
    %v1493 = vadd.f32 %v1435, %v1015
    %v1494 = vadd.f32 %v1437, %v1016
    %v1495 = vadd.f32 %v1440, %v1017
    %v1496 = vadd.f32 %v1442, %v1018
    %v1497 = vadd.f32 %v1445, %v1019
    %v1498 = vadd.f32 %v1447, %v1020
    %v1499 = vadd.f32 %v1450, %v1021
    %v1500 = vadd.f32 %v1452, %v1022
    %v1501 = vadd.f32 %v1455, %v1023
    %v1502 = vadd.f32 %v1457, %v1024
    %v1503 = vadd.f32 %v1460, %v1025
    %v1504 = vadd.f32 %v1462, %v1026
    %v1505 = vadd.f32 %v1465, %v1027
    %v1506 = vadd.f32 %v1467, %v1028
    %v1507 = vadd.f32 %v1470, %v1029
    %v1508 = vadd.f32 %v1472, %v1030
    %v1509 = vadd.f32 %v1475, %v1031
    %v1510 = vadd.f32 %v1477, %v1032
    %vm1511 = vcmp.gt.f32.partialorder %v1479, 0.0
    %vm1512 = vcmp.gt.f32.partialorder %v1480, 0.0
    %vm1513 = vcmp.gt.f32.partialorder %v1481, 0.0
    %vm1514 = vcmp.gt.f32.partialorder %v1482, 0.0
    %vm1515 = vcmp.gt.f32.partialorder %v1483, 0.0
    %vm1516 = vcmp.gt.f32.partialorder %v1484, 0.0
    %vm1517 = vcmp.gt.f32.partialorder %v1485, 0.0
    %vm1518 = vcmp.gt.f32.partialorder %v1486, 0.0
    %vm1519 = vcmp.gt.f32.partialorder %v1487, 0.0
    %vm1520 = vcmp.gt.f32.partialorder %v1488, 0.0
    %vm1521 = vcmp.gt.f32.partialorder %v1489, 0.0
    %vm1522 = vcmp.gt.f32.partialorder %v1490, 0.0
    %vm1523 = vcmp.gt.f32.partialorder %v1491, 0.0
    %vm1524 = vcmp.gt.f32.partialorder %v1492, 0.0
    %vm1525 = vcmp.gt.f32.partialorder %v1493, 0.0
    %vm1526 = vcmp.gt.f32.partialorder %v1494, 0.0
    %vm1527 = vcmp.gt.f32.partialorder %v1495, 0.0
    %vm1528 = vcmp.gt.f32.partialorder %v1496, 0.0
    %vm1529 = vcmp.gt.f32.partialorder %v1497, 0.0
    %vm1530 = vcmp.gt.f32.partialorder %v1498, 0.0
    %vm1531 = vcmp.gt.f32.partialorder %v1499, 0.0
    %vm1532 = vcmp.gt.f32.partialorder %v1500, 0.0
    %vm1533 = vcmp.gt.f32.partialorder %v1501, 0.0
    %vm1534 = vcmp.gt.f32.partialorder %v1502, 0.0
    %vm1535 = vcmp.gt.f32.partialorder %v1503, 0.0
    %vm1536 = vcmp.gt.f32.partialorder %v1504, 0.0
    %vm1537 = vcmp.gt.f32.partialorder %v1505, 0.0
    %vm1538 = vcmp.gt.f32.partialorder %v1506, 0.0
    %vm1539 = vcmp.gt.f32.partialorder %v1507, 0.0
    %vm1540 = vcmp.gt.f32.partialorder %v1508, 0.0
    %vm1541 = vcmp.gt.f32.partialorder %v1509, 0.0
    %vm1542 = vcmp.gt.f32.partialorder %v1510, 0.0
    %v1543 = vmul.f32 %v1479, 0.1
    %v1544 = vmul.f32 %v1480, 0.1
    %v1545 = vmul.f32 %v1481, 0.1
    %v1546 = vmul.f32 %v1482, 0.1
    %v1547 = vmul.f32 %v1483, 0.1
    %v1548 = vmul.f32 %v1484, 0.1
    %v1549 = vmul.f32 %v1485, 0.1
    %v1550 = vmul.f32 %v1486, 0.1
    %v1551 = vmul.f32 %v1487, 0.1
    %v1552 = vmul.f32 %v1488, 0.1
    %v1553 = vmul.f32 %v1489, 0.1
    %v1554 = vmul.f32 %v1490, 0.1
    %v1555 = vmul.f32 %v1491, 0.1
    %v1556 = vmul.f32 %v1492, 0.1
    %v1557 = vmul.f32 %v1493, 0.1
    %v1558 = vmul.f32 %v1494, 0.1
    %v1559 = vmul.f32 %v1495, 0.1
    %v1560 = vmul.f32 %v1496, 0.1
    %v1561 = vmul.f32 %v1497, 0.1
    %v1562 = vmul.f32 %v1498, 0.1
    %v1563 = vmul.f32 %v1499, 0.1
    %v1564 = vmul.f32 %v1500, 0.1
    %v1565 = vmul.f32 %v1501, 0.1
    %v1566 = vmul.f32 %v1502, 0.1
    %v1567 = vmul.f32 %v1503, 0.1
    %v1568 = vmul.f32 %v1504, 0.1
    %v1569 = vmul.f32 %v1505, 0.1
    %v1570 = vmul.f32 %v1506, 0.1
    %v1571 = vmul.f32 %v1507, 0.1
    %v1572 = vmul.f32 %v1508, 0.1
    %v1573 = vmul.f32 %v1509, 0.1
    %v1574 = vmul.f32 %v1510, 0.1
    %v1575 = vsel %vm1511, %v1479, %v1543
    %v1576 = vsel %vm1512, %v1480, %v1544
    %v1577 = vsel %vm1513, %v1481, %v1545
    %v1578 = vsel %vm1514, %v1482, %v1546
    %v1579 = vsel %vm1515, %v1483, %v1547
    %v1580 = vsel %vm1516, %v1484, %v1548
    %v1581 = vsel %vm1517, %v1485, %v1549
    %v1582 = vsel %vm1518, %v1486, %v1550
    %v1583 = vsel %vm1519, %v1487, %v1551
    %v1584 = vsel %vm1520, %v1488, %v1552
    %v1585 = vsel %vm1521, %v1489, %v1553
    %v1586 = vsel %vm1522, %v1490, %v1554
    %v1587 = vsel %vm1523, %v1491, %v1555
    %v1588 = vsel %vm1524, %v1492, %v1556
    %v1589 = vsel %vm1525, %v1493, %v1557
    %v1590 = vsel %vm1526, %v1494, %v1558
    %v1591 = vsel %vm1527, %v1495, %v1559
    %v1592 = vsel %vm1528, %v1496, %v1560
    %v1593 = vsel %vm1529, %v1497, %v1561
    %v1594 = vsel %vm1530, %v1498, %v1562
    %v1595 = vsel %vm1531, %v1499, %v1563
    %v1596 = vsel %vm1532, %v1500, %v1564
    %v1597 = vsel %vm1533, %v1501, %v1565
    %v1598 = vsel %vm1534, %v1502, %v1566
    %v1599 = vsel %vm1535, %v1503, %v1567
    %v1600 = vsel %vm1536, %v1504, %v1568
    %v1601 = vsel %vm1537, %v1505, %v1569
    %v1602 = vsel %vm1538, %v1506, %v1570
    %v1603 = vsel %vm1539, %v1507, %v1571
    %v1604 = vsel %vm1540, %v1508, %v1572
    %v1605 = vsel %vm1541, %v1509, %v1573
    %v1606 = vsel %vm1542, %v1510, %v1574
    %s1607 = scalar_lea.vmem [#allocation8], 128
    %v1608 = vld [vmem:[%s1607] sm:$0xf]
    %v1609 = vld [vmem:[%s1607 + $0x4] sm:$0xf]
    %v1610 = vld [vmem:[%s1607 + $0x8] sm:$0xf]
    %v1611 = vld [vmem:[%s1607 + $0xc] sm:$0xf]
    %v1612 = vld [vmem:[%s1607 + $0x10] sm:$0xf]
    %v1613 = vld [vmem:[%s1607 + $0x14] sm:$0xf]
    %v1614 = vld [vmem:[%s1607 + $0x18] sm:$0xf]
    %v1615 = vld [vmem:[%s1607 + $0x1c] sm:$0xf]
    %v1616 = vld [vmem:[%s1607 + $0x20] sm:$0xf]
    %v1617 = vld [vmem:[%s1607 + $0x24] sm:$0xf]
    %v1618 = vld [vmem:[%s1607 + $0x28] sm:$0xf]
    %v1619 = vld [vmem:[%s1607 + $0x2c] sm:$0xf]
    %v1620 = vld [vmem:[%s1607 + $0x30] sm:$0xf]
    %v1621 = vld [vmem:[%s1607 + $0x34] sm:$0xf]
    %v1622 = vld [vmem:[%s1607 + $0x38] sm:$0xf]
    %v1623 = vld [vmem:[%s1607 + $0x3c] sm:$0xf]
    %v1624 = vpack.c.bf16 %v1576, %v1575
    %v1625 = vpack.c.bf16 %v1578, %v1577
    %v1626 = vpack.c.bf16 %v1580, %v1579
    %v1627 = vpack.c.bf16 %v1582, %v1581
    %v1628 = vpack.c.bf16 %v1584, %v1583
    %v1629 = vpack.c.bf16 %v1586, %v1585
    %v1630 = vpack.c.bf16 %v1588, %v1587
    %v1631 = vpack.c.bf16 %v1590, %v1589
    %v1632 = vpack.c.bf16 %v1592, %v1591
    %v1633 = vpack.c.bf16 %v1594, %v1593
    %v1634 = vpack.c.bf16 %v1596, %v1595
    %v1635 = vpack.c.bf16 %v1598, %v1597
    %v1636 = vpack.c.bf16 %v1600, %v1599
    %v1637 = vpack.c.bf16 %v1602, %v1601
    %v1638 = vpack.c.bf16 %v1604, %v1603
    %v1639 = vpack.c.bf16 %v1606, %v1605
    %s1640 = scalar_lea.vmem %s4, 2
    %v1641 = vld [vmem:[%s1640] sm:$0x1]
    %v1643 = vperm.slane %v1641, 0
    %v1661 = vunpack.c.l.b16 %v1608
    %v1662 = vunpack.c.l.b16 %v1609
    %v1663 = vunpack.c.l.b16 %v1610
    %v1664 = vunpack.c.l.b16 %v1611
    %v1665 = vunpack.c.l.b16 %v1612
    %v1666 = vunpack.c.l.b16 %v1613
    %v1667 = vunpack.c.l.b16 %v1614
    %v1668 = vunpack.c.l.b16 %v1615
    %v1669 = vunpack.c.l.b16 %v1616
    %v1670 = vunpack.c.l.b16 %v1617
    %v1671 = vunpack.c.l.b16 %v1618
    %v1672 = vunpack.c.l.b16 %v1619
    %v1673 = vunpack.c.l.b16 %v1620
    %v1674 = vunpack.c.l.b16 %v1621
    %v1675 = vunpack.c.l.b16 %v1622
    %v1676 = vunpack.c.l.b16 %v1623
    %v1677 = vpack.c.b16 %v1662, %v1661
    %v1678 = vpack.c.b16 %v1664, %v1663
    %v1679 = vpack.c.b16 %v1666, %v1665
    %v1680 = vpack.c.b16 %v1668, %v1667
    %v1681 = vpack.c.b16 %v1670, %v1669
    %v1682 = vpack.c.b16 %v1672, %v1671
    %v1683 = vpack.c.b16 %v1674, %v1673
    %v1684 = vpack.c.b16 %v1676, %v1675
    %1693 = vmatpush.bf16.msra.mxu0 %v1684
    %1694 = vmatpush.bf16.msra.mxu0 %v1683
    %1695 = vmatpush.bf16.msra.mxu0 %v1682
    %1696 = vmatpush.bf16.msra.mxu0 %v1681
    %1697 = vmatpush.bf16.msra.mxu0 %v1680
    %1698 = vmatpush.bf16.msra.mxu0 %v1679
    %1699 = vmatpush.bf16.msra.mxu0 %v1678
    %1700 = vmatpush.bf16.msra.mxu0 %v1677
    %1701 = vmatmul.bf16.gmra.mxu0 %v1624
    %v1702 = vpop.f32.mrf.mxu0
    %v1703 = vadd.f32 %v1643, %v1702
    %v1704 = vpop.f32.mrf.mxu0
    %v1705 = vadd.f32 %v1643, %v1704
    %1706 = vmatmul.bf16.gmra.mxu0 %v1625
    %v1707 = vpop.f32.mrf.mxu0
    %v1708 = vadd.f32 %v1643, %v1707
    %v1709 = vpop.f32.mrf.mxu0
    %v1710 = vadd.f32 %v1643, %v1709
    %1711 = vmatmul.bf16.gmra.mxu0 %v1626
    %v1712 = vpop.f32.mrf.mxu0
    %v1713 = vadd.f32 %v1643, %v1712
    %v1714 = vpop.f32.mrf.mxu0
    %v1715 = vadd.f32 %v1643, %v1714
    %1716 = vmatmul.bf16.gmra.mxu0 %v1627
    %v1717 = vpop.f32.mrf.mxu0
    %v1718 = vadd.f32 %v1643, %v1717
    %v1719 = vpop.f32.mrf.mxu0
    %v1720 = vadd.f32 %v1643, %v1719
    %1721 = vmatmul.bf16.gmra.mxu0 %v1628
    %v1722 = vpop.f32.mrf.mxu0
    %v1723 = vadd.f32 %v1643, %v1722
    %v1724 = vpop.f32.mrf.mxu0
    %v1725 = vadd.f32 %v1643, %v1724
    %1726 = vmatmul.bf16.gmra.mxu0 %v1629
    %v1727 = vpop.f32.mrf.mxu0
    %v1728 = vadd.f32 %v1643, %v1727
    %v1729 = vpop.f32.mrf.mxu0
    %v1730 = vadd.f32 %v1643, %v1729
    %1731 = vmatmul.bf16.gmra.mxu0 %v1630
    %v1732 = vpop.f32.mrf.mxu0
    %v1733 = vadd.f32 %v1643, %v1732
    %v1734 = vpop.f32.mrf.mxu0
    %v1735 = vadd.f32 %v1643, %v1734
    %1736 = vmatmul.bf16.gmra.mxu0 %v1631
    %v1737 = vpop.f32.mrf.mxu0
    %v1738 = vadd.f32 %v1643, %v1737
    %v1739 = vpop.f32.mrf.mxu0
    %v1740 = vadd.f32 %v1643, %v1739
    %1741 = vmatmul.bf16.gmra.mxu0 %v1632
    %v1742 = vpop.f32.mrf.mxu0
    %v1743 = vadd.f32 %v1643, %v1742
    %v1744 = vpop.f32.mrf.mxu0
    %v1745 = vadd.f32 %v1643, %v1744
    %1746 = vmatmul.bf16.gmra.mxu0 %v1633
    %v1747 = vpop.f32.mrf.mxu0
    %v1748 = vadd.f32 %v1643, %v1747
    %v1749 = vpop.f32.mrf.mxu0
    %v1750 = vadd.f32 %v1643, %v1749
    %1751 = vmatmul.bf16.gmra.mxu0 %v1634
    %v1752 = vpop.f32.mrf.mxu0
    %v1753 = vadd.f32 %v1643, %v1752
    %v1754 = vpop.f32.mrf.mxu0
    %v1755 = vadd.f32 %v1643, %v1754
    %1756 = vmatmul.bf16.gmra.mxu0 %v1635
    %v1757 = vpop.f32.mrf.mxu0
    %v1758 = vadd.f32 %v1643, %v1757
    %v1759 = vpop.f32.mrf.mxu0
    %v1760 = vadd.f32 %v1643, %v1759
    %1761 = vmatmul.bf16.gmra.mxu0 %v1636
    %v1762 = vpop.f32.mrf.mxu0
    %v1763 = vadd.f32 %v1643, %v1762
    %v1764 = vpop.f32.mrf.mxu0
    %v1765 = vadd.f32 %v1643, %v1764
    %1766 = vmatmul.bf16.gmra.mxu0 %v1637
    %v1767 = vpop.f32.mrf.mxu0
    %v1768 = vadd.f32 %v1643, %v1767
    %v1769 = vpop.f32.mrf.mxu0
    %v1770 = vadd.f32 %v1643, %v1769
    %1771 = vmatmul.bf16.gmra.mxu0 %v1638
    %v1772 = vpop.f32.mrf.mxu0
    %v1773 = vadd.f32 %v1643, %v1772
    %v1774 = vpop.f32.mrf.mxu0
    %v1775 = vadd.f32 %v1643, %v1774
    %1776 = vmatmul.bf16.gmra.mxu0 %v1639
    %v1777 = vpop.f32.mrf.mxu0
    %v1778 = vadd.f32 %v1643, %v1777
    %v1779 = vpop.f32.mrf.mxu0
    %v1780 = vadd.f32 %v1643, %v1779
    %1781 = vdwg.mxu0
    %vm1782 = vcmp.gt.f32.partialorder %v1703, 0.0
    %vm1783 = vcmp.gt.f32.partialorder %v1705, 0.0
    %vm1784 = vcmp.gt.f32.partialorder %v1708, 0.0
    %vm1785 = vcmp.gt.f32.partialorder %v1710, 0.0
    %vm1786 = vcmp.gt.f32.partialorder %v1713, 0.0
    %vm1787 = vcmp.gt.f32.partialorder %v1715, 0.0
    %vm1788 = vcmp.gt.f32.partialorder %v1718, 0.0
    %vm1789 = vcmp.gt.f32.partialorder %v1720, 0.0
    %vm1790 = vcmp.gt.f32.partialorder %v1723, 0.0
    %vm1791 = vcmp.gt.f32.partialorder %v1725, 0.0
    %vm1792 = vcmp.gt.f32.partialorder %v1728, 0.0
    %vm1793 = vcmp.gt.f32.partialorder %v1730, 0.0
    %vm1794 = vcmp.gt.f32.partialorder %v1733, 0.0
    %vm1795 = vcmp.gt.f32.partialorder %v1735, 0.0
    %vm1796 = vcmp.gt.f32.partialorder %v1738, 0.0
    %vm1797 = vcmp.gt.f32.partialorder %v1740, 0.0
    %vm1798 = vcmp.gt.f32.partialorder %v1743, 0.0
    %vm1799 = vcmp.gt.f32.partialorder %v1745, 0.0
    %vm1800 = vcmp.gt.f32.partialorder %v1748, 0.0
    %vm1801 = vcmp.gt.f32.partialorder %v1750, 0.0
    %vm1802 = vcmp.gt.f32.partialorder %v1753, 0.0
    %vm1803 = vcmp.gt.f32.partialorder %v1755, 0.0
    %vm1804 = vcmp.gt.f32.partialorder %v1758, 0.0
    %vm1805 = vcmp.gt.f32.partialorder %v1760, 0.0
    %vm1806 = vcmp.gt.f32.partialorder %v1763, 0.0
    %vm1807 = vcmp.gt.f32.partialorder %v1765, 0.0
    %vm1808 = vcmp.gt.f32.partialorder %v1768, 0.0
    %vm1809 = vcmp.gt.f32.partialorder %v1770, 0.0
    %vm1810 = vcmp.gt.f32.partialorder %v1773, 0.0
    %vm1811 = vcmp.gt.f32.partialorder %v1775, 0.0
    %vm1812 = vcmp.gt.f32.partialorder %v1778, 0.0
    %vm1813 = vcmp.gt.f32.partialorder %v1780, 0.0
    %v1814 = vmul.f32 %v1703, 0.1
    %v1815 = vmul.f32 %v1705, 0.1
    %v1816 = vmul.f32 %v1708, 0.1
    %v1817 = vmul.f32 %v1710, 0.1
    %v1818 = vmul.f32 %v1713, 0.1
    %v1819 = vmul.f32 %v1715, 0.1
    %v1820 = vmul.f32 %v1718, 0.1
    %v1821 = vmul.f32 %v1720, 0.1
    %v1822 = vmul.f32 %v1723, 0.1
    %v1823 = vmul.f32 %v1725, 0.1
    %v1824 = vmul.f32 %v1728, 0.1
    %v1825 = vmul.f32 %v1730, 0.1
    %v1826 = vmul.f32 %v1733, 0.1
    %v1827 = vmul.f32 %v1735, 0.1
    %v1828 = vmul.f32 %v1738, 0.1
    %v1829 = vmul.f32 %v1740, 0.1
    %v1830 = vmul.f32 %v1743, 0.1
    %v1831 = vmul.f32 %v1745, 0.1
    %v1832 = vmul.f32 %v1748, 0.1
    %v1833 = vmul.f32 %v1750, 0.1
    %v1834 = vmul.f32 %v1753, 0.1
    %v1835 = vmul.f32 %v1755, 0.1
    %v1836 = vmul.f32 %v1758, 0.1
    %v1837 = vmul.f32 %v1760, 0.1
    %v1838 = vmul.f32 %v1763, 0.1
    %v1839 = vmul.f32 %v1765, 0.1
    %v1840 = vmul.f32 %v1768, 0.1
    %v1841 = vmul.f32 %v1770, 0.1
    %v1842 = vmul.f32 %v1773, 0.1
    %v1843 = vmul.f32 %v1775, 0.1
    %v1844 = vmul.f32 %v1778, 0.1
    %v1845 = vmul.f32 %v1780, 0.1
    %v1846 = vsel %vm1782, %v1703, %v1814
    %v1847 = vsel %vm1783, %v1705, %v1815
    %v1848 = vsel %vm1784, %v1708, %v1816
    %v1849 = vsel %vm1785, %v1710, %v1817
    %v1850 = vsel %vm1786, %v1713, %v1818
    %v1851 = vsel %vm1787, %v1715, %v1819
    %v1852 = vsel %vm1788, %v1718, %v1820
    %v1853 = vsel %vm1789, %v1720, %v1821
    %v1854 = vsel %vm1790, %v1723, %v1822
    %v1855 = vsel %vm1791, %v1725, %v1823
    %v1856 = vsel %vm1792, %v1728, %v1824
    %v1857 = vsel %vm1793, %v1730, %v1825
    %v1858 = vsel %vm1794, %v1733, %v1826
    %v1859 = vsel %vm1795, %v1735, %v1827
    %v1860 = vsel %vm1796, %v1738, %v1828
    %v1861 = vsel %vm1797, %v1740, %v1829
    %v1862 = vsel %vm1798, %v1743, %v1830
    %v1863 = vsel %vm1799, %v1745, %v1831
    %v1864 = vsel %vm1800, %v1748, %v1832
    %v1865 = vsel %vm1801, %v1750, %v1833
    %v1866 = vsel %vm1802, %v1753, %v1834
    %v1867 = vsel %vm1803, %v1755, %v1835
    %v1868 = vsel %vm1804, %v1758, %v1836
    %v1869 = vsel %vm1805, %v1760, %v1837
    %v1870 = vsel %vm1806, %v1763, %v1838
    %v1871 = vsel %vm1807, %v1765, %v1839
    %v1872 = vsel %vm1808, %v1768, %v1840
    %v1873 = vsel %vm1809, %v1770, %v1841
    %v1874 = vsel %vm1810, %v1773, %v1842
    %v1875 = vsel %vm1811, %v1775, %v1843
    %v1876 = vsel %vm1812, %v1778, %v1844
    %v1877 = vsel %vm1813, %v1780, %v1845
    %s1878 = scalar_lea.vmem [#allocation10], 128
    %v1879 = vld [vmem:[%s1878] sm:$0xf]
    %v1880 = vld [vmem:[%s1878 + $0x4] sm:$0xf]
    %v1881 = vld [vmem:[%s1878 + $0x8] sm:$0xf]
    %v1882 = vld [vmem:[%s1878 + $0xc] sm:$0xf]
    %v1883 = vld [vmem:[%s1878 + $0x10] sm:$0xf]
    %v1884 = vld [vmem:[%s1878 + $0x14] sm:$0xf]
    %v1885 = vld [vmem:[%s1878 + $0x18] sm:$0xf]
    %v1886 = vld [vmem:[%s1878 + $0x1c] sm:$0xf]
    %v1887 = vld [vmem:[%s1878 + $0x20] sm:$0xf]
    %v1888 = vld [vmem:[%s1878 + $0x24] sm:$0xf]
    %v1889 = vld [vmem:[%s1878 + $0x28] sm:$0xf]
    %v1890 = vld [vmem:[%s1878 + $0x2c] sm:$0xf]
    %v1891 = vld [vmem:[%s1878 + $0x30] sm:$0xf]
    %v1892 = vld [vmem:[%s1878 + $0x34] sm:$0xf]
    %v1893 = vld [vmem:[%s1878 + $0x38] sm:$0xf]
    %v1894 = vld [vmem:[%s1878 + $0x3c] sm:$0xf]
    %v1895 = vpack.c.bf16 %v1847, %v1846
    %v1896 = vpack.c.bf16 %v1849, %v1848
    %v1897 = vpack.c.bf16 %v1851, %v1850
    %v1898 = vpack.c.bf16 %v1853, %v1852
    %v1899 = vpack.c.bf16 %v1855, %v1854
    %v1900 = vpack.c.bf16 %v1857, %v1856
    %v1901 = vpack.c.bf16 %v1859, %v1858
    %v1902 = vpack.c.bf16 %v1861, %v1860
    %v1903 = vpack.c.bf16 %v1863, %v1862
    %v1904 = vpack.c.bf16 %v1865, %v1864
    %v1905 = vpack.c.bf16 %v1867, %v1866
    %v1906 = vpack.c.bf16 %v1869, %v1868
    %v1907 = vpack.c.bf16 %v1871, %v1870
    %v1908 = vpack.c.bf16 %v1873, %v1872
    %v1909 = vpack.c.bf16 %v1875, %v1874
    %v1910 = vpack.c.bf16 %v1877, %v1876
    %s1911 = scalar_lea.vmem [#allocation11], 2
    %v1912 = vld [vmem:[%s1911] sm:$0x1]
    %v1914 = vperm.slane %v1912, 0
    %v1932 = vunpack.c.l.b16 %v1879
    %v1933 = vunpack.c.l.b16 %v1880
    %v1934 = vunpack.c.l.b16 %v1881
    %v1935 = vunpack.c.l.b16 %v1882
    %v1936 = vunpack.c.l.b16 %v1883
    %v1937 = vunpack.c.l.b16 %v1884
    %v1938 = vunpack.c.l.b16 %v1885
    %v1939 = vunpack.c.l.b16 %v1886
    %v1940 = vunpack.c.l.b16 %v1887
    %v1941 = vunpack.c.l.b16 %v1888
    %v1942 = vunpack.c.l.b16 %v1889
    %v1943 = vunpack.c.l.b16 %v1890
    %v1944 = vunpack.c.l.b16 %v1891
    %v1945 = vunpack.c.l.b16 %v1892
    %v1946 = vunpack.c.l.b16 %v1893
    %v1947 = vunpack.c.l.b16 %v1894
    %v1948 = vpack.c.b16 %v1933, %v1932
    %v1949 = vpack.c.b16 %v1935, %v1934
    %v1950 = vpack.c.b16 %v1937, %v1936
    %v1951 = vpack.c.b16 %v1939, %v1938
    %v1952 = vpack.c.b16 %v1941, %v1940
    %v1953 = vpack.c.b16 %v1943, %v1942
    %v1954 = vpack.c.b16 %v1945, %v1944
    %v1955 = vpack.c.b16 %v1947, %v1946
    %1964 = vmatpush.bf16.msra.mxu0 %v1955
    %1965 = vmatpush.bf16.msra.mxu0 %v1954
    %1966 = vmatpush.bf16.msra.mxu0 %v1953
    %1967 = vmatpush.bf16.msra.mxu0 %v1952
    %1968 = vmatpush.bf16.msra.mxu0 %v1951
    %1969 = vmatpush.bf16.msra.mxu0 %v1950
    %1970 = vmatpush.bf16.msra.mxu0 %v1949
    %1971 = vmatpush.bf16.msra.mxu0 %v1948
    %1972 = vmatmul.bf16.gmra.mxu0 %v1895
    %v1973 = vpop.f32.mrf.mxu0
    %v1974 = vadd.f32 %v1914, %v1973
    %v1975 = vpop.f32.mrf.mxu0
    %v1976 = vadd.f32 %v1914, %v1975
    %1977 = vmatmul.bf16.gmra.mxu0 %v1896
    %v1978 = vpop.f32.mrf.mxu0
    %v1979 = vadd.f32 %v1914, %v1978
    %v1980 = vpop.f32.mrf.mxu0
    %v1981 = vadd.f32 %v1914, %v1980
    %1982 = vmatmul.bf16.gmra.mxu0 %v1897
    %v1983 = vpop.f32.mrf.mxu0
    %v1984 = vadd.f32 %v1914, %v1983
    %v1985 = vpop.f32.mrf.mxu0
    %v1986 = vadd.f32 %v1914, %v1985
    %1987 = vmatmul.bf16.gmra.mxu0 %v1898
    %v1988 = vpop.f32.mrf.mxu0
    %v1989 = vadd.f32 %v1914, %v1988
    %v1990 = vpop.f32.mrf.mxu0
    %v1991 = vadd.f32 %v1914, %v1990
    %1992 = vmatmul.bf16.gmra.mxu0 %v1899
    %v1993 = vpop.f32.mrf.mxu0
    %v1994 = vadd.f32 %v1914, %v1993
    %v1995 = vpop.f32.mrf.mxu0
    %v1996 = vadd.f32 %v1914, %v1995
    %1997 = vmatmul.bf16.gmra.mxu0 %v1900
    %v1998 = vpop.f32.mrf.mxu0
    %v1999 = vadd.f32 %v1914, %v1998
    %v2000 = vpop.f32.mrf.mxu0
    %v2001 = vadd.f32 %v1914, %v2000
    %2002 = vmatmul.bf16.gmra.mxu0 %v1901
    %v2003 = vpop.f32.mrf.mxu0
    %v2004 = vadd.f32 %v1914, %v2003
    %v2005 = vpop.f32.mrf.mxu0
    %v2006 = vadd.f32 %v1914, %v2005
    %2007 = vmatmul.bf16.gmra.mxu0 %v1902
    %v2008 = vpop.f32.mrf.mxu0
    %v2009 = vadd.f32 %v1914, %v2008
    %v2010 = vpop.f32.mrf.mxu0
    %v2011 = vadd.f32 %v1914, %v2010
    %2012 = vmatmul.bf16.gmra.mxu0 %v1903
    %v2013 = vpop.f32.mrf.mxu0
    %v2014 = vadd.f32 %v1914, %v2013
    %v2015 = vpop.f32.mrf.mxu0
    %v2016 = vadd.f32 %v1914, %v2015
    %2017 = vmatmul.bf16.gmra.mxu0 %v1904
    %v2018 = vpop.f32.mrf.mxu0
    %v2019 = vadd.f32 %v1914, %v2018
    %v2020 = vpop.f32.mrf.mxu0
    %v2021 = vadd.f32 %v1914, %v2020
    %2022 = vmatmul.bf16.gmra.mxu0 %v1905
    %v2023 = vpop.f32.mrf.mxu0
    %v2024 = vadd.f32 %v1914, %v2023
    %v2025 = vpop.f32.mrf.mxu0
    %v2026 = vadd.f32 %v1914, %v2025
    %2027 = vmatmul.bf16.gmra.mxu0 %v1906
    %v2028 = vpop.f32.mrf.mxu0
    %v2029 = vadd.f32 %v1914, %v2028
    %v2030 = vpop.f32.mrf.mxu0
    %v2031 = vadd.f32 %v1914, %v2030
    %2032 = vmatmul.bf16.gmra.mxu0 %v1907
    %v2033 = vpop.f32.mrf.mxu0
    %v2034 = vadd.f32 %v1914, %v2033
    %v2035 = vpop.f32.mrf.mxu0
    %v2036 = vadd.f32 %v1914, %v2035
    %2037 = vmatmul.bf16.gmra.mxu0 %v1908
    %v2038 = vpop.f32.mrf.mxu0
    %v2039 = vadd.f32 %v1914, %v2038
    %v2040 = vpop.f32.mrf.mxu0
    %v2041 = vadd.f32 %v1914, %v2040
    %2042 = vmatmul.bf16.gmra.mxu0 %v1909
    %v2043 = vpop.f32.mrf.mxu0
    %v2044 = vadd.f32 %v1914, %v2043
    %v2045 = vpop.f32.mrf.mxu0
    %v2046 = vadd.f32 %v1914, %v2045
    %2047 = vmatmul.bf16.gmra.mxu0 %v1910
    %v2048 = vpop.f32.mrf.mxu0
    %v2049 = vadd.f32 %v1914, %v2048
    %v2050 = vpop.f32.mrf.mxu0
    %v2051 = vadd.f32 %v1914, %v2050
    %2052 = vdwg.mxu0
    %v2053 = vadd.f32 %v1974, %v1575
    %v2054 = vadd.f32 %v1976, %v1576
    %v2055 = vadd.f32 %v1979, %v1577
    %v2056 = vadd.f32 %v1981, %v1578
    %v2057 = vadd.f32 %v1984, %v1579
    %v2058 = vadd.f32 %v1986, %v1580
    %v2059 = vadd.f32 %v1989, %v1581
    %v2060 = vadd.f32 %v1991, %v1582
    %v2061 = vadd.f32 %v1994, %v1583
    %v2062 = vadd.f32 %v1996, %v1584
    %v2063 = vadd.f32 %v1999, %v1585
    %v2064 = vadd.f32 %v2001, %v1586
    %v2065 = vadd.f32 %v2004, %v1587
    %v2066 = vadd.f32 %v2006, %v1588
    %v2067 = vadd.f32 %v2009, %v1589
    %v2068 = vadd.f32 %v2011, %v1590
    %v2069 = vadd.f32 %v2014, %v1591
    %v2070 = vadd.f32 %v2016, %v1592
    %v2071 = vadd.f32 %v2019, %v1593
    %v2072 = vadd.f32 %v2021, %v1594
    %v2073 = vadd.f32 %v2024, %v1595
    %v2074 = vadd.f32 %v2026, %v1596
    %v2075 = vadd.f32 %v2029, %v1597
    %v2076 = vadd.f32 %v2031, %v1598
    %v2077 = vadd.f32 %v2034, %v1599
    %v2078 = vadd.f32 %v2036, %v1600
    %v2079 = vadd.f32 %v2039, %v1601
    %v2080 = vadd.f32 %v2041, %v1602
    %v2081 = vadd.f32 %v2044, %v1603
    %v2082 = vadd.f32 %v2046, %v1604
    %v2083 = vadd.f32 %v2049, %v1605
    %v2084 = vadd.f32 %v2051, %v1606
    %vm2085 = vcmp.gt.f32.partialorder %v2053, 0.0
    %vm2086 = vcmp.gt.f32.partialorder %v2054, 0.0
    %vm2087 = vcmp.gt.f32.partialorder %v2055, 0.0
    %vm2088 = vcmp.gt.f32.partialorder %v2056, 0.0
    %vm2089 = vcmp.gt.f32.partialorder %v2057, 0.0
    %vm2090 = vcmp.gt.f32.partialorder %v2058, 0.0
    %vm2091 = vcmp.gt.f32.partialorder %v2059, 0.0
    %vm2092 = vcmp.gt.f32.partialorder %v2060, 0.0
    %vm2093 = vcmp.gt.f32.partialorder %v2061, 0.0
    %vm2094 = vcmp.gt.f32.partialorder %v2062, 0.0
    %vm2095 = vcmp.gt.f32.partialorder %v2063, 0.0
    %vm2096 = vcmp.gt.f32.partialorder %v2064, 0.0
    %vm2097 = vcmp.gt.f32.partialorder %v2065, 0.0
    %vm2098 = vcmp.gt.f32.partialorder %v2066, 0.0
    %vm2099 = vcmp.gt.f32.partialorder %v2067, 0.0
    %vm2100 = vcmp.gt.f32.partialorder %v2068, 0.0
    %vm2101 = vcmp.gt.f32.partialorder %v2069, 0.0
    %vm2102 = vcmp.gt.f32.partialorder %v2070, 0.0
    %vm2103 = vcmp.gt.f32.partialorder %v2071, 0.0
    %vm2104 = vcmp.gt.f32.partialorder %v2072, 0.0
    %vm2105 = vcmp.gt.f32.partialorder %v2073, 0.0
    %vm2106 = vcmp.gt.f32.partialorder %v2074, 0.0
    %vm2107 = vcmp.gt.f32.partialorder %v2075, 0.0
    %vm2108 = vcmp.gt.f32.partialorder %v2076, 0.0
    %vm2109 = vcmp.gt.f32.partialorder %v2077, 0.0
    %vm2110 = vcmp.gt.f32.partialorder %v2078, 0.0
    %vm2111 = vcmp.gt.f32.partialorder %v2079, 0.0
    %vm2112 = vcmp.gt.f32.partialorder %v2080, 0.0
    %vm2113 = vcmp.gt.f32.partialorder %v2081, 0.0
    %vm2114 = vcmp.gt.f32.partialorder %v2082, 0.0
    %vm2115 = vcmp.gt.f32.partialorder %v2083, 0.0
    %vm2116 = vcmp.gt.f32.partialorder %v2084, 0.0
    %v2117 = vmul.f32 %v2053, 0.1
    %v2118 = vmul.f32 %v2054, 0.1
    %v2119 = vmul.f32 %v2055, 0.1
    %v2120 = vmul.f32 %v2056, 0.1
    %v2121 = vmul.f32 %v2057, 0.1
    %v2122 = vmul.f32 %v2058, 0.1
    %v2123 = vmul.f32 %v2059, 0.1
    %v2124 = vmul.f32 %v2060, 0.1
    %v2125 = vmul.f32 %v2061, 0.1
    %v2126 = vmul.f32 %v2062, 0.1
    %v2127 = vmul.f32 %v2063, 0.1
    %v2128 = vmul.f32 %v2064, 0.1
    %v2129 = vmul.f32 %v2065, 0.1
    %v2130 = vmul.f32 %v2066, 0.1
    %v2131 = vmul.f32 %v2067, 0.1
    %v2132 = vmul.f32 %v2068, 0.1
    %v2133 = vmul.f32 %v2069, 0.1
    %v2134 = vmul.f32 %v2070, 0.1
    %v2135 = vmul.f32 %v2071, 0.1
    %v2136 = vmul.f32 %v2072, 0.1
    %v2137 = vmul.f32 %v2073, 0.1
    %v2138 = vmul.f32 %v2074, 0.1
    %v2139 = vmul.f32 %v2075, 0.1
    %v2140 = vmul.f32 %v2076, 0.1
    %v2141 = vmul.f32 %v2077, 0.1
    %v2142 = vmul.f32 %v2078, 0.1
    %v2143 = vmul.f32 %v2079, 0.1
    %v2144 = vmul.f32 %v2080, 0.1
    %v2145 = vmul.f32 %v2081, 0.1
    %v2146 = vmul.f32 %v2082, 0.1
    %v2147 = vmul.f32 %v2083, 0.1
    %v2148 = vmul.f32 %v2084, 0.1
    %v2149 = vsel %vm2085, %v2053, %v2117
    %v2150 = vsel %vm2086, %v2054, %v2118
    %v2151 = vsel %vm2087, %v2055, %v2119
    %v2152 = vsel %vm2088, %v2056, %v2120
    %v2153 = vsel %vm2089, %v2057, %v2121
    %v2154 = vsel %vm2090, %v2058, %v2122
    %v2155 = vsel %vm2091, %v2059, %v2123
    %v2156 = vsel %vm2092, %v2060, %v2124
    %v2157 = vsel %vm2093, %v2061, %v2125
    %v2158 = vsel %vm2094, %v2062, %v2126
    %v2159 = vsel %vm2095, %v2063, %v2127
    %v2160 = vsel %vm2096, %v2064, %v2128
    %v2161 = vsel %vm2097, %v2065, %v2129
    %v2162 = vsel %vm2098, %v2066, %v2130
    %v2163 = vsel %vm2099, %v2067, %v2131
    %v2164 = vsel %vm2100, %v2068, %v2132
    %v2165 = vsel %vm2101, %v2069, %v2133
    %v2166 = vsel %vm2102, %v2070, %v2134
    %v2167 = vsel %vm2103, %v2071, %v2135
    %v2168 = vsel %vm2104, %v2072, %v2136
    %v2169 = vsel %vm2105, %v2073, %v2137
    %v2170 = vsel %vm2106, %v2074, %v2138
    %v2171 = vsel %vm2107, %v2075, %v2139
    %v2172 = vsel %vm2108, %v2076, %v2140
    %v2173 = vsel %vm2109, %v2077, %v2141
    %v2174 = vsel %vm2110, %v2078, %v2142
    %v2175 = vsel %vm2111, %v2079, %v2143
    %v2176 = vsel %vm2112, %v2080, %v2144
    %v2177 = vsel %vm2113, %v2081, %v2145
    %v2178 = vsel %vm2114, %v2082, %v2146
    %v2179 = vsel %vm2115, %v2083, %v2147
    %v2180 = vsel %vm2116, %v2084, %v2148
    %v2181 = vld [vmem:[#allocation13] sm:$0xf]
    %v2182 = vld [vmem:[#allocation13 + $0x4] sm:$0xf]
    %v2183 = vld [vmem:[#allocation13 + $0x8] sm:$0xf]
    %v2184 = vld [vmem:[#allocation13 + $0xc] sm:$0xf]
    %v2185 = vld [vmem:[#allocation13 + $0x10] sm:$0xf]
    %v2186 = vld [vmem:[#allocation13 + $0x14] sm:$0xf]
    %v2187 = vld [vmem:[#allocation13 + $0x18] sm:$0xf]
    %v2188 = vld [vmem:[#allocation13 + $0x1c] sm:$0xf]
    %v2189 = vld [vmem:[#allocation13 + $0x20] sm:$0xf]
    %v2190 = vld [vmem:[#allocation13 + $0x24] sm:$0xf]
    %v2191 = vld [vmem:[#allocation13 + $0x28] sm:$0xf]
    %v2192 = vld [vmem:[#allocation13 + $0x2c] sm:$0xf]
    %v2193 = vld [vmem:[#allocation13 + $0x30] sm:$0xf]
    %v2194 = vld [vmem:[#allocation13 + $0x34] sm:$0xf]
    %v2195 = vld [vmem:[#allocation13 + $0x38] sm:$0xf]
    %v2196 = vld [vmem:[#allocation13 + $0x3c] sm:$0xf]
    %v2197 = vpack.c.bf16 %v2150, %v2149
    %v2198 = vpack.c.bf16 %v2152, %v2151
    %v2199 = vpack.c.bf16 %v2154, %v2153
    %v2200 = vpack.c.bf16 %v2156, %v2155
    %v2201 = vpack.c.bf16 %v2158, %v2157
    %v2202 = vpack.c.bf16 %v2160, %v2159
    %v2203 = vpack.c.bf16 %v2162, %v2161
    %v2204 = vpack.c.bf16 %v2164, %v2163
    %v2205 = vpack.c.bf16 %v2166, %v2165
    %v2206 = vpack.c.bf16 %v2168, %v2167
    %v2207 = vpack.c.bf16 %v2170, %v2169
    %v2208 = vpack.c.bf16 %v2172, %v2171
    %v2209 = vpack.c.bf16 %v2174, %v2173
    %v2210 = vpack.c.bf16 %v2176, %v2175
    %v2211 = vpack.c.bf16 %v2178, %v2177
    %v2212 = vpack.c.bf16 %v2180, %v2179
    %v2213 = vld [vmem:[%s8] sm:$0x1]
    %v2215 = vperm.slane %v2213, 0
    %v2233 = vunpack.c.l.b16 %v2181
    %v2234 = vunpack.c.l.b16 %v2182
    %v2235 = vunpack.c.l.b16 %v2183
    %v2236 = vunpack.c.l.b16 %v2184
    %v2237 = vunpack.c.l.b16 %v2185
    %v2238 = vunpack.c.l.b16 %v2186
    %v2239 = vunpack.c.l.b16 %v2187
    %v2240 = vunpack.c.l.b16 %v2188
    %v2241 = vunpack.c.l.b16 %v2189
    %v2242 = vunpack.c.l.b16 %v2190
    %v2243 = vunpack.c.l.b16 %v2191
    %v2244 = vunpack.c.l.b16 %v2192
    %v2245 = vunpack.c.l.b16 %v2193
    %v2246 = vunpack.c.l.b16 %v2194
    %v2247 = vunpack.c.l.b16 %v2195
    %v2248 = vunpack.c.l.b16 %v2196
    %v2249 = vpack.c.b16 %v2234, %v2233
    %v2250 = vpack.c.b16 %v2236, %v2235
    %v2251 = vpack.c.b16 %v2238, %v2237
    %v2252 = vpack.c.b16 %v2240, %v2239
    %v2253 = vpack.c.b16 %v2242, %v2241
    %v2254 = vpack.c.b16 %v2244, %v2243
    %v2255 = vpack.c.b16 %v2246, %v2245
    %v2256 = vpack.c.b16 %v2248, %v2247
    %2265 = vmatpush.bf16.msra.mxu0 %v2256
    %2266 = vmatpush.bf16.msra.mxu0 %v2255
    %2267 = vmatpush.bf16.msra.mxu0 %v2254
    %2268 = vmatpush.bf16.msra.mxu0 %v2253
    %2269 = vmatpush.bf16.msra.mxu0 %v2252
    %2270 = vmatpush.bf16.msra.mxu0 %v2251
    %2271 = vmatpush.bf16.msra.mxu0 %v2250
    %2272 = vmatpush.bf16.msra.mxu0 %v2249
    %2273 = vmatmul.bf16.gmra.mxu0 %v2197
    %v2274 = vpop.f32.mrf.mxu0
    %v2275 = vadd.f32 %v2215, %v2274
    %v2276 = vpop.f32.mrf.mxu0
    %v2277 = vadd.f32 %v2215, %v2276
    %2278 = vmatmul.bf16.gmra.mxu0 %v2198
    %v2279 = vpop.f32.mrf.mxu0
    %v2280 = vadd.f32 %v2215, %v2279
    %v2281 = vpop.f32.mrf.mxu0
    %v2282 = vadd.f32 %v2215, %v2281
    %2283 = vmatmul.bf16.gmra.mxu0 %v2199
    %v2284 = vpop.f32.mrf.mxu0
    %v2285 = vadd.f32 %v2215, %v2284
    %v2286 = vpop.f32.mrf.mxu0
    %v2287 = vadd.f32 %v2215, %v2286
    %2288 = vmatmul.bf16.gmra.mxu0 %v2200
    %v2289 = vpop.f32.mrf.mxu0
    %v2290 = vadd.f32 %v2215, %v2289
    %v2291 = vpop.f32.mrf.mxu0
    %v2292 = vadd.f32 %v2215, %v2291
    %2293 = vmatmul.bf16.gmra.mxu0 %v2201
    %v2294 = vpop.f32.mrf.mxu0
    %v2295 = vadd.f32 %v2215, %v2294
    %v2296 = vpop.f32.mrf.mxu0
    %v2297 = vadd.f32 %v2215, %v2296
    %2298 = vmatmul.bf16.gmra.mxu0 %v2202
    %v2299 = vpop.f32.mrf.mxu0
    %v2300 = vadd.f32 %v2215, %v2299
    %v2301 = vpop.f32.mrf.mxu0
    %v2302 = vadd.f32 %v2215, %v2301
    %2303 = vmatmul.bf16.gmra.mxu0 %v2203
    %v2304 = vpop.f32.mrf.mxu0
    %v2305 = vadd.f32 %v2215, %v2304
    %v2306 = vpop.f32.mrf.mxu0
    %v2307 = vadd.f32 %v2215, %v2306
    %2308 = vmatmul.bf16.gmra.mxu0 %v2204
    %v2309 = vpop.f32.mrf.mxu0
    %v2310 = vadd.f32 %v2215, %v2309
    %v2311 = vpop.f32.mrf.mxu0
    %v2312 = vadd.f32 %v2215, %v2311
    %2313 = vmatmul.bf16.gmra.mxu0 %v2205
    %v2314 = vpop.f32.mrf.mxu0
    %v2315 = vadd.f32 %v2215, %v2314
    %v2316 = vpop.f32.mrf.mxu0
    %v2317 = vadd.f32 %v2215, %v2316
    %2318 = vmatmul.bf16.gmra.mxu0 %v2206
    %v2319 = vpop.f32.mrf.mxu0
    %v2320 = vadd.f32 %v2215, %v2319
    %v2321 = vpop.f32.mrf.mxu0
    %v2322 = vadd.f32 %v2215, %v2321
    %2323 = vmatmul.bf16.gmra.mxu0 %v2207
    %v2324 = vpop.f32.mrf.mxu0
    %v2325 = vadd.f32 %v2215, %v2324
    %v2326 = vpop.f32.mrf.mxu0
    %v2327 = vadd.f32 %v2215, %v2326
    %2328 = vmatmul.bf16.gmra.mxu0 %v2208
    %v2329 = vpop.f32.mrf.mxu0
    %v2330 = vadd.f32 %v2215, %v2329
    %v2331 = vpop.f32.mrf.mxu0
    %v2332 = vadd.f32 %v2215, %v2331
    %2333 = vmatmul.bf16.gmra.mxu0 %v2209
    %v2334 = vpop.f32.mrf.mxu0
    %v2335 = vadd.f32 %v2215, %v2334
    %v2336 = vpop.f32.mrf.mxu0
    %v2337 = vadd.f32 %v2215, %v2336
    %2338 = vmatmul.bf16.gmra.mxu0 %v2210
    %v2339 = vpop.f32.mrf.mxu0
    %v2340 = vadd.f32 %v2215, %v2339
    %v2341 = vpop.f32.mrf.mxu0
    %v2342 = vadd.f32 %v2215, %v2341
    %2343 = vmatmul.bf16.gmra.mxu0 %v2211
    %v2344 = vpop.f32.mrf.mxu0
    %v2345 = vadd.f32 %v2215, %v2344
    %v2346 = vpop.f32.mrf.mxu0
    %v2347 = vadd.f32 %v2215, %v2346
    %2348 = vmatmul.bf16.gmra.mxu0 %v2212
    %v2349 = vpop.f32.mrf.mxu0
    %v2350 = vadd.f32 %v2215, %v2349
    %v2351 = vpop.f32.mrf.mxu0
    %v2352 = vadd.f32 %v2215, %v2351
    %2353 = vdwg.mxu0
    %vm2354 = vcmp.gt.f32.partialorder %v2275, 0.0
    %vm2355 = vcmp.gt.f32.partialorder %v2277, 0.0
    %vm2356 = vcmp.gt.f32.partialorder %v2280, 0.0
    %vm2357 = vcmp.gt.f32.partialorder %v2282, 0.0
    %vm2358 = vcmp.gt.f32.partialorder %v2285, 0.0
    %vm2359 = vcmp.gt.f32.partialorder %v2287, 0.0
    %vm2360 = vcmp.gt.f32.partialorder %v2290, 0.0
    %vm2361 = vcmp.gt.f32.partialorder %v2292, 0.0
    %vm2362 = vcmp.gt.f32.partialorder %v2295, 0.0
    %vm2363 = vcmp.gt.f32.partialorder %v2297, 0.0
    %vm2364 = vcmp.gt.f32.partialorder %v2300, 0.0
    %vm2365 = vcmp.gt.f32.partialorder %v2302, 0.0
    %vm2366 = vcmp.gt.f32.partialorder %v2305, 0.0
    %vm2367 = vcmp.gt.f32.partialorder %v2307, 0.0
    %vm2368 = vcmp.gt.f32.partialorder %v2310, 0.0
    %vm2369 = vcmp.gt.f32.partialorder %v2312, 0.0
    %vm2370 = vcmp.gt.f32.partialorder %v2315, 0.0
    %vm2371 = vcmp.gt.f32.partialorder %v2317, 0.0
    %vm2372 = vcmp.gt.f32.partialorder %v2320, 0.0
    %vm2373 = vcmp.gt.f32.partialorder %v2322, 0.0
    %vm2374 = vcmp.gt.f32.partialorder %v2325, 0.0
    %vm2375 = vcmp.gt.f32.partialorder %v2327, 0.0
    %vm2376 = vcmp.gt.f32.partialorder %v2330, 0.0
    %vm2377 = vcmp.gt.f32.partialorder %v2332, 0.0
    %vm2378 = vcmp.gt.f32.partialorder %v2335, 0.0
    %vm2379 = vcmp.gt.f32.partialorder %v2337, 0.0
    %vm2380 = vcmp.gt.f32.partialorder %v2340, 0.0
    %vm2381 = vcmp.gt.f32.partialorder %v2342, 0.0
    %vm2382 = vcmp.gt.f32.partialorder %v2345, 0.0
    %vm2383 = vcmp.gt.f32.partialorder %v2347, 0.0
    %vm2384 = vcmp.gt.f32.partialorder %v2350, 0.0
    %vm2385 = vcmp.gt.f32.partialorder %v2352, 0.0
    %v2386 = vmul.f32 %v2275, 0.1
    %v2387 = vmul.f32 %v2277, 0.1
    %v2388 = vmul.f32 %v2280, 0.1
    %v2389 = vmul.f32 %v2282, 0.1
    %v2390 = vmul.f32 %v2285, 0.1
    %v2391 = vmul.f32 %v2287, 0.1
    %v2392 = vmul.f32 %v2290, 0.1
    %v2393 = vmul.f32 %v2292, 0.1
    %v2394 = vmul.f32 %v2295, 0.1
    %v2395 = vmul.f32 %v2297, 0.1
    %v2396 = vmul.f32 %v2300, 0.1
    %v2397 = vmul.f32 %v2302, 0.1
    %v2398 = vmul.f32 %v2305, 0.1
    %v2399 = vmul.f32 %v2307, 0.1
    %v2400 = vmul.f32 %v2310, 0.1
    %v2401 = vmul.f32 %v2312, 0.1
    %v2402 = vmul.f32 %v2315, 0.1
    %v2403 = vmul.f32 %v2317, 0.1
    %v2404 = vmul.f32 %v2320, 0.1
    %v2405 = vmul.f32 %v2322, 0.1
    %v2406 = vmul.f32 %v2325, 0.1
    %v2407 = vmul.f32 %v2327, 0.1
    %v2408 = vmul.f32 %v2330, 0.1
    %v2409 = vmul.f32 %v2332, 0.1
    %v2410 = vmul.f32 %v2335, 0.1
    %v2411 = vmul.f32 %v2337, 0.1
    %v2412 = vmul.f32 %v2340, 0.1
    %v2413 = vmul.f32 %v2342, 0.1
    %v2414 = vmul.f32 %v2345, 0.1
    %v2415 = vmul.f32 %v2347, 0.1
    %v2416 = vmul.f32 %v2350, 0.1
    %v2417 = vmul.f32 %v2352, 0.1
    %v2418 = vsel %vm2354, %v2275, %v2386
    %v2419 = vsel %vm2355, %v2277, %v2387
    %v2420 = vsel %vm2356, %v2280, %v2388
    %v2421 = vsel %vm2357, %v2282, %v2389
    %v2422 = vsel %vm2358, %v2285, %v2390
    %v2423 = vsel %vm2359, %v2287, %v2391
    %v2424 = vsel %vm2360, %v2290, %v2392
    %v2425 = vsel %vm2361, %v2292, %v2393
    %v2426 = vsel %vm2362, %v2295, %v2394
    %v2427 = vsel %vm2363, %v2297, %v2395
    %v2428 = vsel %vm2364, %v2300, %v2396
    %v2429 = vsel %vm2365, %v2302, %v2397
    %v2430 = vsel %vm2366, %v2305, %v2398
    %v2431 = vsel %vm2367, %v2307, %v2399
    %v2432 = vsel %vm2368, %v2310, %v2400
    %v2433 = vsel %vm2369, %v2312, %v2401
    %v2434 = vsel %vm2370, %v2315, %v2402
    %v2435 = vsel %vm2371, %v2317, %v2403
    %v2436 = vsel %vm2372, %v2320, %v2404
    %v2437 = vsel %vm2373, %v2322, %v2405
    %v2438 = vsel %vm2374, %v2325, %v2406
    %v2439 = vsel %vm2375, %v2327, %v2407
    %v2440 = vsel %vm2376, %v2330, %v2408
    %v2441 = vsel %vm2377, %v2332, %v2409
    %v2442 = vsel %vm2378, %v2335, %v2410
    %v2443 = vsel %vm2379, %v2337, %v2411
    %v2444 = vsel %vm2380, %v2340, %v2412
    %v2445 = vsel %vm2381, %v2342, %v2413
    %v2446 = vsel %vm2382, %v2345, %v2414
    %v2447 = vsel %vm2383, %v2347, %v2415
    %v2448 = vsel %vm2384, %v2350, %v2416
    %v2449 = vsel %vm2385, %v2352, %v2417
    %v2450 = vld [vmem:[#allocation14] sm:$0xf]
    %v2451 = vld [vmem:[#allocation14 + $0x4] sm:$0xf]
    %v2452 = vld [vmem:[#allocation14 + $0x8] sm:$0xf]
    %v2453 = vld [vmem:[#allocation14 + $0xc] sm:$0xf]
    %v2454 = vld [vmem:[#allocation14 + $0x10] sm:$0xf]
    %v2455 = vld [vmem:[#allocation14 + $0x14] sm:$0xf]
    %v2456 = vld [vmem:[#allocation14 + $0x18] sm:$0xf]
    %v2457 = vld [vmem:[#allocation14 + $0x1c] sm:$0xf]
    %v2458 = vld [vmem:[#allocation14 + $0x20] sm:$0xf]
    %v2459 = vld [vmem:[#allocation14 + $0x24] sm:$0xf]
    %v2460 = vld [vmem:[#allocation14 + $0x28] sm:$0xf]
    %v2461 = vld [vmem:[#allocation14 + $0x2c] sm:$0xf]
    %v2462 = vld [vmem:[#allocation14 + $0x30] sm:$0xf]
    %v2463 = vld [vmem:[#allocation14 + $0x34] sm:$0xf]
    %v2464 = vld [vmem:[#allocation14 + $0x38] sm:$0xf]
    %v2465 = vld [vmem:[#allocation14 + $0x3c] sm:$0xf]
    %v2466 = vpack.c.bf16 %v2419, %v2418
    %v2467 = vpack.c.bf16 %v2421, %v2420
    %v2468 = vpack.c.bf16 %v2423, %v2422
    %v2469 = vpack.c.bf16 %v2425, %v2424
    %v2470 = vpack.c.bf16 %v2427, %v2426
    %v2471 = vpack.c.bf16 %v2429, %v2428
    %v2472 = vpack.c.bf16 %v2431, %v2430
    %v2473 = vpack.c.bf16 %v2433, %v2432
    %v2474 = vpack.c.bf16 %v2435, %v2434
    %v2475 = vpack.c.bf16 %v2437, %v2436
    %v2476 = vpack.c.bf16 %v2439, %v2438
    %v2477 = vpack.c.bf16 %v2441, %v2440
    %v2478 = vpack.c.bf16 %v2443, %v2442
    %v2479 = vpack.c.bf16 %v2445, %v2444
    %v2480 = vpack.c.bf16 %v2447, %v2446
    %v2481 = vpack.c.bf16 %v2449, %v2448
    %v2482 = vld [vmem:[%s10] sm:$0x1]
    %v2484 = vperm.slane %v2482, 0
    %v2502 = vunpack.c.l.b16 %v2450
    %v2503 = vunpack.c.l.b16 %v2451
    %v2504 = vunpack.c.l.b16 %v2452
    %v2505 = vunpack.c.l.b16 %v2453
    %v2506 = vunpack.c.l.b16 %v2454
    %v2507 = vunpack.c.l.b16 %v2455
    %v2508 = vunpack.c.l.b16 %v2456
    %v2509 = vunpack.c.l.b16 %v2457
    %v2510 = vunpack.c.l.b16 %v2458
    %v2511 = vunpack.c.l.b16 %v2459
    %v2512 = vunpack.c.l.b16 %v2460
    %v2513 = vunpack.c.l.b16 %v2461
    %v2514 = vunpack.c.l.b16 %v2462
    %v2515 = vunpack.c.l.b16 %v2463
    %v2516 = vunpack.c.l.b16 %v2464
    %v2517 = vunpack.c.l.b16 %v2465
    %v2518 = vpack.c.b16 %v2503, %v2502
    %v2519 = vpack.c.b16 %v2505, %v2504
    %v2520 = vpack.c.b16 %v2507, %v2506
    %v2521 = vpack.c.b16 %v2509, %v2508
    %v2522 = vpack.c.b16 %v2511, %v2510
    %v2523 = vpack.c.b16 %v2513, %v2512
    %v2524 = vpack.c.b16 %v2515, %v2514
    %v2525 = vpack.c.b16 %v2517, %v2516
    %2534 = vmatpush.bf16.msra.mxu0 %v2525
    %2535 = vmatpush.bf16.msra.mxu0 %v2524
    %2536 = vmatpush.bf16.msra.mxu0 %v2523
    %2537 = vmatpush.bf16.msra.mxu0 %v2522
    %2538 = vmatpush.bf16.msra.mxu0 %v2521
    %2539 = vmatpush.bf16.msra.mxu0 %v2520
    %2540 = vmatpush.bf16.msra.mxu0 %v2519
    %2541 = vmatpush.bf16.msra.mxu0 %v2518
    %2542 = vmatmul.bf16.gmra.mxu0 %v2466
    %v2543 = vpop.f32.mrf.mxu0
    %v2544 = vadd.f32 %v2484, %v2543
    %v2545 = vpop.f32.mrf.mxu0
    %v2546 = vadd.f32 %v2484, %v2545
    %2547 = vmatmul.bf16.gmra.mxu0 %v2467
    %v2548 = vpop.f32.mrf.mxu0
    %v2549 = vadd.f32 %v2484, %v2548
    %v2550 = vpop.f32.mrf.mxu0
    %v2551 = vadd.f32 %v2484, %v2550
    %2552 = vmatmul.bf16.gmra.mxu0 %v2468
    %v2553 = vpop.f32.mrf.mxu0
    %v2554 = vadd.f32 %v2484, %v2553
    %v2555 = vpop.f32.mrf.mxu0
    %v2556 = vadd.f32 %v2484, %v2555
    %2557 = vmatmul.bf16.gmra.mxu0 %v2469
    %v2558 = vpop.f32.mrf.mxu0
    %v2559 = vadd.f32 %v2484, %v2558
    %v2560 = vpop.f32.mrf.mxu0
    %v2561 = vadd.f32 %v2484, %v2560
    %2562 = vmatmul.bf16.gmra.mxu0 %v2470
    %v2563 = vpop.f32.mrf.mxu0
    %v2564 = vadd.f32 %v2484, %v2563
    %v2565 = vpop.f32.mrf.mxu0
    %v2566 = vadd.f32 %v2484, %v2565
    %2567 = vmatmul.bf16.gmra.mxu0 %v2471
    %v2568 = vpop.f32.mrf.mxu0
    %v2569 = vadd.f32 %v2484, %v2568
    %v2570 = vpop.f32.mrf.mxu0
    %v2571 = vadd.f32 %v2484, %v2570
    %2572 = vmatmul.bf16.gmra.mxu0 %v2472
    %v2573 = vpop.f32.mrf.mxu0
    %v2574 = vadd.f32 %v2484, %v2573
    %v2575 = vpop.f32.mrf.mxu0
    %v2576 = vadd.f32 %v2484, %v2575
    %2577 = vmatmul.bf16.gmra.mxu0 %v2473
    %v2578 = vpop.f32.mrf.mxu0
    %v2579 = vadd.f32 %v2484, %v2578
    %v2580 = vpop.f32.mrf.mxu0
    %v2581 = vadd.f32 %v2484, %v2580
    %2582 = vmatmul.bf16.gmra.mxu0 %v2474
    %v2583 = vpop.f32.mrf.mxu0
    %v2584 = vadd.f32 %v2484, %v2583
    %v2585 = vpop.f32.mrf.mxu0
    %v2586 = vadd.f32 %v2484, %v2585
    %2587 = vmatmul.bf16.gmra.mxu0 %v2475
    %v2588 = vpop.f32.mrf.mxu0
    %v2589 = vadd.f32 %v2484, %v2588
    %v2590 = vpop.f32.mrf.mxu0
    %v2591 = vadd.f32 %v2484, %v2590
    %2592 = vmatmul.bf16.gmra.mxu0 %v2476
    %v2593 = vpop.f32.mrf.mxu0
    %v2594 = vadd.f32 %v2484, %v2593
    %v2595 = vpop.f32.mrf.mxu0
    %v2596 = vadd.f32 %v2484, %v2595
    %2597 = vmatmul.bf16.gmra.mxu0 %v2477
    %v2598 = vpop.f32.mrf.mxu0
    %v2599 = vadd.f32 %v2484, %v2598
    %v2600 = vpop.f32.mrf.mxu0
    %v2601 = vadd.f32 %v2484, %v2600
    %2602 = vmatmul.bf16.gmra.mxu0 %v2478
    %v2603 = vpop.f32.mrf.mxu0
    %v2604 = vadd.f32 %v2484, %v2603
    %v2605 = vpop.f32.mrf.mxu0
    %v2606 = vadd.f32 %v2484, %v2605
    %2607 = vmatmul.bf16.gmra.mxu0 %v2479
    %v2608 = vpop.f32.mrf.mxu0
    %v2609 = vadd.f32 %v2484, %v2608
    %v2610 = vpop.f32.mrf.mxu0
    %v2611 = vadd.f32 %v2484, %v2610
    %2612 = vmatmul.bf16.gmra.mxu0 %v2480
    %v2613 = vpop.f32.mrf.mxu0
    %v2614 = vadd.f32 %v2484, %v2613
    %v2615 = vpop.f32.mrf.mxu0
    %v2616 = vadd.f32 %v2484, %v2615
    %2617 = vmatmul.bf16.gmra.mxu0 %v2481
    %v2618 = vpop.f32.mrf.mxu0
    %v2619 = vadd.f32 %v2484, %v2618
    %v2620 = vpop.f32.mrf.mxu0
    %v2621 = vadd.f32 %v2484, %v2620
    %2622 = vdwg.mxu0
    %2623 = vst [vmem:[#allocation16] sm:$0xff] %v2544
    %2624 = vst [vmem:[#allocation16 + $0x8] sm:$0xff] %v2546
    %2625 = vst [vmem:[#allocation16 + $0x10] sm:$0xff] %v2549
    %2626 = vst [vmem:[#allocation16 + $0x18] sm:$0xff] %v2551
    %2627 = vst [vmem:[#allocation16 + $0x20] sm:$0xff] %v2554
    %2628 = vst [vmem:[#allocation16 + $0x28] sm:$0xff] %v2556
    %2629 = vst [vmem:[#allocation16 + $0x30] sm:$0xff] %v2559
    %2630 = vst [vmem:[#allocation16 + $0x38] sm:$0xff] %v2561
    %2631 = vst [vmem:[#allocation16 + $0x40] sm:$0xff] %v2564
    %2632 = vst [vmem:[#allocation16 + $0x48] sm:$0xff] %v2566
    %2633 = vst [vmem:[#allocation16 + $0x50] sm:$0xff] %v2569
    %2634 = vst [vmem:[#allocation16 + $0x58] sm:$0xff] %v2571
    %2635 = vst [vmem:[#allocation16 + $0x60] sm:$0xff] %v2574
    %2636 = vst [vmem:[#allocation16 + $0x68] sm:$0xff] %v2576
    %2637 = vst [vmem:[#allocation16 + $0x70] sm:$0xff] %v2579
    %2638 = vst [vmem:[#allocation16 + $0x78] sm:$0xff] %v2581
    %2639 = vst [vmem:[#allocation16 + $0x80] sm:$0xff] %v2584
    %2640 = vst [vmem:[#allocation16 + $0x88] sm:$0xff] %v2586
    %2641 = vst [vmem:[#allocation16 + $0x90] sm:$0xff] %v2589
    %2642 = vst [vmem:[#allocation16 + $0x98] sm:$0xff] %v2591
    %2643 = vst [vmem:[#allocation16 + $0xa0] sm:$0xff] %v2594
    %2644 = vst [vmem:[#allocation16 + $0xa8] sm:$0xff] %v2596
    %2645 = vst [vmem:[#allocation16 + $0xb0] sm:$0xff] %v2599
    %2646 = vst [vmem:[#allocation16 + $0xb8] sm:$0xff] %v2601
    %2647 = vst [vmem:[#allocation16 + $0xc0] sm:$0xff] %v2604
    %2648 = vst [vmem:[#allocation16 + $0xc8] sm:$0xff] %v2606
    %2649 = vst [vmem:[#allocation16 + $0xd0] sm:$0xff] %v2609
    %2650 = vst [vmem:[#allocation16 + $0xd8] sm:$0xff] %v2611
    %2651 = vst [vmem:[#allocation16 + $0xe0] sm:$0xff] %v2614
    %2652 = vst [vmem:[#allocation16 + $0xe8] sm:$0xff] %v2616
    %2653 = vst [vmem:[#allocation16 + $0xf0] sm:$0xff] %v2619
    %2654 = vst [vmem:[#allocation16 + $0xf8] sm:$0xff] %v2621
    // Predicated region
    $region78: #{tpu_custom_call.1} parent=1 // pred_check
      _
    $region79: #{tpu_custom_call.1} parent=1 // pred_check_branch
      %2656 = sbr.rel (0) target = $region81
    $region80: #{tpu_custom_call.1} parent=1 // pred_region
      %2658 = vsyncadd [#allocation4], 0
      %s2659 = sshll.u32 [#allocation16], 4
      %s2660 = int_to_ptr.vmem [resolvable:$true] %s2659
      %s2661 = sshll.u32 %s11, 4
      %s2662 = int_to_ptr.hbm [resolvable:$true] %s2661
      %2667 = dma.vmem_to_hbm [thread:$0]  %s2660, 4096, %s2662, [#allocation4], 128, 128, 8
    $region81: #{tpu_custom_call.1} parent=1 // pred_fallthru
      _
    // Predicated region
    $region82: #{tpu_custom_call.1} parent=1 // pred_check
      _
    $region83: #{tpu_custom_call.1} parent=1 // pred_check_branch
      %2669 = sbr.rel (0) target = $region85
    $region84: #{tpu_custom_call.1} parent=1 // pred_region
      %2671 = dma.done [#allocation4], 4096
    $region85: #{tpu_custom_call.1} parent=1 // pred_fallthru
      _
    %2672 = vsyncpa [#allocation3], 1
    %2673 = vsyncpa [#allocation6], 1
    %2674 = vsyncpa [#allocation9], 1
    %2675 = vsyncpa [#allocation12], 1
    %2676 = vsyncpa [#allocation15], 1
    %2677 = vsyncpa [#allocation4], 1

// kernel: tpu_custom_call.1
$region0: #{tpu_custom_call.1}
  #allocation0 [shape = 'u32[]', space=smem, size = 0x4, offset = 0x4, fixed_abs, tag = 'smem constant byte address 0x4 - core index']
  #allocation1 [shape = 'u32[72,128]{1,0:T(1,128)}', space=vmem, size = 0x9000, scoped, tag = 'internal scratch']
  %s0 = inlined_call_operand.hbm [shape: f32[256,128], index: 0, kind: input, shape index: {}]
  %s1 = inlined_call_operand.hbm [shape: bf16[128,128], index: 1, kind: input, shape index: {}]
  %s2 = inlined_call_operand.hbm [shape: f32[1,128], index: 2, kind: input, shape index: {}]
  %s3 = inlined_call_operand.hbm [shape: bf16[3,128,128], index: 3, kind: input, shape index: {}]
  %s4 = inlined_call_operand.vmem [shape: f32[3,1,128], index: 4, kind: input, shape index: {}]
  %s5 = inlined_call_operand.hbm [shape: bf16[3,128,128], index: 5, kind: input, shape index: {}]
  %s6 = inlined_call_operand.hbm [shape: f32[3,1,128], index: 6, kind: input, shape index: {}]
  %s7 = inlined_call_operand.hbm [shape: bf16[128,128], index: 7, kind: input, shape index: {}]
  %s8 = inlined_call_operand.vmem [shape: f32[1,128], index: 8, kind: input, shape index: {}]
  %s9 = inlined_call_operand.hbm [shape: bf16[128,128], index: 9, kind: input, shape index: {}]
  %s10 = inlined_call_operand.vmem [shape: f32[1,128], index: 10, kind: input, shape index: {}]
  %s11 = inlined_call_operand.hbm [shape: f32[256,128], index: 11, kind: output, shape index: {}]
  %s12 = sld [smem:[#allocation0]]
  $region86: #{tpu_custom_call.1} parent=0
    _
  %s14 = ssub.s32 1, %s12
  %s15 = scalar_select 0, %s14, %s12
  $region1: #{tpu_custom_call.1} parent=0
    #allocation2 [shape = 'u8[131072]{0}', space=vmem, size = 0x20000, scoped, tag = 'input window, operand 0, single buffered']
    #allocation3 [shape = 's32[1]{0}', space=sflag, size = 0x4, scoped, tag = 'scoped memory for tpu_custom_call.1']
    #allocation4 [shape = 's32[1]{0}', space=sflag, size = 0x4, scoped, tag = 'scoped memory for tpu_custom_call.1']
    #allocation5 [shape = 'u8[32768]{0}', space=vmem, size = 0x8000, scoped, tag = 'input window, operand 1, single buffered']
    #allocation6 [shape = 's32[1]{0}', space=sflag, size = 0x4, scoped, tag = 'scoped memory for tpu_custom_call.1']
    #allocation7 [shape = 'u8[512]{0}', space=vmem, size = 0x400, scoped, tag = 'input window, operand 2, single buffered']
    #allocation8 [shape = 'u8[98304]{0}', space=vmem, size = 0x18000, scoped, tag = 'input window, operand 3, single buffered']
    #allocation9 [shape = 's32[1]{0}', space=sflag, size = 0x4, scoped, tag = 'scoped memory for tpu_custom_call.1']
    #allocation10 [shape = 'u8[98304]{0}', space=vmem, size = 0x18000, scoped, tag = 'input window, operand 5, single buffered']
    #allocation11 [shape = 'u8[1536]{0}', space=vmem, size = 0x800, scoped, tag = 'input window, operand 6, single buffered']
    #allocation12 [shape = 's32[1]{0}', space=sflag, size = 0x4, scoped, tag = 'scoped memory for tpu_custom_call.1']
    #allocation13 [shape = 'u8[32768]{0}', space=vmem, size = 0x8000, scoped, tag = 'input window, operand 7, single buffered']
    #allocation14 [shape = 'u8[32768]{0}', space=vmem, size = 0x8000, scoped, tag = 'input window, operand 9, single buffered']
    #allocation15 [shape = 's32[1]{0}', space=sflag, size = 0x4, scoped, tag = 'scoped memory for tpu_custom_call.1']
    #allocation16 [shape = 'u8[131072]{0}', space=vmem, size = 0x20000, scoped, tag = 'output window, operand 0, single buffered']
    %16 = vsyncpa [#allocation3], 0
    %17 = vsyncpa [#allocation6], 0
    %18 = vsyncpa [#allocation9], 0
    %19 = vsyncpa [#allocation12], 0
    %20 = vsyncpa [#allocation15], 0
    %21 = vsyncpa [#allocation4], 0
    // Predicated region
    $region2: #{tpu_custom_call.1} parent=1 // pred_check
      _
    $region3: #{tpu_custom_call.1} parent=1 // pred_check_branch
      %23 = sbr.rel (0) target = $region5
    $region4: #{tpu_custom_call.1} parent=1 // pred_region
      %25 = vsyncadd [#allocation3], 0
      %s26 = sshll.u32 %s0, 4
      %s27 = int_to_ptr.hbm [resolvable:$true] %s26
      %s28 = sshll.u32 [#allocation2], 4
      %s29 = int_to_ptr.vmem [resolvable:$true] %s28
      %34 = dma.hbm_to_vmem [thread:$0]  %s27, 4096, %s29, [#allocation3], 128, 128, 8
    $region5: #{tpu_custom_call.1} parent=1 // pred_fallthru
      _
    // Predicated region
    $region6: #{tpu_custom_call.1} parent=1 // pred_check
      _
    $region7: #{tpu_custom_call.1} parent=1 // pred_check_branch
      %36 = sbr.rel (0) target = $region9
    $region8: #{tpu_custom_call.1} parent=1 // pred_region
      %38 = vsyncadd [#allocation6], 0
      %s39 = sshll.u32 %s1, 4
      %s40 = int_to_ptr.hbm [resolvable:$true] %s39
      %s41 = sshll.u32 [#allocation5], 4
      %s42 = int_to_ptr.vmem [resolvable:$true] %s41
      %47 = dma.hbm_to_vmem [thread:$0]  %s40, 1024, %s42, [#allocation6], 64, 64, 4
    $region9: #{tpu_custom_call.1} parent=1 // pred_fallthru
      _
    // Predicated region
    $region10: #{tpu_custom_call.1} parent=1 // pred_check
      _
    $region11: #{tpu_custom_call.1} parent=1 // pred_check_branch
      %49 = sbr.rel (0) target = $region13
    $region12: #{tpu_custom_call.1} parent=1 // pred_region
      %51 = vsyncadd [#allocation6], 0
      %s53 = sshll.u32 %s2, 4
      %s54 = int_to_ptr.hbm [resolvable:$true] %s53
      %s55 = sshll.u32 [#allocation7], 4
      %s56 = int_to_ptr.vmem [resolvable:$true] %s55
      %58 = dma.hbm_to_vmem [thread:$0]  %s54, 16, %s56, [#allocation6]
    $region13: #{tpu_custom_call.1} parent=1 // pred_fallthru
      _
    // Predicated region
    $region14: #{tpu_custom_call.1} parent=1 // pred_check
      _
    $region15: #{tpu_custom_call.1} parent=1 // pred_check_branch
      %60 = sbr.rel (0) target = $region17
    $region16: #{tpu_custom_call.1} parent=1 // pred_region
      %62 = vsyncadd [#allocation9], 0
      %s63 = sshll.u32 %s3, 4
      %s64 = int_to_ptr.hbm [resolvable:$true] %s63
      %s65 = sshll.u32 [#allocation8], 4
      %s66 = int_to_ptr.vmem [resolvable:$true] %s65
      %71 = dma.hbm_to_vmem [thread:$0]  %s64, 3072, %s66, [#allocation9], 64, 64, 4
    $region17: #{tpu_custom_call.1} parent=1 // pred_fallthru
      _
    // Predicated region
    $region18: #{tpu_custom_call.1} parent=1 // pred_check
      _
    $region19: #{tpu_custom_call.1} parent=1 // pred_check_branch
      %73 = sbr.rel (0) target = $region21
    $region20: #{tpu_custom_call.1} parent=1 // pred_region
      _
    $region21: #{tpu_custom_call.1} parent=1 // pred_fallthru
      _
    // Predicated region
    $region22: #{tpu_custom_call.1} parent=1 // pred_check
      _
    $region23: #{tpu_custom_call.1} parent=1 // pred_check_branch
      %75 = sbr.rel (0) target = $region25
    $region24: #{tpu_custom_call.1} parent=1 // pred_region
      %77 = vsyncadd [#allocation9], 0
      %s78 = sshll.u32 %s5, 4
      %s79 = int_to_ptr.hbm [resolvable:$true] %s78
      %s80 = sshll.u32 [#allocation10], 4
      %s81 = int_to_ptr.vmem [resolvable:$true] %s80
      %86 = dma.hbm_to_vmem [thread:$0]  %s79, 3072, %s81, [#allocation9], 64, 64, 4
    $region25: #{tpu_custom_call.1} parent=1 // pred_fallthru
      _
    // Predicated region
    $region26: #{tpu_custom_call.1} parent=1 // pred_check
      _
    $region27: #{tpu_custom_call.1} parent=1 // pred_check_branch
      %88 = sbr.rel (0) target = $region29
    $region28: #{tpu_custom_call.1} parent=1 // pred_region
      %90 = vsyncadd [#allocation12], 0
      %s91 = sshll.u32 %s6, 4
      %s92 = int_to_ptr.hbm [resolvable:$true] %s91
      %s93 = sshll.u32 [#allocation11], 4
      %s94 = int_to_ptr.vmem [resolvable:$true] %s93
      %99 = dma.hbm_to_vmem [thread:$0]  %s92, 48, %s94, [#allocation12], 16, 16, 1
    $region29: #{tpu_custom_call.1} parent=1 // pred_fallthru
      _
    // Predicated region
    $region30: #{tpu_custom_call.1} parent=1 // pred_check
      _
    $region31: #{tpu_custom_call.1} parent=1 // pred_check_branch
      %101 = sbr.rel (0) target = $region33
    $region32: #{tpu_custom_call.1} parent=1 // pred_region
      %103 = vsyncadd [#allocation12], 0
      %s104 = sshll.u32 %s7, 4
      %s105 = int_to_ptr.hbm [resolvable:$true] %s104
      %s106 = sshll.u32 [#allocation13], 4
      %s107 = int_to_ptr.vmem [resolvable:$true] %s106
      %112 = dma.hbm_to_vmem [thread:$0]  %s105, 1024, %s107, [#allocation12], 64, 64, 4
    $region33: #{tpu_custom_call.1} parent=1 // pred_fallthru
      _
    // Predicated region
    $region34: #{tpu_custom_call.1} parent=1 // pred_check
      _
    $region35: #{tpu_custom_call.1} parent=1 // pred_check_branch
      %114 = sbr.rel (0) target = $region37
    $region36: #{tpu_custom_call.1} parent=1 // pred_region
      _
    $region37: #{tpu_custom_call.1} parent=1 // pred_fallthru
      _
    // Predicated region
    $region38: #{tpu_custom_call.1} parent=1 // pred_check
      _
    $region39: #{tpu_custom_call.1} parent=1 // pred_check_branch
      %116 = sbr.rel (0) target = $region41
    $region40: #{tpu_custom_call.1} parent=1 // pred_region
      %118 = vsyncadd [#allocation15], 0
      %s119 = sshll.u32 %s9, 4
      %s120 = int_to_ptr.hbm [resolvable:$true] %s119
      %s121 = sshll.u32 [#allocation14], 4
      %s122 = int_to_ptr.vmem [resolvable:$true] %s121
      %127 = dma.hbm_to_vmem [thread:$0]  %s120, 1024, %s122, [#allocation15], 64, 64, 4
    $region41: #{tpu_custom_call.1} parent=1 // pred_fallthru
      _
    // Predicated region
    $region42: #{tpu_custom_call.1} parent=1 // pred_check
      _
    $region43: #{tpu_custom_call.1} parent=1 // pred_check_branch
      %129 = sbr.rel (0) target = $region45
    $region44: #{tpu_custom_call.1} parent=1 // pred_region
      _
    $region45: #{tpu_custom_call.1} parent=1 // pred_fallthru
      _
    // Predicated region
    $region46: #{tpu_custom_call.1} parent=1 // pred_check
      _
    $region47: #{tpu_custom_call.1} parent=1 // pred_check_branch
      %131 = sbr.rel (0) target = $region49
    $region48: #{tpu_custom_call.1} parent=1 // pred_region
      %133 = dma.done [#allocation3], 4096
    $region49: #{tpu_custom_call.1} parent=1 // pred_fallthru
      _
    // Predicated region
    $region50: #{tpu_custom_call.1} parent=1 // pred_check
      _
    $region51: #{tpu_custom_call.1} parent=1 // pred_check_branch
      %135 = sbr.rel (0) target = $region53
    $region52: #{tpu_custom_call.1} parent=1 // pred_region
      %137 = dma.done [#allocation6], 1024
    $region53: #{tpu_custom_call.1} parent=1 // pred_fallthru
      _
    // Predicated region
    $region54: #{tpu_custom_call.1} parent=1 // pred_check
      _
    $region55: #{tpu_custom_call.1} parent=1 // pred_check_branch
      %139 = sbr.rel (0) target = $region57
    $region56: #{tpu_custom_call.1} parent=1 // pred_region
      %141 = dma.done [#allocation6], 16
    $region57: #{tpu_custom_call.1} parent=1 // pred_fallthru
      _
    // Predicated region
    $region58: #{tpu_custom_call.1} parent=1 // pred_check
      _
    $region59: #{tpu_custom_call.1} parent=1 // pred_check_branch
      %143 = sbr.rel (0) target = $region61
    $region60: #{tpu_custom_call.1} parent=1 // pred_region
      %145 = dma.done [#allocation9], 3072
    $region61: #{tpu_custom_call.1} parent=1 // pred_fallthru
      _
    // Predicated region
    $region62: #{tpu_custom_call.1} parent=1 // pred_check
      _
    $region63: #{tpu_custom_call.1} parent=1 // pred_check_branch
      %147 = sbr.rel (0) target = $region65
    $region64: #{tpu_custom_call.1} parent=1 // pred_region
      %149 = dma.done [#allocation9], 3072
    $region65: #{tpu_custom_call.1} parent=1 // pred_fallthru
      _
    // Predicated region
    $region66: #{tpu_custom_call.1} parent=1 // pred_check
      _
    $region67: #{tpu_custom_call.1} parent=1 // pred_check_branch
      %151 = sbr.rel (0) target = $region69
    $region68: #{tpu_custom_call.1} parent=1 // pred_region
      %153 = dma.done [#allocation12], 48
    $region69: #{tpu_custom_call.1} parent=1 // pred_fallthru
      _
    // Predicated region
    $region70: #{tpu_custom_call.1} parent=1 // pred_check
      _
    $region71: #{tpu_custom_call.1} parent=1 // pred_check_branch
      %155 = sbr.rel (0) target = $region73
    $region72: #{tpu_custom_call.1} parent=1 // pred_region
      %157 = dma.done [#allocation12], 1024
    $region73: #{tpu_custom_call.1} parent=1 // pred_fallthru
      _
    // Predicated region
    $region74: #{tpu_custom_call.1} parent=1 // pred_check
      _
    $region75: #{tpu_custom_call.1} parent=1 // pred_check_branch
      %159 = sbr.rel (0) target = $region77
    $region76: #{tpu_custom_call.1} parent=1 // pred_region
      %161 = dma.done [#allocation15], 1024
    $region77: #{tpu_custom_call.1} parent=1 // pred_fallthru
      _
    %v162 = vld [vmem:[#allocation2] sm:$0xff]
    %v163 = vld [vmem:[#allocation2 + $0x8] sm:$0xff]
    %v164 = vld [vmem:[#allocation2 + $0x10] sm:$0xff]
    %v165 = vld [vmem:[#allocation2 + $0x18] sm:$0xff]
    %v166 = vld [vmem:[#allocation2 + $0x20] sm:$0xff]
    %v167 = vld [vmem:[#allocation2 + $0x28] sm:$0xff]
    %v168 = vld [vmem:[#allocation2 + $0x30] sm:$0xff]
    %v169 = vld [vmem:[#allocation2 + $0x38] sm:$0xff]
    %v170 = vld [vmem:[#allocation2 + $0x40] sm:$0xff]
    %v171 = vld [vmem:[#allocation2 + $0x48] sm:$0xff]
    %v172 = vld [vmem:[#allocation2 + $0x50] sm:$0xff]
    %v173 = vld [vmem:[#allocation2 + $0x58] sm:$0xff]
    %v174 = vld [vmem:[#allocation2 + $0x60] sm:$0xff]
    %v175 = vld [vmem:[#allocation2 + $0x68] sm:$0xff]
    %v176 = vld [vmem:[#allocation2 + $0x70] sm:$0xff]
    %v177 = vld [vmem:[#allocation2 + $0x78] sm:$0xff]
    %v178 = vld [vmem:[#allocation2 + $0x80] sm:$0xff]
    %v179 = vld [vmem:[#allocation2 + $0x88] sm:$0xff]
    %v180 = vld [vmem:[#allocation2 + $0x90] sm:$0xff]
    %v181 = vld [vmem:[#allocation2 + $0x98] sm:$0xff]
    %v182 = vld [vmem:[#allocation2 + $0xa0] sm:$0xff]
    %v183 = vld [vmem:[#allocation2 + $0xa8] sm:$0xff]
    %v184 = vld [vmem:[#allocation2 + $0xb0] sm:$0xff]
    %v185 = vld [vmem:[#allocation2 + $0xb8] sm:$0xff]
    %v186 = vld [vmem:[#allocation2 + $0xc0] sm:$0xff]
    %v187 = vld [vmem:[#allocation2 + $0xc8] sm:$0xff]
    %v188 = vld [vmem:[#allocation2 + $0xd0] sm:$0xff]
    %v189 = vld [vmem:[#allocation2 + $0xd8] sm:$0xff]
    %v190 = vld [vmem:[#allocation2 + $0xe0] sm:$0xff]
    %v191 = vld [vmem:[#allocation2 + $0xe8] sm:$0xff]
    %v192 = vld [vmem:[#allocation2 + $0xf0] sm:$0xff]
    %v193 = vld [vmem:[#allocation2 + $0xf8] sm:$0xff]
    %v194 = vld [vmem:[#allocation5] sm:$0xf]
    %v195 = vld [vmem:[#allocation5 + $0x4] sm:$0xf]
    %v196 = vld [vmem:[#allocation5 + $0x8] sm:$0xf]
    %v197 = vld [vmem:[#allocation5 + $0xc] sm:$0xf]
    %v198 = vld [vmem:[#allocation5 + $0x10] sm:$0xf]
    %v199 = vld [vmem:[#allocation5 + $0x14] sm:$0xf]
    %v200 = vld [vmem:[#allocation5 + $0x18] sm:$0xf]
    %v201 = vld [vmem:[#allocation5 + $0x1c] sm:$0xf]
    %v202 = vld [vmem:[#allocation5 + $0x20] sm:$0xf]
    %v203 = vld [vmem:[#allocation5 + $0x24] sm:$0xf]
    %v204 = vld [vmem:[#allocation5 + $0x28] sm:$0xf]
    %v205 = vld [vmem:[#allocation5 + $0x2c] sm:$0xf]
    %v206 = vld [vmem:[#allocation5 + $0x30] sm:$0xf]
    %v207 = vld [vmem:[#allocation5 + $0x34] sm:$0xf]
    %v208 = vld [vmem:[#allocation5 + $0x38] sm:$0xf]
    %v209 = vld [vmem:[#allocation5 + $0x3c] sm:$0xf]
    %v210 = vpack.c.bf16 %v163, %v162
    %v211 = vpack.c.bf16 %v165, %v164
    %v212 = vpack.c.bf16 %v167, %v166
    %v213 = vpack.c.bf16 %v169, %v168
    %v214 = vpack.c.bf16 %v171, %v170
    %v215 = vpack.c.bf16 %v173, %v172
    %v216 = vpack.c.bf16 %v175, %v174
    %v217 = vpack.c.bf16 %v177, %v176
    %v218 = vpack.c.bf16 %v179, %v178
    %v219 = vpack.c.bf16 %v181, %v180
    %v220 = vpack.c.bf16 %v183, %v182
    %v221 = vpack.c.bf16 %v185, %v184
    %v222 = vpack.c.bf16 %v187, %v186
    %v223 = vpack.c.bf16 %v189, %v188
    %v224 = vpack.c.bf16 %v191, %v190
    %v225 = vpack.c.bf16 %v193, %v192
    %v226 = vld [vmem:[#allocation7] sm:$0x1]
    %v228 = vperm.slane %v226, 0
    %v246 = vunpack.c.l.b16 %v194
    %v247 = vunpack.c.l.b16 %v195
    %v248 = vunpack.c.l.b16 %v196
    %v249 = vunpack.c.l.b16 %v197
    %v250 = vunpack.c.l.b16 %v198
    %v251 = vunpack.c.l.b16 %v199
    %v252 = vunpack.c.l.b16 %v200
    %v253 = vunpack.c.l.b16 %v201
    %v254 = vunpack.c.l.b16 %v202
    %v255 = vunpack.c.l.b16 %v203
    %v256 = vunpack.c.l.b16 %v204
    %v257 = vunpack.c.l.b16 %v205
    %v258 = vunpack.c.l.b16 %v206
    %v259 = vunpack.c.l.b16 %v207
    %v260 = vunpack.c.l.b16 %v208
    %v261 = vunpack.c.l.b16 %v209
    %v262 = vpack.c.b16 %v247, %v246
    %v263 = vpack.c.b16 %v249, %v248
    %v264 = vpack.c.b16 %v251, %v250
    %v265 = vpack.c.b16 %v253, %v252
    %v266 = vpack.c.b16 %v255, %v254
    %v267 = vpack.c.b16 %v257, %v256
    %v268 = vpack.c.b16 %v259, %v258
    %v269 = vpack.c.b16 %v261, %v260
    %278 = vmatpush.bf16.msra.mxu0 %v269
    %279 = vmatpush.bf16.msra.mxu0 %v268
    %280 = vmatpush.bf16.msra.mxu0 %v267
    %281 = vmatpush.bf16.msra.mxu0 %v266
    %282 = vmatpush.bf16.msra.mxu0 %v265
    %283 = vmatpush.bf16.msra.mxu0 %v264
    %284 = vmatpush.bf16.msra.mxu0 %v263
    %285 = vmatpush.bf16.msra.mxu0 %v262
    %286 = vmatmul.bf16.gmra.mxu0 %v210
    %v287 = vpop.f32.mrf.mxu0
    %v288 = vadd.f32 %v228, %v287
    %v289 = vpop.f32.mrf.mxu0
    %v290 = vadd.f32 %v228, %v289
    %291 = vmatmul.bf16.gmra.mxu0 %v211
    %v292 = vpop.f32.mrf.mxu0
    %v293 = vadd.f32 %v228, %v292
    %v294 = vpop.f32.mrf.mxu0
    %v295 = vadd.f32 %v228, %v294
    %296 = vmatmul.bf16.gmra.mxu0 %v212
    %v297 = vpop.f32.mrf.mxu0
    %v298 = vadd.f32 %v228, %v297
    %v299 = vpop.f32.mrf.mxu0
    %v300 = vadd.f32 %v228, %v299
    %301 = vmatmul.bf16.gmra.mxu0 %v213
    %v302 = vpop.f32.mrf.mxu0
    %v303 = vadd.f32 %v228, %v302
    %v304 = vpop.f32.mrf.mxu0
    %v305 = vadd.f32 %v228, %v304
    %306 = vmatmul.bf16.gmra.mxu0 %v214
    %v307 = vpop.f32.mrf.mxu0
    %v308 = vadd.f32 %v228, %v307
    %v309 = vpop.f32.mrf.mxu0
    %v310 = vadd.f32 %v228, %v309
    %311 = vmatmul.bf16.gmra.mxu0 %v215
    %v312 = vpop.f32.mrf.mxu0
    %v313 = vadd.f32 %v228, %v312
    %v314 = vpop.f32.mrf.mxu0
    %v315 = vadd.f32 %v228, %v314
    %316 = vmatmul.bf16.gmra.mxu0 %v216
    %v317 = vpop.f32.mrf.mxu0
    %v318 = vadd.f32 %v228, %v317
    %v319 = vpop.f32.mrf.mxu0
    %v320 = vadd.f32 %v228, %v319
    %321 = vmatmul.bf16.gmra.mxu0 %v217
    %v322 = vpop.f32.mrf.mxu0
    %v323 = vadd.f32 %v228, %v322
    %v324 = vpop.f32.mrf.mxu0
    %v325 = vadd.f32 %v228, %v324
    %326 = vmatmul.bf16.gmra.mxu0 %v218
    %v327 = vpop.f32.mrf.mxu0
    %v328 = vadd.f32 %v228, %v327
    %v329 = vpop.f32.mrf.mxu0
    %v330 = vadd.f32 %v228, %v329
    %331 = vmatmul.bf16.gmra.mxu0 %v219
    %v332 = vpop.f32.mrf.mxu0
    %v333 = vadd.f32 %v228, %v332
    %v334 = vpop.f32.mrf.mxu0
    %v335 = vadd.f32 %v228, %v334
    %336 = vmatmul.bf16.gmra.mxu0 %v220
    %v337 = vpop.f32.mrf.mxu0
    %v338 = vadd.f32 %v228, %v337
    %v339 = vpop.f32.mrf.mxu0
    %v340 = vadd.f32 %v228, %v339
    %341 = vmatmul.bf16.gmra.mxu0 %v221
    %v342 = vpop.f32.mrf.mxu0
    %v343 = vadd.f32 %v228, %v342
    %v344 = vpop.f32.mrf.mxu0
    %v345 = vadd.f32 %v228, %v344
    %346 = vmatmul.bf16.gmra.mxu0 %v222
    %v347 = vpop.f32.mrf.mxu0
    %v348 = vadd.f32 %v228, %v347
    %v349 = vpop.f32.mrf.mxu0
    %v350 = vadd.f32 %v228, %v349
    %351 = vmatmul.bf16.gmra.mxu0 %v223
    %v352 = vpop.f32.mrf.mxu0
    %v353 = vadd.f32 %v228, %v352
    %v354 = vpop.f32.mrf.mxu0
    %v355 = vadd.f32 %v228, %v354
    %356 = vmatmul.bf16.gmra.mxu0 %v224
    %v357 = vpop.f32.mrf.mxu0
    %v358 = vadd.f32 %v228, %v357
    %v359 = vpop.f32.mrf.mxu0
    %v360 = vadd.f32 %v228, %v359
    %361 = vmatmul.bf16.gmra.mxu0 %v225
    %v362 = vpop.f32.mrf.mxu0
    %v363 = vadd.f32 %v228, %v362
    %v364 = vpop.f32.mrf.mxu0
    %v365 = vadd.f32 %v228, %v364
    %366 = vdwg.mxu0
    %vm367 = vcmp.gt.f32.partialorder %v288, 0.0
    %vm368 = vcmp.gt.f32.partialorder %v290, 0.0
    %vm369 = vcmp.gt.f32.partialorder %v293, 0.0
    %vm370 = vcmp.gt.f32.partialorder %v295, 0.0
    %vm371 = vcmp.gt.f32.partialorder %v298, 0.0
    %vm372 = vcmp.gt.f32.partialorder %v300, 0.0
    %vm373 = vcmp.gt.f32.partialorder %v303, 0.0
    %vm374 = vcmp.gt.f32.partialorder %v305, 0.0
    %vm375 = vcmp.gt.f32.partialorder %v308, 0.0
    %vm376 = vcmp.gt.f32.partialorder %v310, 0.0
    %vm377 = vcmp.gt.f32.partialorder %v313, 0.0
    %vm378 = vcmp.gt.f32.partialorder %v315, 0.0
    %vm379 = vcmp.gt.f32.partialorder %v318, 0.0
    %vm380 = vcmp.gt.f32.partialorder %v320, 0.0
    %vm381 = vcmp.gt.f32.partialorder %v323, 0.0
    %vm382 = vcmp.gt.f32.partialorder %v325, 0.0
    %vm383 = vcmp.gt.f32.partialorder %v328, 0.0
    %vm384 = vcmp.gt.f32.partialorder %v330, 0.0
    %vm385 = vcmp.gt.f32.partialorder %v333, 0.0
    %vm386 = vcmp.gt.f32.partialorder %v335, 0.0
    %vm387 = vcmp.gt.f32.partialorder %v338, 0.0
    %vm388 = vcmp.gt.f32.partialorder %v340, 0.0
    %vm389 = vcmp.gt.f32.partialorder %v343, 0.0
    %vm390 = vcmp.gt.f32.partialorder %v345, 0.0
    %vm391 = vcmp.gt.f32.partialorder %v348, 0.0
    %vm392 = vcmp.gt.f32.partialorder %v350, 0.0
    %vm393 = vcmp.gt.f32.partialorder %v353, 0.0
    %vm394 = vcmp.gt.f32.partialorder %v355, 0.0
    %vm395 = vcmp.gt.f32.partialorder %v358, 0.0
    %vm396 = vcmp.gt.f32.partialorder %v360, 0.0
    %vm397 = vcmp.gt.f32.partialorder %v363, 0.0
    %vm398 = vcmp.gt.f32.partialorder %v365, 0.0
    %v399 = vmul.f32 %v288, 0.1
    %v400 = vmul.f32 %v290, 0.1
    %v401 = vmul.f32 %v293, 0.1
    %v402 = vmul.f32 %v295, 0.1
    %v403 = vmul.f32 %v298, 0.1
    %v404 = vmul.f32 %v300, 0.1
    %v405 = vmul.f32 %v303, 0.1
    %v406 = vmul.f32 %v305, 0.1
    %v407 = vmul.f32 %v308, 0.1
    %v408 = vmul.f32 %v310, 0.1
    %v409 = vmul.f32 %v313, 0.1
    %v410 = vmul.f32 %v315, 0.1
    %v411 = vmul.f32 %v318, 0.1
    %v412 = vmul.f32 %v320, 0.1
    %v413 = vmul.f32 %v323, 0.1
    %v414 = vmul.f32 %v325, 0.1
    %v415 = vmul.f32 %v328, 0.1
    %v416 = vmul.f32 %v330, 0.1
    %v417 = vmul.f32 %v333, 0.1
    %v418 = vmul.f32 %v335, 0.1
    %v419 = vmul.f32 %v338, 0.1
    %v420 = vmul.f32 %v340, 0.1
    %v421 = vmul.f32 %v343, 0.1
    %v422 = vmul.f32 %v345, 0.1
    %v423 = vmul.f32 %v348, 0.1
    %v424 = vmul.f32 %v350, 0.1
    %v425 = vmul.f32 %v353, 0.1
    %v426 = vmul.f32 %v355, 0.1
    %v427 = vmul.f32 %v358, 0.1
    %v428 = vmul.f32 %v360, 0.1
    %v429 = vmul.f32 %v363, 0.1
    %v430 = vmul.f32 %v365, 0.1
    %v431 = vsel %vm367, %v288, %v399
    %v432 = vsel %vm368, %v290, %v400
    %v433 = vsel %vm369, %v293, %v401
    %v434 = vsel %vm370, %v295, %v402
    %v435 = vsel %vm371, %v298, %v403
    %v436 = vsel %vm372, %v300, %v404
    %v437 = vsel %vm373, %v303, %v405
    %v438 = vsel %vm374, %v305, %v406
    %v439 = vsel %vm375, %v308, %v407
    %v440 = vsel %vm376, %v310, %v408
    %v441 = vsel %vm377, %v313, %v409
    %v442 = vsel %vm378, %v315, %v410
    %v443 = vsel %vm379, %v318, %v411
    %v444 = vsel %vm380, %v320, %v412
    %v445 = vsel %vm381, %v323, %v413
    %v446 = vsel %vm382, %v325, %v414
    %v447 = vsel %vm383, %v328, %v415
    %v448 = vsel %vm384, %v330, %v416
    %v449 = vsel %vm385, %v333, %v417
    %v450 = vsel %vm386, %v335, %v418
    %v451 = vsel %vm387, %v338, %v419
    %v452 = vsel %vm388, %v340, %v420
    %v453 = vsel %vm389, %v343, %v421
    %v454 = vsel %vm390, %v345, %v422
    %v455 = vsel %vm391, %v348, %v423
    %v456 = vsel %vm392, %v350, %v424
    %v457 = vsel %vm393, %v353, %v425
    %v458 = vsel %vm394, %v355, %v426
    %v459 = vsel %vm395, %v358, %v427
    %v460 = vsel %vm396, %v360, %v428
    %v461 = vsel %vm397, %v363, %v429
    %v462 = vsel %vm398, %v365, %v430
    %v463 = vld [vmem:[#allocation8] sm:$0xf]
    %v464 = vld [vmem:[#allocation8 + $0x4] sm:$0xf]
    %v465 = vld [vmem:[#allocation8 + $0x8] sm:$0xf]
    %v466 = vld [vmem:[#allocation8 + $0xc] sm:$0xf]
    %v467 = vld [vmem:[#allocation8 + $0x10] sm:$0xf]
    %v468 = vld [vmem:[#allocation8 + $0x14] sm:$0xf]
    %v469 = vld [vmem:[#allocation8 + $0x18] sm:$0xf]
    %v470 = vld [vmem:[#allocation8 + $0x1c] sm:$0xf]
    %v471 = vld [vmem:[#allocation8 + $0x20] sm:$0xf]
    %v472 = vld [vmem:[#allocation8 + $0x24] sm:$0xf]
    %v473 = vld [vmem:[#allocation8 + $0x28] sm:$0xf]
    %v474 = vld [vmem:[#allocation8 + $0x2c] sm:$0xf]
    %v475 = vld [vmem:[#allocation8 + $0x30] sm:$0xf]
    %v476 = vld [vmem:[#allocation8 + $0x34] sm:$0xf]
    %v477 = vld [vmem:[#allocation8 + $0x38] sm:$0xf]
    %v478 = vld [vmem:[#allocation8 + $0x3c] sm:$0xf]
    %v479 = vpack.c.bf16 %v432, %v431
    %v480 = vpack.c.bf16 %v434, %v433
    %v481 = vpack.c.bf16 %v436, %v435
    %v482 = vpack.c.bf16 %v438, %v437
    %v483 = vpack.c.bf16 %v440, %v439
    %v484 = vpack.c.bf16 %v442, %v441
    %v485 = vpack.c.bf16 %v444, %v443
    %v486 = vpack.c.bf16 %v446, %v445
    %v487 = vpack.c.bf16 %v448, %v447
    %v488 = vpack.c.bf16 %v450, %v449
    %v489 = vpack.c.bf16 %v452, %v451
    %v490 = vpack.c.bf16 %v454, %v453
    %v491 = vpack.c.bf16 %v456, %v455
    %v492 = vpack.c.bf16 %v458, %v457
    %v493 = vpack.c.bf16 %v460, %v459
    %v494 = vpack.c.bf16 %v462, %v461
    %v495 = vld [vmem:[%s4] sm:$0x1]
    %v497 = vperm.slane %v495, 0
    %v515 = vunpack.c.l.b16 %v463
    %v516 = vunpack.c.l.b16 %v464
    %v517 = vunpack.c.l.b16 %v465
    %v518 = vunpack.c.l.b16 %v466
    %v519 = vunpack.c.l.b16 %v467
    %v520 = vunpack.c.l.b16 %v468
    %v521 = vunpack.c.l.b16 %v469
    %v522 = vunpack.c.l.b16 %v470
    %v523 = vunpack.c.l.b16 %v471
    %v524 = vunpack.c.l.b16 %v472
    %v525 = vunpack.c.l.b16 %v473
    %v526 = vunpack.c.l.b16 %v474
    %v527 = vunpack.c.l.b16 %v475
    %v528 = vunpack.c.l.b16 %v476
    %v529 = vunpack.c.l.b16 %v477
    %v530 = vunpack.c.l.b16 %v478
    %v531 = vpack.c.b16 %v516, %v515
    %v532 = vpack.c.b16 %v518, %v517
    %v533 = vpack.c.b16 %v520, %v519
    %v534 = vpack.c.b16 %v522, %v521
    %v535 = vpack.c.b16 %v524, %v523
    %v536 = vpack.c.b16 %v526, %v525
    %v537 = vpack.c.b16 %v528, %v527
    %v538 = vpack.c.b16 %v530, %v529
    %547 = vmatpush.bf16.msra.mxu0 %v538
    %548 = vmatpush.bf16.msra.mxu0 %v537
    %549 = vmatpush.bf16.msra.mxu0 %v536
    %550 = vmatpush.bf16.msra.mxu0 %v535
    %551 = vmatpush.bf16.msra.mxu0 %v534
    %552 = vmatpush.bf16.msra.mxu0 %v533
    %553 = vmatpush.bf16.msra.mxu0 %v532
    %554 = vmatpush.bf16.msra.mxu0 %v531
    %555 = vmatmul.bf16.gmra.mxu0 %v479
    %v556 = vpop.f32.mrf.mxu0
    %v557 = vadd.f32 %v497, %v556
    %v558 = vpop.f32.mrf.mxu0
    %v559 = vadd.f32 %v497, %v558
    %560 = vmatmul.bf16.gmra.mxu0 %v480
    %v561 = vpop.f32.mrf.mxu0
    %v562 = vadd.f32 %v497, %v561
    %v563 = vpop.f32.mrf.mxu0
    %v564 = vadd.f32 %v497, %v563
    %565 = vmatmul.bf16.gmra.mxu0 %v481
    %v566 = vpop.f32.mrf.mxu0
    %v567 = vadd.f32 %v497, %v566
    %v568 = vpop.f32.mrf.mxu0
    %v569 = vadd.f32 %v497, %v568
    %570 = vmatmul.bf16.gmra.mxu0 %v482
    %v571 = vpop.f32.mrf.mxu0
    %v572 = vadd.f32 %v497, %v571
    %v573 = vpop.f32.mrf.mxu0
    %v574 = vadd.f32 %v497, %v573
    %575 = vmatmul.bf16.gmra.mxu0 %v483
    %v576 = vpop.f32.mrf.mxu0
    %v577 = vadd.f32 %v497, %v576
    %v578 = vpop.f32.mrf.mxu0
    %v579 = vadd.f32 %v497, %v578
    %580 = vmatmul.bf16.gmra.mxu0 %v484
    %v581 = vpop.f32.mrf.mxu0
    %v582 = vadd.f32 %v497, %v581
    %v583 = vpop.f32.mrf.mxu0
    %v584 = vadd.f32 %v497, %v583
    %585 = vmatmul.bf16.gmra.mxu0 %v485
    %v586 = vpop.f32.mrf.mxu0
    %v587 = vadd.f32 %v497, %v586
    %v588 = vpop.f32.mrf.mxu0
    %v589 = vadd.f32 %v497, %v588
    %590 = vmatmul.bf16.gmra.mxu0 %v486
    %v591 = vpop.f32.mrf.mxu0
    %v592 = vadd.f32 %v497, %v591
    %v593 = vpop.f32.mrf.mxu0
    %v594 = vadd.f32 %v497, %v593
    %595 = vmatmul.bf16.gmra.mxu0 %v487
    %v596 = vpop.f32.mrf.mxu0
    %v597 = vadd.f32 %v497, %v596
    %v598 = vpop.f32.mrf.mxu0
    %v599 = vadd.f32 %v497, %v598
    %600 = vmatmul.bf16.gmra.mxu0 %v488
    %v601 = vpop.f32.mrf.mxu0
    %v602 = vadd.f32 %v497, %v601
    %v603 = vpop.f32.mrf.mxu0
    %v604 = vadd.f32 %v497, %v603
    %605 = vmatmul.bf16.gmra.mxu0 %v489
    %v606 = vpop.f32.mrf.mxu0
    %v607 = vadd.f32 %v497, %v606
    %v608 = vpop.f32.mrf.mxu0
    %v609 = vadd.f32 %v497, %v608
    %610 = vmatmul.bf16.gmra.mxu0 %v490
    %v611 = vpop.f32.mrf.mxu0
    %v612 = vadd.f32 %v497, %v611
    %v613 = vpop.f32.mrf.mxu0
    %v614 = vadd.f32 %v497, %v613
    %615 = vmatmul.bf16.gmra.mxu0 %v491
    %v616 = vpop.f32.mrf.mxu0
    %v617 = vadd.f32 %v497, %v616
    %v618 = vpop.f32.mrf.mxu0
    %v619 = vadd.f32 %v497, %v618
    %620 = vmatmul.bf16.gmra.mxu0 %v492
    %v621 = vpop.f32.mrf.mxu0
    %v622 = vadd.f32 %v497, %v621
    %v623 = vpop.f32.mrf.mxu0
    %v624 = vadd.f32 %v497, %v623
    %625 = vmatmul.bf16.gmra.mxu0 %v493
    %v626 = vpop.f32.mrf.mxu0
    %v627 = vadd.f32 %v497, %v626
    %v628 = vpop.f32.mrf.mxu0
    %v629 = vadd.f32 %v497, %v628
    %630 = vmatmul.bf16.gmra.mxu0 %v494
    %v631 = vpop.f32.mrf.mxu0
    %v632 = vadd.f32 %v497, %v631
    %v633 = vpop.f32.mrf.mxu0
    %v634 = vadd.f32 %v497, %v633
    %635 = vdwg.mxu0
    %vm636 = vcmp.gt.f32.partialorder %v557, 0.0
    %vm637 = vcmp.gt.f32.partialorder %v559, 0.0
    %vm638 = vcmp.gt.f32.partialorder %v562, 0.0
    %vm639 = vcmp.gt.f32.partialorder %v564, 0.0
    %vm640 = vcmp.gt.f32.partialorder %v567, 0.0
    %vm641 = vcmp.gt.f32.partialorder %v569, 0.0
    %vm642 = vcmp.gt.f32.partialorder %v572, 0.0
    %vm643 = vcmp.gt.f32.partialorder %v574, 0.0
    %vm644 = vcmp.gt.f32.partialorder %v577, 0.0
    %vm645 = vcmp.gt.f32.partialorder %v579, 0.0
    %vm646 = vcmp.gt.f32.partialorder %v582, 0.0
    %vm647 = vcmp.gt.f32.partialorder %v584, 0.0
    %vm648 = vcmp.gt.f32.partialorder %v587, 0.0
    %vm649 = vcmp.gt.f32.partialorder %v589, 0.0
    %vm650 = vcmp.gt.f32.partialorder %v592, 0.0
    %vm651 = vcmp.gt.f32.partialorder %v594, 0.0
    %vm652 = vcmp.gt.f32.partialorder %v597, 0.0
    %vm653 = vcmp.gt.f32.partialorder %v599, 0.0
    %vm654 = vcmp.gt.f32.partialorder %v602, 0.0
    %vm655 = vcmp.gt.f32.partialorder %v604, 0.0
    %vm656 = vcmp.gt.f32.partialorder %v607, 0.0
    %vm657 = vcmp.gt.f32.partialorder %v609, 0.0
    %vm658 = vcmp.gt.f32.partialorder %v612, 0.0
    %vm659 = vcmp.gt.f32.partialorder %v614, 0.0
    %vm660 = vcmp.gt.f32.partialorder %v617, 0.0
    %vm661 = vcmp.gt.f32.partialorder %v619, 0.0
    %vm662 = vcmp.gt.f32.partialorder %v622, 0.0
    %vm663 = vcmp.gt.f32.partialorder %v624, 0.0
    %vm664 = vcmp.gt.f32.partialorder %v627, 0.0
    %vm665 = vcmp.gt.f32.partialorder %v629, 0.0
    %vm666 = vcmp.gt.f32.partialorder %v632, 0.0
    %vm667 = vcmp.gt.f32.partialorder %v634, 0.0
    %v668 = vmul.f32 %v557, 0.1
    %v669 = vmul.f32 %v559, 0.1
    %v670 = vmul.f32 %v562, 0.1
    %v671 = vmul.f32 %v564, 0.1
    %v672 = vmul.f32 %v567, 0.1
    %v673 = vmul.f32 %v569, 0.1
    %v674 = vmul.f32 %v572, 0.1
    %v675 = vmul.f32 %v574, 0.1
    %v676 = vmul.f32 %v577, 0.1
    %v677 = vmul.f32 %v579, 0.1
    %v678 = vmul.f32 %v582, 0.1
    %v679 = vmul.f32 %v584, 0.1
    %v680 = vmul.f32 %v587, 0.1
    %v681 = vmul.f32 %v589, 0.1
    %v682 = vmul.f32 %v592, 0.1
    %v683 = vmul.f32 %v594, 0.1
    %v684 = vmul.f32 %v597, 0.1
    %v685 = vmul.f32 %v599, 0.1
    %v686 = vmul.f32 %v602, 0.1
    %v687 = vmul.f32 %v604, 0.1
    %v688 = vmul.f32 %v607, 0.1
    %v689 = vmul.f32 %v609, 0.1
    %v690 = vmul.f32 %v612, 0.1
    %v691 = vmul.f32 %v614, 0.1
    %v692 = vmul.f32 %v617, 0.1
    %v693 = vmul.f32 %v619, 0.1
    %v694 = vmul.f32 %v622, 0.1
    %v695 = vmul.f32 %v624, 0.1
    %v696 = vmul.f32 %v627, 0.1
    %v697 = vmul.f32 %v629, 0.1
    %v698 = vmul.f32 %v632, 0.1
    %v699 = vmul.f32 %v634, 0.1
    %v700 = vsel %vm636, %v557, %v668
    %v701 = vsel %vm637, %v559, %v669
    %v702 = vsel %vm638, %v562, %v670
    %v703 = vsel %vm639, %v564, %v671
    %v704 = vsel %vm640, %v567, %v672
    %v705 = vsel %vm641, %v569, %v673
    %v706 = vsel %vm642, %v572, %v674
    %v707 = vsel %vm643, %v574, %v675
    %v708 = vsel %vm644, %v577, %v676
    %v709 = vsel %vm645, %v579, %v677
    %v710 = vsel %vm646, %v582, %v678
    %v711 = vsel %vm647, %v584, %v679
    %v712 = vsel %vm648, %v587, %v680
    %v713 = vsel %vm649, %v589, %v681
    %v714 = vsel %vm650, %v592, %v682
    %v715 = vsel %vm651, %v594, %v683
    %v716 = vsel %vm652, %v597, %v684
    %v717 = vsel %vm653, %v599, %v685
    %v718 = vsel %vm654, %v602, %v686
    %v719 = vsel %vm655, %v604, %v687
    %v720 = vsel %vm656, %v607, %v688
    %v721 = vsel %vm657, %v609, %v689
    %v722 = vsel %vm658, %v612, %v690
    %v723 = vsel %vm659, %v614, %v691
    %v724 = vsel %vm660, %v617, %v692
    %v725 = vsel %vm661, %v619, %v693
    %v726 = vsel %vm662, %v622, %v694
    %v727 = vsel %vm663, %v624, %v695
    %v728 = vsel %vm664, %v627, %v696
    %v729 = vsel %vm665, %v629, %v697
    %v730 = vsel %vm666, %v632, %v698
    %v731 = vsel %vm667, %v634, %v699
    %v732 = vld [vmem:[#allocation10] sm:$0xf]
    %v733 = vld [vmem:[#allocation10 + $0x4] sm:$0xf]
    %v734 = vld [vmem:[#allocation10 + $0x8] sm:$0xf]
    %v735 = vld [vmem:[#allocation10 + $0xc] sm:$0xf]
    %v736 = vld [vmem:[#allocation10 + $0x10] sm:$0xf]
    %v737 = vld [vmem:[#allocation10 + $0x14] sm:$0xf]
    %v738 = vld [vmem:[#allocation10 + $0x18] sm:$0xf]
    %v739 = vld [vmem:[#allocation10 + $0x1c] sm:$0xf]
    %v740 = vld [vmem:[#allocation10 + $0x20] sm:$0xf]
    %v741 = vld [vmem:[#allocation10 + $0x24] sm:$0xf]
    %v742 = vld [vmem:[#allocation10 + $0x28] sm:$0xf]
    %v743 = vld [vmem:[#allocation10 + $0x2c] sm:$0xf]
    %v744 = vld [vmem:[#allocation10 + $0x30] sm:$0xf]
    %v745 = vld [vmem:[#allocation10 + $0x34] sm:$0xf]
    %v746 = vld [vmem:[#allocation10 + $0x38] sm:$0xf]
    %v747 = vld [vmem:[#allocation10 + $0x3c] sm:$0xf]
    %v748 = vpack.c.bf16 %v701, %v700
    %v749 = vpack.c.bf16 %v703, %v702
    %v750 = vpack.c.bf16 %v705, %v704
    %v751 = vpack.c.bf16 %v707, %v706
    %v752 = vpack.c.bf16 %v709, %v708
    %v753 = vpack.c.bf16 %v711, %v710
    %v754 = vpack.c.bf16 %v713, %v712
    %v755 = vpack.c.bf16 %v715, %v714
    %v756 = vpack.c.bf16 %v717, %v716
    %v757 = vpack.c.bf16 %v719, %v718
    %v758 = vpack.c.bf16 %v721, %v720
    %v759 = vpack.c.bf16 %v723, %v722
    %v760 = vpack.c.bf16 %v725, %v724
    %v761 = vpack.c.bf16 %v727, %v726
    %v762 = vpack.c.bf16 %v729, %v728
    %v763 = vpack.c.bf16 %v731, %v730
    %v764 = vld [vmem:[#allocation11] sm:$0x1]
    %v766 = vperm.slane %v764, 0
    %v784 = vunpack.c.l.b16 %v732
    %v785 = vunpack.c.l.b16 %v733
    %v786 = vunpack.c.l.b16 %v734
    %v787 = vunpack.c.l.b16 %v735
    %v788 = vunpack.c.l.b16 %v736
    %v789 = vunpack.c.l.b16 %v737
    %v790 = vunpack.c.l.b16 %v738
    %v791 = vunpack.c.l.b16 %v739
    %v792 = vunpack.c.l.b16 %v740
    %v793 = vunpack.c.l.b16 %v741
    %v794 = vunpack.c.l.b16 %v742
    %v795 = vunpack.c.l.b16 %v743
    %v796 = vunpack.c.l.b16 %v744
    %v797 = vunpack.c.l.b16 %v745
    %v798 = vunpack.c.l.b16 %v746
    %v799 = vunpack.c.l.b16 %v747
    %v800 = vpack.c.b16 %v785, %v784
    %v801 = vpack.c.b16 %v787, %v786
    %v802 = vpack.c.b16 %v789, %v788
    %v803 = vpack.c.b16 %v791, %v790
    %v804 = vpack.c.b16 %v793, %v792
    %v805 = vpack.c.b16 %v795, %v794
    %v806 = vpack.c.b16 %v797, %v796
    %v807 = vpack.c.b16 %v799, %v798
    %816 = vmatpush.bf16.msra.mxu0 %v807
    %817 = vmatpush.bf16.msra.mxu0 %v806
    %818 = vmatpush.bf16.msra.mxu0 %v805
    %819 = vmatpush.bf16.msra.mxu0 %v804
    %820 = vmatpush.bf16.msra.mxu0 %v803
    %821 = vmatpush.bf16.msra.mxu0 %v802
    %822 = vmatpush.bf16.msra.mxu0 %v801
    %823 = vmatpush.bf16.msra.mxu0 %v800
    %824 = vmatmul.bf16.gmra.mxu0 %v748
    %v825 = vpop.f32.mrf.mxu0
    %v826 = vadd.f32 %v766, %v825
    %v827 = vpop.f32.mrf.mxu0
    %v828 = vadd.f32 %v766, %v827
    %829 = vmatmul.bf16.gmra.mxu0 %v749
    %v830 = vpop.f32.mrf.mxu0
    %v831 = vadd.f32 %v766, %v830
    %v832 = vpop.f32.mrf.mxu0
    %v833 = vadd.f32 %v766, %v832
    %834 = vmatmul.bf16.gmra.mxu0 %v750
    %v835 = vpop.f32.mrf.mxu0
    %v836 = vadd.f32 %v766, %v835
    %v837 = vpop.f32.mrf.mxu0
    %v838 = vadd.f32 %v766, %v837
    %839 = vmatmul.bf16.gmra.mxu0 %v751
    %v840 = vpop.f32.mrf.mxu0
    %v841 = vadd.f32 %v766, %v840
    %v842 = vpop.f32.mrf.mxu0
    %v843 = vadd.f32 %v766, %v842
    %844 = vmatmul.bf16.gmra.mxu0 %v752
    %v845 = vpop.f32.mrf.mxu0
    %v846 = vadd.f32 %v766, %v845
    %v847 = vpop.f32.mrf.mxu0
    %v848 = vadd.f32 %v766, %v847
    %849 = vmatmul.bf16.gmra.mxu0 %v753
    %v850 = vpop.f32.mrf.mxu0
    %v851 = vadd.f32 %v766, %v850
    %v852 = vpop.f32.mrf.mxu0
    %v853 = vadd.f32 %v766, %v852
    %854 = vmatmul.bf16.gmra.mxu0 %v754
    %v855 = vpop.f32.mrf.mxu0
    %v856 = vadd.f32 %v766, %v855
    %v857 = vpop.f32.mrf.mxu0
    %v858 = vadd.f32 %v766, %v857
    %859 = vmatmul.bf16.gmra.mxu0 %v755
    %v860 = vpop.f32.mrf.mxu0
    %v861 = vadd.f32 %v766, %v860
    %v862 = vpop.f32.mrf.mxu0
    %v863 = vadd.f32 %v766, %v862
    %864 = vmatmul.bf16.gmra.mxu0 %v756
    %v865 = vpop.f32.mrf.mxu0
    %v866 = vadd.f32 %v766, %v865
    %v867 = vpop.f32.mrf.mxu0
    %v868 = vadd.f32 %v766, %v867
    %869 = vmatmul.bf16.gmra.mxu0 %v757
    %v870 = vpop.f32.mrf.mxu0
    %v871 = vadd.f32 %v766, %v870
    %v872 = vpop.f32.mrf.mxu0
    %v873 = vadd.f32 %v766, %v872
    %874 = vmatmul.bf16.gmra.mxu0 %v758
    %v875 = vpop.f32.mrf.mxu0
    %v876 = vadd.f32 %v766, %v875
    %v877 = vpop.f32.mrf.mxu0
    %v878 = vadd.f32 %v766, %v877
    %879 = vmatmul.bf16.gmra.mxu0 %v759
    %v880 = vpop.f32.mrf.mxu0
    %v881 = vadd.f32 %v766, %v880
    %v882 = vpop.f32.mrf.mxu0
    %v883 = vadd.f32 %v766, %v882
    %884 = vmatmul.bf16.gmra.mxu0 %v760
    %v885 = vpop.f32.mrf.mxu0
    %v886 = vadd.f32 %v766, %v885
    %v887 = vpop.f32.mrf.mxu0
    %v888 = vadd.f32 %v766, %v887
    %889 = vmatmul.bf16.gmra.mxu0 %v761
    %v890 = vpop.f32.mrf.mxu0
    %v891 = vadd.f32 %v766, %v890
    %v892 = vpop.f32.mrf.mxu0
    %v893 = vadd.f32 %v766, %v892
    %894 = vmatmul.bf16.gmra.mxu0 %v762
    %v895 = vpop.f32.mrf.mxu0
    %v896 = vadd.f32 %v766, %v895
    %v897 = vpop.f32.mrf.mxu0
    %v898 = vadd.f32 %v766, %v897
    %899 = vmatmul.bf16.gmra.mxu0 %v763
    %v900 = vpop.f32.mrf.mxu0
    %v901 = vadd.f32 %v766, %v900
    %v902 = vpop.f32.mrf.mxu0
    %v903 = vadd.f32 %v766, %v902
    %904 = vdwg.mxu0
    %v905 = vadd.f32 %v826, %v431
    %v906 = vadd.f32 %v828, %v432
    %v907 = vadd.f32 %v831, %v433
    %v908 = vadd.f32 %v833, %v434
    %v909 = vadd.f32 %v836, %v435
    %v910 = vadd.f32 %v838, %v436
    %v911 = vadd.f32 %v841, %v437
    %v912 = vadd.f32 %v843, %v438
    %v913 = vadd.f32 %v846, %v439
    %v914 = vadd.f32 %v848, %v440
    %v915 = vadd.f32 %v851, %v441
    %v916 = vadd.f32 %v853, %v442
    %v917 = vadd.f32 %v856, %v443
    %v918 = vadd.f32 %v858, %v444
    %v919 = vadd.f32 %v861, %v445
    %v920 = vadd.f32 %v863, %v446
    %v921 = vadd.f32 %v866, %v447
    %v922 = vadd.f32 %v868, %v448
    %v923 = vadd.f32 %v871, %v449
    %v924 = vadd.f32 %v873, %v450
    %v925 = vadd.f32 %v876, %v451
    %v926 = vadd.f32 %v878, %v452
    %v927 = vadd.f32 %v881, %v453
    %v928 = vadd.f32 %v883, %v454
    %v929 = vadd.f32 %v886, %v455
    %v930 = vadd.f32 %v888, %v456
    %v931 = vadd.f32 %v891, %v457
    %v932 = vadd.f32 %v893, %v458
    %v933 = vadd.f32 %v896, %v459
    %v934 = vadd.f32 %v898, %v460
    %v935 = vadd.f32 %v901, %v461
    %v936 = vadd.f32 %v903, %v462
    %vm937 = vcmp.gt.f32.partialorder %v905, 0.0
    %vm938 = vcmp.gt.f32.partialorder %v906, 0.0
    %vm939 = vcmp.gt.f32.partialorder %v907, 0.0
    %vm940 = vcmp.gt.f32.partialorder %v908, 0.0
    %vm941 = vcmp.gt.f32.partialorder %v909, 0.0
    %vm942 = vcmp.gt.f32.partialorder %v910, 0.0
    %vm943 = vcmp.gt.f32.partialorder %v911, 0.0
    %vm944 = vcmp.gt.f32.partialorder %v912, 0.0
    %vm945 = vcmp.gt.f32.partialorder %v913, 0.0
    %vm946 = vcmp.gt.f32.partialorder %v914, 0.0
    %vm947 = vcmp.gt.f32.partialorder %v915, 0.0
    %vm948 = vcmp.gt.f32.partialorder %v916, 0.0
    %vm949 = vcmp.gt.f32.partialorder %v917, 0.0
    %vm950 = vcmp.gt.f32.partialorder %v918, 0.0
    %vm951 = vcmp.gt.f32.partialorder %v919, 0.0
    %vm952 = vcmp.gt.f32.partialorder %v920, 0.0
    %vm953 = vcmp.gt.f32.partialorder %v921, 0.0
    %vm954 = vcmp.gt.f32.partialorder %v922, 0.0
    %vm955 = vcmp.gt.f32.partialorder %v923, 0.0
    %vm956 = vcmp.gt.f32.partialorder %v924, 0.0
    %vm957 = vcmp.gt.f32.partialorder %v925, 0.0
    %vm958 = vcmp.gt.f32.partialorder %v926, 0.0
    %vm959 = vcmp.gt.f32.partialorder %v927, 0.0
    %vm960 = vcmp.gt.f32.partialorder %v928, 0.0
    %vm961 = vcmp.gt.f32.partialorder %v929, 0.0
    %vm962 = vcmp.gt.f32.partialorder %v930, 0.0
    %vm963 = vcmp.gt.f32.partialorder %v931, 0.0
    %vm964 = vcmp.gt.f32.partialorder %v932, 0.0
    %vm965 = vcmp.gt.f32.partialorder %v933, 0.0
    %vm966 = vcmp.gt.f32.partialorder %v934, 0.0
    %vm967 = vcmp.gt.f32.partialorder %v935, 0.0
    %vm968 = vcmp.gt.f32.partialorder %v936, 0.0
    %v969 = vmul.f32 %v905, 0.1
    %v970 = vmul.f32 %v906, 0.1
    %v971 = vmul.f32 %v907, 0.1
    %v972 = vmul.f32 %v908, 0.1
    %v973 = vmul.f32 %v909, 0.1
    %v974 = vmul.f32 %v910, 0.1
    %v975 = vmul.f32 %v911, 0.1
    %v976 = vmul.f32 %v912, 0.1
    %v977 = vmul.f32 %v913, 0.1
    %v978 = vmul.f32 %v914, 0.1
    %v979 = vmul.f32 %v915, 0.1
    %v980 = vmul.f32 %v916, 0.1
    %v981 = vmul.f32 %v917, 0.1
    %v982 = vmul.f32 %v918, 0.1
    %v983 = vmul.f32 %v919, 0.1
    %v984 = vmul.f32 %v920, 0.1
    %v985 = vmul.f32 %v921, 0.1
    %v986 = vmul.f32 %v922, 0.1
    %v987 = vmul.f32 %v923, 0.1
    %v988 = vmul.f32 %v924, 0.1
    %v989 = vmul.f32 %v925, 0.1
    %v990 = vmul.f32 %v926, 0.1
    %v991 = vmul.f32 %v927, 0.1
    %v992 = vmul.f32 %v928, 0.1
    %v993 = vmul.f32 %v929, 0.1
    %v994 = vmul.f32 %v930, 0.1
    %v995 = vmul.f32 %v931, 0.1
    %v996 = vmul.f32 %v932, 0.1
    %v997 = vmul.f32 %v933, 0.1
    %v998 = vmul.f32 %v934, 0.1
    %v999 = vmul.f32 %v935, 0.1
    %v1000 = vmul.f32 %v936, 0.1
    %v1001 = vsel %vm937, %v905, %v969
    %v1002 = vsel %vm938, %v906, %v970
    %v1003 = vsel %vm939, %v907, %v971
    %v1004 = vsel %vm940, %v908, %v972
    %v1005 = vsel %vm941, %v909, %v973
    %v1006 = vsel %vm942, %v910, %v974
    %v1007 = vsel %vm943, %v911, %v975
    %v1008 = vsel %vm944, %v912, %v976
    %v1009 = vsel %vm945, %v913, %v977
    %v1010 = vsel %vm946, %v914, %v978
    %v1011 = vsel %vm947, %v915, %v979
    %v1012 = vsel %vm948, %v916, %v980
    %v1013 = vsel %vm949, %v917, %v981
    %v1014 = vsel %vm950, %v918, %v982
    %v1015 = vsel %vm951, %v919, %v983
    %v1016 = vsel %vm952, %v920, %v984
    %v1017 = vsel %vm953, %v921, %v985
    %v1018 = vsel %vm954, %v922, %v986
    %v1019 = vsel %vm955, %v923, %v987
    %v1020 = vsel %vm956, %v924, %v988
    %v1021 = vsel %vm957, %v925, %v989
    %v1022 = vsel %vm958, %v926, %v990
    %v1023 = vsel %vm959, %v927, %v991
    %v1024 = vsel %vm960, %v928, %v992
    %v1025 = vsel %vm961, %v929, %v993
    %v1026 = vsel %vm962, %v930, %v994
    %v1027 = vsel %vm963, %v931, %v995
    %v1028 = vsel %vm964, %v932, %v996
    %v1029 = vsel %vm965, %v933, %v997
    %v1030 = vsel %vm966, %v934, %v998
    %v1031 = vsel %vm967, %v935, %v999
    %v1032 = vsel %vm968, %v936, %v1000
    %s1033 = scalar_lea.vmem [#allocation8], 64
    %v1034 = vld [vmem:[%s1033] sm:$0xf]
    %v1035 = vld [vmem:[%s1033 + $0x4] sm:$0xf]
    %v1036 = vld [vmem:[%s1033 + $0x8] sm:$0xf]
    %v1037 = vld [vmem:[%s1033 + $0xc] sm:$0xf]
    %v1038 = vld [vmem:[%s1033 + $0x10] sm:$0xf]
    %v1039 = vld [vmem:[%s1033 + $0x14] sm:$0xf]
    %v1040 = vld [vmem:[%s1033 + $0x18] sm:$0xf]
    %v1041 = vld [vmem:[%s1033 + $0x1c] sm:$0xf]
    %v1042 = vld [vmem:[%s1033 + $0x20] sm:$0xf]
    %v1043 = vld [vmem:[%s1033 + $0x24] sm:$0xf]
    %v1044 = vld [vmem:[%s1033 + $0x28] sm:$0xf]
    %v1045 = vld [vmem:[%s1033 + $0x2c] sm:$0xf]
    %v1046 = vld [vmem:[%s1033 + $0x30] sm:$0xf]
    %v1047 = vld [vmem:[%s1033 + $0x34] sm:$0xf]
    %v1048 = vld [vmem:[%s1033 + $0x38] sm:$0xf]
    %v1049 = vld [vmem:[%s1033 + $0x3c] sm:$0xf]
    %v1050 = vpack.c.bf16 %v1002, %v1001
    %v1051 = vpack.c.bf16 %v1004, %v1003
    %v1052 = vpack.c.bf16 %v1006, %v1005
    %v1053 = vpack.c.bf16 %v1008, %v1007
    %v1054 = vpack.c.bf16 %v1010, %v1009
    %v1055 = vpack.c.bf16 %v1012, %v1011
    %v1056 = vpack.c.bf16 %v1014, %v1013
    %v1057 = vpack.c.bf16 %v1016, %v1015
    %v1058 = vpack.c.bf16 %v1018, %v1017
    %v1059 = vpack.c.bf16 %v1020, %v1019
    %v1060 = vpack.c.bf16 %v1022, %v1021
    %v1061 = vpack.c.bf16 %v1024, %v1023
    %v1062 = vpack.c.bf16 %v1026, %v1025
    %v1063 = vpack.c.bf16 %v1028, %v1027
    %v1064 = vpack.c.bf16 %v1030, %v1029
    %v1065 = vpack.c.bf16 %v1032, %v1031
    %s1066 = scalar_lea.vmem %s4, 1
    %v1067 = vld [vmem:[%s1066] sm:$0x1]
    %v1069 = vperm.slane %v1067, 0
    %v1087 = vunpack.c.l.b16 %v1034
    %v1088 = vunpack.c.l.b16 %v1035
    %v1089 = vunpack.c.l.b16 %v1036
    %v1090 = vunpack.c.l.b16 %v1037
    %v1091 = vunpack.c.l.b16 %v1038
    %v1092 = vunpack.c.l.b16 %v1039
    %v1093 = vunpack.c.l.b16 %v1040
    %v1094 = vunpack.c.l.b16 %v1041
    %v1095 = vunpack.c.l.b16 %v1042
    %v1096 = vunpack.c.l.b16 %v1043
    %v1097 = vunpack.c.l.b16 %v1044
    %v1098 = vunpack.c.l.b16 %v1045
    %v1099 = vunpack.c.l.b16 %v1046
    %v1100 = vunpack.c.l.b16 %v1047
    %v1101 = vunpack.c.l.b16 %v1048
    %v1102 = vunpack.c.l.b16 %v1049
    %v1103 = vpack.c.b16 %v1088, %v1087
    %v1104 = vpack.c.b16 %v1090, %v1089
    %v1105 = vpack.c.b16 %v1092, %v1091
    %v1106 = vpack.c.b16 %v1094, %v1093
    %v1107 = vpack.c.b16 %v1096, %v1095
    %v1108 = vpack.c.b16 %v1098, %v1097
    %v1109 = vpack.c.b16 %v1100, %v1099
    %v1110 = vpack.c.b16 %v1102, %v1101
    %1119 = vmatpush.bf16.msra.mxu0 %v1110
    %1120 = vmatpush.bf16.msra.mxu0 %v1109
    %1121 = vmatpush.bf16.msra.mxu0 %v1108
    %1122 = vmatpush.bf16.msra.mxu0 %v1107
    %1123 = vmatpush.bf16.msra.mxu0 %v1106
    %1124 = vmatpush.bf16.msra.mxu0 %v1105
    %1125 = vmatpush.bf16.msra.mxu0 %v1104
    %1126 = vmatpush.bf16.msra.mxu0 %v1103
    %1127 = vmatmul.bf16.gmra.mxu0 %v1050
    %v1128 = vpop.f32.mrf.mxu0
    %v1129 = vadd.f32 %v1069, %v1128
    %v1130 = vpop.f32.mrf.mxu0
    %v1131 = vadd.f32 %v1069, %v1130
    %1132 = vmatmul.bf16.gmra.mxu0 %v1051
    %v1133 = vpop.f32.mrf.mxu0
    %v1134 = vadd.f32 %v1069, %v1133
    %v1135 = vpop.f32.mrf.mxu0
    %v1136 = vadd.f32 %v1069, %v1135
    %1137 = vmatmul.bf16.gmra.mxu0 %v1052
    %v1138 = vpop.f32.mrf.mxu0
    %v1139 = vadd.f32 %v1069, %v1138
    %v1140 = vpop.f32.mrf.mxu0
    %v1141 = vadd.f32 %v1069, %v1140
    %1142 = vmatmul.bf16.gmra.mxu0 %v1053
    %v1143 = vpop.f32.mrf.mxu0
    %v1144 = vadd.f32 %v1069, %v1143
    %v1145 = vpop.f32.mrf.mxu0
    %v1146 = vadd.f32 %v1069, %v1145
    %1147 = vmatmul.bf16.gmra.mxu0 %v1054
    %v1148 = vpop.f32.mrf.mxu0
    %v1149 = vadd.f32 %v1069, %v1148
    %v1150 = vpop.f32.mrf.mxu0
    %v1151 = vadd.f32 %v1069, %v1150
    %1152 = vmatmul.bf16.gmra.mxu0 %v1055
    %v1153 = vpop.f32.mrf.mxu0
    %v1154 = vadd.f32 %v1069, %v1153
    %v1155 = vpop.f32.mrf.mxu0
    %v1156 = vadd.f32 %v1069, %v1155
    %1157 = vmatmul.bf16.gmra.mxu0 %v1056
    %v1158 = vpop.f32.mrf.mxu0
    %v1159 = vadd.f32 %v1069, %v1158
    %v1160 = vpop.f32.mrf.mxu0
    %v1161 = vadd.f32 %v1069, %v1160
    %1162 = vmatmul.bf16.gmra.mxu0 %v1057
    %v1163 = vpop.f32.mrf.mxu0
    %v1164 = vadd.f32 %v1069, %v1163
    %v1165 = vpop.f32.mrf.mxu0
    %v1166 = vadd.f32 %v1069, %v1165
    %1167 = vmatmul.bf16.gmra.mxu0 %v1058
    %v1168 = vpop.f32.mrf.mxu0
    %v1169 = vadd.f32 %v1069, %v1168
    %v1170 = vpop.f32.mrf.mxu0
    %v1171 = vadd.f32 %v1069, %v1170
    %1172 = vmatmul.bf16.gmra.mxu0 %v1059
    %v1173 = vpop.f32.mrf.mxu0
    %v1174 = vadd.f32 %v1069, %v1173
    %v1175 = vpop.f32.mrf.mxu0
    %v1176 = vadd.f32 %v1069, %v1175
    %1177 = vmatmul.bf16.gmra.mxu0 %v1060
    %v1178 = vpop.f32.mrf.mxu0
    %v1179 = vadd.f32 %v1069, %v1178
    %v1180 = vpop.f32.mrf.mxu0
    %v1181 = vadd.f32 %v1069, %v1180
    %1182 = vmatmul.bf16.gmra.mxu0 %v1061
    %v1183 = vpop.f32.mrf.mxu0
    %v1184 = vadd.f32 %v1069, %v1183
    %v1185 = vpop.f32.mrf.mxu0
    %v1186 = vadd.f32 %v1069, %v1185
    %1187 = vmatmul.bf16.gmra.mxu0 %v1062
    %v1188 = vpop.f32.mrf.mxu0
    %v1189 = vadd.f32 %v1069, %v1188
    %v1190 = vpop.f32.mrf.mxu0
    %v1191 = vadd.f32 %v1069, %v1190
    %1192 = vmatmul.bf16.gmra.mxu0 %v1063
    %v1193 = vpop.f32.mrf.mxu0
    %v1194 = vadd.f32 %v1069, %v1193
    %v1195 = vpop.f32.mrf.mxu0
    %v1196 = vadd.f32 %v1069, %v1195
    %1197 = vmatmul.bf16.gmra.mxu0 %v1064
    %v1198 = vpop.f32.mrf.mxu0
    %v1199 = vadd.f32 %v1069, %v1198
    %v1200 = vpop.f32.mrf.mxu0
    %v1201 = vadd.f32 %v1069, %v1200
    %1202 = vmatmul.bf16.gmra.mxu0 %v1065
    %v1203 = vpop.f32.mrf.mxu0
    %v1204 = vadd.f32 %v1069, %v1203
    %v1205 = vpop.f32.mrf.mxu0
    %v1206 = vadd.f32 %v1069, %v1205
    %1207 = vdwg.mxu0
    %vm1208 = vcmp.gt.f32.partialorder %v1129, 0.0
    %vm1209 = vcmp.gt.f32.partialorder %v1131, 0.0
    %vm1210 = vcmp.gt.f32.partialorder %v1134, 0.0
    %vm1211 = vcmp.gt.f32.partialorder %v1136, 0.0
    %vm1212 = vcmp.gt.f32.partialorder %v1139, 0.0
    %vm1213 = vcmp.gt.f32.partialorder %v1141, 0.0
    %vm1214 = vcmp.gt.f32.partialorder %v1144, 0.0
    %vm1215 = vcmp.gt.f32.partialorder %v1146, 0.0
    %vm1216 = vcmp.gt.f32.partialorder %v1149, 0.0
    %vm1217 = vcmp.gt.f32.partialorder %v1151, 0.0
    %vm1218 = vcmp.gt.f32.partialorder %v1154, 0.0
    %vm1219 = vcmp.gt.f32.partialorder %v1156, 0.0
    %vm1220 = vcmp.gt.f32.partialorder %v1159, 0.0
    %vm1221 = vcmp.gt.f32.partialorder %v1161, 0.0
    %vm1222 = vcmp.gt.f32.partialorder %v1164, 0.0
    %vm1223 = vcmp.gt.f32.partialorder %v1166, 0.0
    %vm1224 = vcmp.gt.f32.partialorder %v1169, 0.0
    %vm1225 = vcmp.gt.f32.partialorder %v1171, 0.0
    %vm1226 = vcmp.gt.f32.partialorder %v1174, 0.0
    %vm1227 = vcmp.gt.f32.partialorder %v1176, 0.0
    %vm1228 = vcmp.gt.f32.partialorder %v1179, 0.0
    %vm1229 = vcmp.gt.f32.partialorder %v1181, 0.0
    %vm1230 = vcmp.gt.f32.partialorder %v1184, 0.0
    %vm1231 = vcmp.gt.f32.partialorder %v1186, 0.0
    %vm1232 = vcmp.gt.f32.partialorder %v1189, 0.0
    %vm1233 = vcmp.gt.f32.partialorder %v1191, 0.0
    %vm1234 = vcmp.gt.f32.partialorder %v1194, 0.0
    %vm1235 = vcmp.gt.f32.partialorder %v1196, 0.0
    %vm1236 = vcmp.gt.f32.partialorder %v1199, 0.0
    %vm1237 = vcmp.gt.f32.partialorder %v1201, 0.0
    %vm1238 = vcmp.gt.f32.partialorder %v1204, 0.0
    %vm1239 = vcmp.gt.f32.partialorder %v1206, 0.0
    %v1240 = vmul.f32 %v1129, 0.1
    %v1241 = vmul.f32 %v1131, 0.1
    %v1242 = vmul.f32 %v1134, 0.1
    %v1243 = vmul.f32 %v1136, 0.1
    %v1244 = vmul.f32 %v1139, 0.1
    %v1245 = vmul.f32 %v1141, 0.1
    %v1246 = vmul.f32 %v1144, 0.1
    %v1247 = vmul.f32 %v1146, 0.1
    %v1248 = vmul.f32 %v1149, 0.1
    %v1249 = vmul.f32 %v1151, 0.1
    %v1250 = vmul.f32 %v1154, 0.1
    %v1251 = vmul.f32 %v1156, 0.1
    %v1252 = vmul.f32 %v1159, 0.1
    %v1253 = vmul.f32 %v1161, 0.1
    %v1254 = vmul.f32 %v1164, 0.1
    %v1255 = vmul.f32 %v1166, 0.1
    %v1256 = vmul.f32 %v1169, 0.1
    %v1257 = vmul.f32 %v1171, 0.1
    %v1258 = vmul.f32 %v1174, 0.1
    %v1259 = vmul.f32 %v1176, 0.1
    %v1260 = vmul.f32 %v1179, 0.1
    %v1261 = vmul.f32 %v1181, 0.1
    %v1262 = vmul.f32 %v1184, 0.1
    %v1263 = vmul.f32 %v1186, 0.1
    %v1264 = vmul.f32 %v1189, 0.1
    %v1265 = vmul.f32 %v1191, 0.1
    %v1266 = vmul.f32 %v1194, 0.1
    %v1267 = vmul.f32 %v1196, 0.1
    %v1268 = vmul.f32 %v1199, 0.1
    %v1269 = vmul.f32 %v1201, 0.1
    %v1270 = vmul.f32 %v1204, 0.1
    %v1271 = vmul.f32 %v1206, 0.1
    %v1272 = vsel %vm1208, %v1129, %v1240
    %v1273 = vsel %vm1209, %v1131, %v1241
    %v1274 = vsel %vm1210, %v1134, %v1242
    %v1275 = vsel %vm1211, %v1136, %v1243
    %v1276 = vsel %vm1212, %v1139, %v1244
    %v1277 = vsel %vm1213, %v1141, %v1245
    %v1278 = vsel %vm1214, %v1144, %v1246
    %v1279 = vsel %vm1215, %v1146, %v1247
    %v1280 = vsel %vm1216, %v1149, %v1248
    %v1281 = vsel %vm1217, %v1151, %v1249
    %v1282 = vsel %vm1218, %v1154, %v1250
    %v1283 = vsel %vm1219, %v1156, %v1251
    %v1284 = vsel %vm1220, %v1159, %v1252
    %v1285 = vsel %vm1221, %v1161, %v1253
    %v1286 = vsel %vm1222, %v1164, %v1254
    %v1287 = vsel %vm1223, %v1166, %v1255
    %v1288 = vsel %vm1224, %v1169, %v1256
    %v1289 = vsel %vm1225, %v1171, %v1257
    %v1290 = vsel %vm1226, %v1174, %v1258
    %v1291 = vsel %vm1227, %v1176, %v1259
    %v1292 = vsel %vm1228, %v1179, %v1260
    %v1293 = vsel %vm1229, %v1181, %v1261
    %v1294 = vsel %vm1230, %v1184, %v1262
    %v1295 = vsel %vm1231, %v1186, %v1263
    %v1296 = vsel %vm1232, %v1189, %v1264
    %v1297 = vsel %vm1233, %v1191, %v1265
    %v1298 = vsel %vm1234, %v1194, %v1266
    %v1299 = vsel %vm1235, %v1196, %v1267
    %v1300 = vsel %vm1236, %v1199, %v1268
    %v1301 = vsel %vm1237, %v1201, %v1269
    %v1302 = vsel %vm1238, %v1204, %v1270
    %v1303 = vsel %vm1239, %v1206, %v1271
    %s1304 = scalar_lea.vmem [#allocation10], 64
    %v1305 = vld [vmem:[%s1304] sm:$0xf]
    %v1306 = vld [vmem:[%s1304 + $0x4] sm:$0xf]
    %v1307 = vld [vmem:[%s1304 + $0x8] sm:$0xf]
    %v1308 = vld [vmem:[%s1304 + $0xc] sm:$0xf]
    %v1309 = vld [vmem:[%s1304 + $0x10] sm:$0xf]
    %v1310 = vld [vmem:[%s1304 + $0x14] sm:$0xf]
    %v1311 = vld [vmem:[%s1304 + $0x18] sm:$0xf]
    %v1312 = vld [vmem:[%s1304 + $0x1c] sm:$0xf]
    %v1313 = vld [vmem:[%s1304 + $0x20] sm:$0xf]
    %v1314 = vld [vmem:[%s1304 + $0x24] sm:$0xf]
    %v1315 = vld [vmem:[%s1304 + $0x28] sm:$0xf]
    %v1316 = vld [vmem:[%s1304 + $0x2c] sm:$0xf]
    %v1317 = vld [vmem:[%s1304 + $0x30] sm:$0xf]
    %v1318 = vld [vmem:[%s1304 + $0x34] sm:$0xf]
    %v1319 = vld [vmem:[%s1304 + $0x38] sm:$0xf]
    %v1320 = vld [vmem:[%s1304 + $0x3c] sm:$0xf]
    %v1321 = vpack.c.bf16 %v1273, %v1272
    %v1322 = vpack.c.bf16 %v1275, %v1274
    %v1323 = vpack.c.bf16 %v1277, %v1276
    %v1324 = vpack.c.bf16 %v1279, %v1278
    %v1325 = vpack.c.bf16 %v1281, %v1280
    %v1326 = vpack.c.bf16 %v1283, %v1282
    %v1327 = vpack.c.bf16 %v1285, %v1284
    %v1328 = vpack.c.bf16 %v1287, %v1286
    %v1329 = vpack.c.bf16 %v1289, %v1288
    %v1330 = vpack.c.bf16 %v1291, %v1290
    %v1331 = vpack.c.bf16 %v1293, %v1292
    %v1332 = vpack.c.bf16 %v1295, %v1294
    %v1333 = vpack.c.bf16 %v1297, %v1296
    %v1334 = vpack.c.bf16 %v1299, %v1298
    %v1335 = vpack.c.bf16 %v1301, %v1300
    %v1336 = vpack.c.bf16 %v1303, %v1302
    %s1337 = scalar_lea.vmem [#allocation11], 1
    %v1338 = vld [vmem:[%s1337] sm:$0x1]
    %v1340 = vperm.slane %v1338, 0
    %v1358 = vunpack.c.l.b16 %v1305
    %v1359 = vunpack.c.l.b16 %v1306
    %v1360 = vunpack.c.l.b16 %v1307
    %v1361 = vunpack.c.l.b16 %v1308
    %v1362 = vunpack.c.l.b16 %v1309
    %v1363 = vunpack.c.l.b16 %v1310
    %v1364 = vunpack.c.l.b16 %v1311
    %v1365 = vunpack.c.l.b16 %v1312
    %v1366 = vunpack.c.l.b16 %v1313
    %v1367 = vunpack.c.l.b16 %v1314
    %v1368 = vunpack.c.l.b16 %v1315
    %v1369 = vunpack.c.l.b16 %v1316
    %v1370 = vunpack.c.l.b16 %v1317
    %v1371 = vunpack.c.l.b16 %v1318
    %v1372 = vunpack.c.l.b16 %v1319
    %v1373 = vunpack.c.l.b16 %v1320
    %v1374 = vpack.c.b16 %v1359, %v1358
    %v1375 = vpack.c.b16 %v1361, %v1360
    %v1376 = vpack.c.b16 %v1363, %v1362
    %v1377 = vpack.c.b16 %v1365, %v1364
    %v1378 = vpack.c.b16 %v1367, %v1366
    %v1379 = vpack.c.b16 %v1369, %v1368
    %v1380 = vpack.c.b16 %v1371, %v1370
    %v1381 = vpack.c.b16 %v1373, %v1372
    %1390 = vmatpush.bf16.msra.mxu0 %v1381
    %1391 = vmatpush.bf16.msra.mxu0 %v1380
    %1392 = vmatpush.bf16.msra.mxu0 %v1379
    %1393 = vmatpush.bf16.msra.mxu0 %v1378
    %1394 = vmatpush.bf16.msra.mxu0 %v1377
    %1395 = vmatpush.bf16.msra.mxu0 %v1376
    %1396 = vmatpush.bf16.msra.mxu0 %v1375
    %1397 = vmatpush.bf16.msra.mxu0 %v1374
    %1398 = vmatmul.bf16.gmra.mxu0 %v1321
    %v1399 = vpop.f32.mrf.mxu0
    %v1400 = vadd.f32 %v1340, %v1399
    %v1401 = vpop.f32.mrf.mxu0
    %v1402 = vadd.f32 %v1340, %v1401
    %1403 = vmatmul.bf16.gmra.mxu0 %v1322
    %v1404 = vpop.f32.mrf.mxu0
    %v1405 = vadd.f32 %v1340, %v1404
    %v1406 = vpop.f32.mrf.mxu0
    %v1407 = vadd.f32 %v1340, %v1406
    %1408 = vmatmul.bf16.gmra.mxu0 %v1323
    %v1409 = vpop.f32.mrf.mxu0
    %v1410 = vadd.f32 %v1340, %v1409
    %v1411 = vpop.f32.mrf.mxu0
    %v1412 = vadd.f32 %v1340, %v1411
    %1413 = vmatmul.bf16.gmra.mxu0 %v1324
    %v1414 = vpop.f32.mrf.mxu0
    %v1415 = vadd.f32 %v1340, %v1414
    %v1416 = vpop.f32.mrf.mxu0
    %v1417 = vadd.f32 %v1340, %v1416
    %1418 = vmatmul.bf16.gmra.mxu0 %v1325
    %v1419 = vpop.f32.mrf.mxu0
    %v1420 = vadd.f32 %v1340, %v1419
    %v1421 = vpop.f32.mrf.mxu0
    %v1422 = vadd.f32 %v1340, %v1421
    %1423 = vmatmul.bf16.gmra.mxu0 %v1326
    %v1424 = vpop.f32.mrf.mxu0
    %v1425 = vadd.f32 %v1340, %v1424
    %v1426 = vpop.f32.mrf.mxu0
    %v1427 = vadd.f32 %v1340, %v1426
    %1428 = vmatmul.bf16.gmra.mxu0 %v1327
    %v1429 = vpop.f32.mrf.mxu0
    %v1430 = vadd.f32 %v1340, %v1429
    %v1431 = vpop.f32.mrf.mxu0
    %v1432 = vadd.f32 %v1340, %v1431
    %1433 = vmatmul.bf16.gmra.mxu0 %v1328
    %v1434 = vpop.f32.mrf.mxu0
    %v1435 = vadd.f32 %v1340, %v1434
    %v1436 = vpop.f32.mrf.mxu0
    %v1437 = vadd.f32 %v1340, %v1436
    %1438 = vmatmul.bf16.gmra.mxu0 %v1329
    %v1439 = vpop.f32.mrf.mxu0
    %v1440 = vadd.f32 %v1340, %v1439
    %v1441 = vpop.f32.mrf.mxu0
    %v1442 = vadd.f32 %v1340, %v1441
    %1443 = vmatmul.bf16.gmra.mxu0 %v1330
    %v1444 = vpop.f32.mrf.mxu0
    %v1445 = vadd.f32 %v1340, %v1444
    %v1446 = vpop.f32.mrf.mxu0
    %v1447 = vadd.f32 %v1340, %v1446
    %1448 = vmatmul.bf16.gmra.mxu0 %v1331
    %v1449 = vpop.f32.mrf.mxu0
    %v1450 = vadd.f32 %v1340, %v1449
    %v1451 = vpop.f32.mrf.mxu0
    %v1452 = vadd.f32 %v1340, %v1451
    %1453 = vmatmul.bf16.gmra.mxu0 %v1332
    %v1454 = vpop.f32.mrf.mxu0
    %v1455 = vadd.f32 %v1340, %v1454
    %v1456 = vpop.f32.mrf.mxu0
    %v1457 = vadd.f32 %v1340, %v1456
    %1458 = vmatmul.bf16.gmra.mxu0 %v1333
    %v1459 = vpop.f32.mrf.mxu0
    %v1460 = vadd.f32 %v1340, %v1459
    %v1461 = vpop.f32.mrf.mxu0
    %v1462 = vadd.f32 %v1340, %v1461
    %1463 = vmatmul.bf16.gmra.mxu0 %v1334
    %v1464 = vpop.f32.mrf.mxu0
    %v1465 = vadd.f32 %v1340, %v1464
    %v1466 = vpop.f32.mrf.mxu0
    %v1467 = vadd.f32 %v1340, %v1466
    %1468 = vmatmul.bf16.gmra.mxu0 %v1335
    %v1469 = vpop.f32.mrf.mxu0
    %v1470 = vadd.f32 %v1340, %v1469
    %v1471 = vpop.f32.mrf.mxu0
    %v1472 = vadd.f32 %v1340, %v1471
    %1473 = vmatmul.bf16.gmra.mxu0 %v1336
    %v1474 = vpop.f32.mrf.mxu0
    %v1475 = vadd.f32 %v1340, %v1474
    %v1476 = vpop.f32.mrf.mxu0
    %v1477 = vadd.f32 %v1340, %v1476
    %1478 = vdwg.mxu0
    %v1479 = vadd.f32 %v1400, %v1001
    %v1480 = vadd.f32 %v1402, %v1002
    %v1481 = vadd.f32 %v1405, %v1003
    %v1482 = vadd.f32 %v1407, %v1004
    %v1483 = vadd.f32 %v1410, %v1005
    %v1484 = vadd.f32 %v1412, %v1006
    %v1485 = vadd.f32 %v1415, %v1007
    %v1486 = vadd.f32 %v1417, %v1008
    %v1487 = vadd.f32 %v1420, %v1009
    %v1488 = vadd.f32 %v1422, %v1010
    %v1489 = vadd.f32 %v1425, %v1011
    %v1490 = vadd.f32 %v1427, %v1012
    %v1491 = vadd.f32 %v1430, %v1013
    %v1492 = vadd.f32 %v1432, %v1014
    %v1493 = vadd.f32 %v1435, %v1015
    %v1494 = vadd.f32 %v1437, %v1016
    %v1495 = vadd.f32 %v1440, %v1017
    %v1496 = vadd.f32 %v1442, %v1018
    %v1497 = vadd.f32 %v1445, %v1019
    %v1498 = vadd.f32 %v1447, %v1020
    %v1499 = vadd.f32 %v1450, %v1021
    %v1500 = vadd.f32 %v1452, %v1022
    %v1501 = vadd.f32 %v1455, %v1023
    %v1502 = vadd.f32 %v1457, %v1024
    %v1503 = vadd.f32 %v1460, %v1025
    %v1504 = vadd.f32 %v1462, %v1026
    %v1505 = vadd.f32 %v1465, %v1027
    %v1506 = vadd.f32 %v1467, %v1028
    %v1507 = vadd.f32 %v1470, %v1029
    %v1508 = vadd.f32 %v1472, %v1030
    %v1509 = vadd.f32 %v1475, %v1031
    %v1510 = vadd.f32 %v1477, %v1032
    %vm1511 = vcmp.gt.f32.partialorder %v1479, 0.0
    %vm1512 = vcmp.gt.f32.partialorder %v1480, 0.0
    %vm1513 = vcmp.gt.f32.partialorder %v1481, 0.0
    %vm1514 = vcmp.gt.f32.partialorder %v1482, 0.0
    %vm1515 = vcmp.gt.f32.partialorder %v1483, 0.0
    %vm1516 = vcmp.gt.f32.partialorder %v1484, 0.0
    %vm1517 = vcmp.gt.f32.partialorder %v1485, 0.0
    %vm1518 = vcmp.gt.f32.partialorder %v1486, 0.0
    %vm1519 = vcmp.gt.f32.partialorder %v1487, 0.0
    %vm1520 = vcmp.gt.f32.partialorder %v1488, 0.0
    %vm1521 = vcmp.gt.f32.partialorder %v1489, 0.0
    %vm1522 = vcmp.gt.f32.partialorder %v1490, 0.0
    %vm1523 = vcmp.gt.f32.partialorder %v1491, 0.0
    %vm1524 = vcmp.gt.f32.partialorder %v1492, 0.0
    %vm1525 = vcmp.gt.f32.partialorder %v1493, 0.0
    %vm1526 = vcmp.gt.f32.partialorder %v1494, 0.0
    %vm1527 = vcmp.gt.f32.partialorder %v1495, 0.0
    %vm1528 = vcmp.gt.f32.partialorder %v1496, 0.0
    %vm1529 = vcmp.gt.f32.partialorder %v1497, 0.0
    %vm1530 = vcmp.gt.f32.partialorder %v1498, 0.0
    %vm1531 = vcmp.gt.f32.partialorder %v1499, 0.0
    %vm1532 = vcmp.gt.f32.partialorder %v1500, 0.0
    %vm1533 = vcmp.gt.f32.partialorder %v1501, 0.0
    %vm1534 = vcmp.gt.f32.partialorder %v1502, 0.0
    %vm1535 = vcmp.gt.f32.partialorder %v1503, 0.0
    %vm1536 = vcmp.gt.f32.partialorder %v1504, 0.0
    %vm1537 = vcmp.gt.f32.partialorder %v1505, 0.0
    %vm1538 = vcmp.gt.f32.partialorder %v1506, 0.0
    %vm1539 = vcmp.gt.f32.partialorder %v1507, 0.0
    %vm1540 = vcmp.gt.f32.partialorder %v1508, 0.0
    %vm1541 = vcmp.gt.f32.partialorder %v1509, 0.0
    %vm1542 = vcmp.gt.f32.partialorder %v1510, 0.0
    %v1543 = vmul.f32 %v1479, 0.1
    %v1544 = vmul.f32 %v1480, 0.1
    %v1545 = vmul.f32 %v1481, 0.1
    %v1546 = vmul.f32 %v1482, 0.1
    %v1547 = vmul.f32 %v1483, 0.1
    %v1548 = vmul.f32 %v1484, 0.1
    %v1549 = vmul.f32 %v1485, 0.1
    %v1550 = vmul.f32 %v1486, 0.1
    %v1551 = vmul.f32 %v1487, 0.1
    %v1552 = vmul.f32 %v1488, 0.1
    %v1553 = vmul.f32 %v1489, 0.1
    %v1554 = vmul.f32 %v1490, 0.1
    %v1555 = vmul.f32 %v1491, 0.1
    %v1556 = vmul.f32 %v1492, 0.1
    %v1557 = vmul.f32 %v1493, 0.1
    %v1558 = vmul.f32 %v1494, 0.1
    %v1559 = vmul.f32 %v1495, 0.1
    %v1560 = vmul.f32 %v1496, 0.1
    %v1561 = vmul.f32 %v1497, 0.1
    %v1562 = vmul.f32 %v1498, 0.1
    %v1563 = vmul.f32 %v1499, 0.1
    %v1564 = vmul.f32 %v1500, 0.1
    %v1565 = vmul.f32 %v1501, 0.1
    %v1566 = vmul.f32 %v1502, 0.1
    %v1567 = vmul.f32 %v1503, 0.1
    %v1568 = vmul.f32 %v1504, 0.1
    %v1569 = vmul.f32 %v1505, 0.1
    %v1570 = vmul.f32 %v1506, 0.1
    %v1571 = vmul.f32 %v1507, 0.1
    %v1572 = vmul.f32 %v1508, 0.1
    %v1573 = vmul.f32 %v1509, 0.1
    %v1574 = vmul.f32 %v1510, 0.1
    %v1575 = vsel %vm1511, %v1479, %v1543
    %v1576 = vsel %vm1512, %v1480, %v1544
    %v1577 = vsel %vm1513, %v1481, %v1545
    %v1578 = vsel %vm1514, %v1482, %v1546
    %v1579 = vsel %vm1515, %v1483, %v1547
    %v1580 = vsel %vm1516, %v1484, %v1548
    %v1581 = vsel %vm1517, %v1485, %v1549
    %v1582 = vsel %vm1518, %v1486, %v1550
    %v1583 = vsel %vm1519, %v1487, %v1551
    %v1584 = vsel %vm1520, %v1488, %v1552
    %v1585 = vsel %vm1521, %v1489, %v1553
    %v1586 = vsel %vm1522, %v1490, %v1554
    %v1587 = vsel %vm1523, %v1491, %v1555
    %v1588 = vsel %vm1524, %v1492, %v1556
    %v1589 = vsel %vm1525, %v1493, %v1557
    %v1590 = vsel %vm1526, %v1494, %v1558
    %v1591 = vsel %vm1527, %v1495, %v1559
    %v1592 = vsel %vm1528, %v1496, %v1560
    %v1593 = vsel %vm1529, %v1497, %v1561
    %v1594 = vsel %vm1530, %v1498, %v1562
    %v1595 = vsel %vm1531, %v1499, %v1563
    %v1596 = vsel %vm1532, %v1500, %v1564
    %v1597 = vsel %vm1533, %v1501, %v1565
    %v1598 = vsel %vm1534, %v1502, %v1566
    %v1599 = vsel %vm1535, %v1503, %v1567
    %v1600 = vsel %vm1536, %v1504, %v1568
    %v1601 = vsel %vm1537, %v1505, %v1569
    %v1602 = vsel %vm1538, %v1506, %v1570
    %v1603 = vsel %vm1539, %v1507, %v1571
    %v1604 = vsel %vm1540, %v1508, %v1572
    %v1605 = vsel %vm1541, %v1509, %v1573
    %v1606 = vsel %vm1542, %v1510, %v1574
    %s1607 = scalar_lea.vmem [#allocation8], 128
    %v1608 = vld [vmem:[%s1607] sm:$0xf]
    %v1609 = vld [vmem:[%s1607 + $0x4] sm:$0xf]
    %v1610 = vld [vmem:[%s1607 + $0x8] sm:$0xf]
    %v1611 = vld [vmem:[%s1607 + $0xc] sm:$0xf]
    %v1612 = vld [vmem:[%s1607 + $0x10] sm:$0xf]
    %v1613 = vld [vmem:[%s1607 + $0x14] sm:$0xf]
    %v1614 = vld [vmem:[%s1607 + $0x18] sm:$0xf]
    %v1615 = vld [vmem:[%s1607 + $0x1c] sm:$0xf]
    %v1616 = vld [vmem:[%s1607 + $0x20] sm:$0xf]
    %v1617 = vld [vmem:[%s1607 + $0x24] sm:$0xf]
    %v1618 = vld [vmem:[%s1607 + $0x28] sm:$0xf]
    %v1619 = vld [vmem:[%s1607 + $0x2c] sm:$0xf]
    %v1620 = vld [vmem:[%s1607 + $0x30] sm:$0xf]
    %v1621 = vld [vmem:[%s1607 + $0x34] sm:$0xf]
    %v1622 = vld [vmem:[%s1607 + $0x38] sm:$0xf]
    %v1623 = vld [vmem:[%s1607 + $0x3c] sm:$0xf]
    %v1624 = vpack.c.bf16 %v1576, %v1575
    %v1625 = vpack.c.bf16 %v1578, %v1577
    %v1626 = vpack.c.bf16 %v1580, %v1579
    %v1627 = vpack.c.bf16 %v1582, %v1581
    %v1628 = vpack.c.bf16 %v1584, %v1583
    %v1629 = vpack.c.bf16 %v1586, %v1585
    %v1630 = vpack.c.bf16 %v1588, %v1587
    %v1631 = vpack.c.bf16 %v1590, %v1589
    %v1632 = vpack.c.bf16 %v1592, %v1591
    %v1633 = vpack.c.bf16 %v1594, %v1593
    %v1634 = vpack.c.bf16 %v1596, %v1595
    %v1635 = vpack.c.bf16 %v1598, %v1597
    %v1636 = vpack.c.bf16 %v1600, %v1599
    %v1637 = vpack.c.bf16 %v1602, %v1601
    %v1638 = vpack.c.bf16 %v1604, %v1603
    %v1639 = vpack.c.bf16 %v1606, %v1605
    %s1640 = scalar_lea.vmem %s4, 2
    %v1641 = vld [vmem:[%s1640] sm:$0x1]
    %v1643 = vperm.slane %v1641, 0
    %v1661 = vunpack.c.l.b16 %v1608
    %v1662 = vunpack.c.l.b16 %v1609
    %v1663 = vunpack.c.l.b16 %v1610
    %v1664 = vunpack.c.l.b16 %v1611
    %v1665 = vunpack.c.l.b16 %v1612
    %v1666 = vunpack.c.l.b16 %v1613
    %v1667 = vunpack.c.l.b16 %v1614
    %v1668 = vunpack.c.l.b16 %v1615
    %v1669 = vunpack.c.l.b16 %v1616
    %v1670 = vunpack.c.l.b16 %v1617
    %v1671 = vunpack.c.l.b16 %v1618
    %v1672 = vunpack.c.l.b16 %v1619
    %v1673 = vunpack.c.l.b16 %v1620
    %v1674 = vunpack.c.l.b16 %v1621
    %v1675 = vunpack.c.l.b16 %v1622
    %v1676 = vunpack.c.l.b16 %v1623
    %v1677 = vpack.c.b16 %v1662, %v1661
    %v1678 = vpack.c.b16 %v1664, %v1663
    %v1679 = vpack.c.b16 %v1666, %v1665
    %v1680 = vpack.c.b16 %v1668, %v1667
    %v1681 = vpack.c.b16 %v1670, %v1669
    %v1682 = vpack.c.b16 %v1672, %v1671
    %v1683 = vpack.c.b16 %v1674, %v1673
    %v1684 = vpack.c.b16 %v1676, %v1675
    %1693 = vmatpush.bf16.msra.mxu0 %v1684
    %1694 = vmatpush.bf16.msra.mxu0 %v1683
    %1695 = vmatpush.bf16.msra.mxu0 %v1682
    %1696 = vmatpush.bf16.msra.mxu0 %v1681
    %1697 = vmatpush.bf16.msra.mxu0 %v1680
    %1698 = vmatpush.bf16.msra.mxu0 %v1679
    %1699 = vmatpush.bf16.msra.mxu0 %v1678
    %1700 = vmatpush.bf16.msra.mxu0 %v1677
    %1701 = vmatmul.bf16.gmra.mxu0 %v1624
    %v1702 = vpop.f32.mrf.mxu0
    %v1703 = vadd.f32 %v1643, %v1702
    %v1704 = vpop.f32.mrf.mxu0
    %v1705 = vadd.f32 %v1643, %v1704
    %1706 = vmatmul.bf16.gmra.mxu0 %v1625
    %v1707 = vpop.f32.mrf.mxu0
    %v1708 = vadd.f32 %v1643, %v1707
    %v1709 = vpop.f32.mrf.mxu0
    %v1710 = vadd.f32 %v1643, %v1709
    %1711 = vmatmul.bf16.gmra.mxu0 %v1626
    %v1712 = vpop.f32.mrf.mxu0
    %v1713 = vadd.f32 %v1643, %v1712
    %v1714 = vpop.f32.mrf.mxu0
    %v1715 = vadd.f32 %v1643, %v1714
    %1716 = vmatmul.bf16.gmra.mxu0 %v1627
    %v1717 = vpop.f32.mrf.mxu0
    %v1718 = vadd.f32 %v1643, %v1717
    %v1719 = vpop.f32.mrf.mxu0
    %v1720 = vadd.f32 %v1643, %v1719
    %1721 = vmatmul.bf16.gmra.mxu0 %v1628
    %v1722 = vpop.f32.mrf.mxu0
    %v1723 = vadd.f32 %v1643, %v1722
    %v1724 = vpop.f32.mrf.mxu0
    %v1725 = vadd.f32 %v1643, %v1724
    %1726 = vmatmul.bf16.gmra.mxu0 %v1629
    %v1727 = vpop.f32.mrf.mxu0
    %v1728 = vadd.f32 %v1643, %v1727
    %v1729 = vpop.f32.mrf.mxu0
    %v1730 = vadd.f32 %v1643, %v1729
    %1731 = vmatmul.bf16.gmra.mxu0 %v1630
    %v1732 = vpop.f32.mrf.mxu0
    %v1733 = vadd.f32 %v1643, %v1732
    %v1734 = vpop.f32.mrf.mxu0
    %v1735 = vadd.f32 %v1643, %v1734
    %1736 = vmatmul.bf16.gmra.mxu0 %v1631
    %v1737 = vpop.f32.mrf.mxu0
    %v1738 = vadd.f32 %v1643, %v1737
    %v1739 = vpop.f32.mrf.mxu0
    %v1740 = vadd.f32 %v1643, %v1739
    %1741 = vmatmul.bf16.gmra.mxu0 %v1632
    %v1742 = vpop.f32.mrf.mxu0
    %v1743 = vadd.f32 %v1643, %v1742
    %v1744 = vpop.f32.mrf.mxu0
    %v1745 = vadd.f32 %v1643, %v1744
    %1746 = vmatmul.bf16.gmra.mxu0 %v1633
    %v1747 = vpop.f32.mrf.mxu0
    %v1748 = vadd.f32 %v1643, %v1747
    %v1749 = vpop.f32.mrf.mxu0
    %v1750 = vadd.f32 %v1643, %v1749
    %1751 = vmatmul.bf16.gmra.mxu0 %v1634
    %v1752 = vpop.f32.mrf.mxu0
    %v1753 = vadd.f32 %v1643, %v1752
    %v1754 = vpop.f32.mrf.mxu0
    %v1755 = vadd.f32 %v1643, %v1754
    %1756 = vmatmul.bf16.gmra.mxu0 %v1635
    %v1757 = vpop.f32.mrf.mxu0
    %v1758 = vadd.f32 %v1643, %v1757
    %v1759 = vpop.f32.mrf.mxu0
    %v1760 = vadd.f32 %v1643, %v1759
    %1761 = vmatmul.bf16.gmra.mxu0 %v1636
    %v1762 = vpop.f32.mrf.mxu0
    %v1763 = vadd.f32 %v1643, %v1762
    %v1764 = vpop.f32.mrf.mxu0
    %v1765 = vadd.f32 %v1643, %v1764
    %1766 = vmatmul.bf16.gmra.mxu0 %v1637
    %v1767 = vpop.f32.mrf.mxu0
    %v1768 = vadd.f32 %v1643, %v1767
    %v1769 = vpop.f32.mrf.mxu0
    %v1770 = vadd.f32 %v1643, %v1769
    %1771 = vmatmul.bf16.gmra.mxu0 %v1638
    %v1772 = vpop.f32.mrf.mxu0
    %v1773 = vadd.f32 %v1643, %v1772
    %v1774 = vpop.f32.mrf.mxu0
    %v1775 = vadd.f32 %v1643, %v1774
    %1776 = vmatmul.bf16.gmra.mxu0 %v1639
    %v1777 = vpop.f32.mrf.mxu0
    %v1778 = vadd.f32 %v1643, %v1777
    %v1779 = vpop.f32.mrf.mxu0
    %v1780 = vadd.f32 %v1643, %v1779
    %1781 = vdwg.mxu0
    %vm1782 = vcmp.gt.f32.partialorder %v1703, 0.0
    %vm1783 = vcmp.gt.f32.partialorder %v1705, 0.0
    %vm1784 = vcmp.gt.f32.partialorder %v1708, 0.0
    %vm1785 = vcmp.gt.f32.partialorder %v1710, 0.0
    %vm1786 = vcmp.gt.f32.partialorder %v1713, 0.0
    %vm1787 = vcmp.gt.f32.partialorder %v1715, 0.0
    %vm1788 = vcmp.gt.f32.partialorder %v1718, 0.0
    %vm1789 = vcmp.gt.f32.partialorder %v1720, 0.0
    %vm1790 = vcmp.gt.f32.partialorder %v1723, 0.0
    %vm1791 = vcmp.gt.f32.partialorder %v1725, 0.0
    %vm1792 = vcmp.gt.f32.partialorder %v1728, 0.0
    %vm1793 = vcmp.gt.f32.partialorder %v1730, 0.0
    %vm1794 = vcmp.gt.f32.partialorder %v1733, 0.0
    %vm1795 = vcmp.gt.f32.partialorder %v1735, 0.0
    %vm1796 = vcmp.gt.f32.partialorder %v1738, 0.0
    %vm1797 = vcmp.gt.f32.partialorder %v1740, 0.0
    %vm1798 = vcmp.gt.f32.partialorder %v1743, 0.0
    %vm1799 = vcmp.gt.f32.partialorder %v1745, 0.0
    %vm1800 = vcmp.gt.f32.partialorder %v1748, 0.0
    %vm1801 = vcmp.gt.f32.partialorder %v1750, 0.0
    %vm1802 = vcmp.gt.f32.partialorder %v1753, 0.0
    %vm1803 = vcmp.gt.f32.partialorder %v1755, 0.0
    %vm1804 = vcmp.gt.f32.partialorder %v1758, 0.0
    %vm1805 = vcmp.gt.f32.partialorder %v1760, 0.0
    %vm1806 = vcmp.gt.f32.partialorder %v1763, 0.0
    %vm1807 = vcmp.gt.f32.partialorder %v1765, 0.0
    %vm1808 = vcmp.gt.f32.partialorder %v1768, 0.0
    %vm1809 = vcmp.gt.f32.partialorder %v1770, 0.0
    %vm1810 = vcmp.gt.f32.partialorder %v1773, 0.0
    %vm1811 = vcmp.gt.f32.partialorder %v1775, 0.0
    %vm1812 = vcmp.gt.f32.partialorder %v1778, 0.0
    %vm1813 = vcmp.gt.f32.partialorder %v1780, 0.0
    %v1814 = vmul.f32 %v1703, 0.1
    %v1815 = vmul.f32 %v1705, 0.1
    %v1816 = vmul.f32 %v1708, 0.1
    %v1817 = vmul.f32 %v1710, 0.1
    %v1818 = vmul.f32 %v1713, 0.1
    %v1819 = vmul.f32 %v1715, 0.1
    %v1820 = vmul.f32 %v1718, 0.1
    %v1821 = vmul.f32 %v1720, 0.1
    %v1822 = vmul.f32 %v1723, 0.1
    %v1823 = vmul.f32 %v1725, 0.1
    %v1824 = vmul.f32 %v1728, 0.1
    %v1825 = vmul.f32 %v1730, 0.1
    %v1826 = vmul.f32 %v1733, 0.1
    %v1827 = vmul.f32 %v1735, 0.1
    %v1828 = vmul.f32 %v1738, 0.1
    %v1829 = vmul.f32 %v1740, 0.1
    %v1830 = vmul.f32 %v1743, 0.1
    %v1831 = vmul.f32 %v1745, 0.1
    %v1832 = vmul.f32 %v1748, 0.1
    %v1833 = vmul.f32 %v1750, 0.1
    %v1834 = vmul.f32 %v1753, 0.1
    %v1835 = vmul.f32 %v1755, 0.1
    %v1836 = vmul.f32 %v1758, 0.1
    %v1837 = vmul.f32 %v1760, 0.1
    %v1838 = vmul.f32 %v1763, 0.1
    %v1839 = vmul.f32 %v1765, 0.1
    %v1840 = vmul.f32 %v1768, 0.1
    %v1841 = vmul.f32 %v1770, 0.1
    %v1842 = vmul.f32 %v1773, 0.1
    %v1843 = vmul.f32 %v1775, 0.1
    %v1844 = vmul.f32 %v1778, 0.1
    %v1845 = vmul.f32 %v1780, 0.1
    %v1846 = vsel %vm1782, %v1703, %v1814
    %v1847 = vsel %vm1783, %v1705, %v1815
    %v1848 = vsel %vm1784, %v1708, %v1816
    %v1849 = vsel %vm1785, %v1710, %v1817
    %v1850 = vsel %vm1786, %v1713, %v1818
    %v1851 = vsel %vm1787, %v1715, %v1819
    %v1852 = vsel %vm1788, %v1718, %v1820
    %v1853 = vsel %vm1789, %v1720, %v1821
    %v1854 = vsel %vm1790, %v1723, %v1822
    %v1855 = vsel %vm1791, %v1725, %v1823
    %v1856 = vsel %vm1792, %v1728, %v1824
    %v1857 = vsel %vm1793, %v1730, %v1825
    %v1858 = vsel %vm1794, %v1733, %v1826
    %v1859 = vsel %vm1795, %v1735, %v1827
    %v1860 = vsel %vm1796, %v1738, %v1828
    %v1861 = vsel %vm1797, %v1740, %v1829
    %v1862 = vsel %vm1798, %v1743, %v1830
    %v1863 = vsel %vm1799, %v1745, %v1831
    %v1864 = vsel %vm1800, %v1748, %v1832
    %v1865 = vsel %vm1801, %v1750, %v1833
    %v1866 = vsel %vm1802, %v1753, %v1834
    %v1867 = vsel %vm1803, %v1755, %v1835
    %v1868 = vsel %vm1804, %v1758, %v1836
    %v1869 = vsel %vm1805, %v1760, %v1837
    %v1870 = vsel %vm1806, %v1763, %v1838
    %v1871 = vsel %vm1807, %v1765, %v1839
    %v1872 = vsel %vm1808, %v1768, %v1840
    %v1873 = vsel %vm1809, %v1770, %v1841
    %v1874 = vsel %vm1810, %v1773, %v1842
    %v1875 = vsel %vm1811, %v1775, %v1843
    %v1876 = vsel %vm1812, %v1778, %v1844
    %v1877 = vsel %vm1813, %v1780, %v1845
    %s1878 = scalar_lea.vmem [#allocation10], 128
    %v1879 = vld [vmem:[%s1878] sm:$0xf]
    %v1880 = vld [vmem:[%s1878 + $0x4] sm:$0xf]
    %v1881 = vld [vmem:[%s1878 + $0x8] sm:$0xf]
    %v1882 = vld [vmem:[%s1878 + $0xc] sm:$0xf]
    %v1883 = vld [vmem:[%s1878 + $0x10] sm:$0xf]
    %v1884 = vld [vmem:[%s1878 + $0x14] sm:$0xf]
    %v1885 = vld [vmem:[%s1878 + $0x18] sm:$0xf]
    %v1886 = vld [vmem:[%s1878 + $0x1c] sm:$0xf]
    %v1887 = vld [vmem:[%s1878 + $0x20] sm:$0xf]
    %v1888 = vld [vmem:[%s1878 + $0x24] sm:$0xf]
    %v1889 = vld [vmem:[%s1878 + $0x28] sm:$0xf]
    %v1890 = vld [vmem:[%s1878 + $0x2c] sm:$0xf]
    %v1891 = vld [vmem:[%s1878 + $0x30] sm:$0xf]
    %v1892 = vld [vmem:[%s1878 + $0x34] sm:$0xf]
    %v1893 = vld [vmem:[%s1878 + $0x38] sm:$0xf]
    %v1894 = vld [vmem:[%s1878 + $0x3c] sm:$0xf]
    %v1895 = vpack.c.bf16 %v1847, %v1846
    %v1896 = vpack.c.bf16 %v1849, %v1848
    %v1897 = vpack.c.bf16 %v1851, %v1850
    %v1898 = vpack.c.bf16 %v1853, %v1852
    %v1899 = vpack.c.bf16 %v1855, %v1854
    %v1900 = vpack.c.bf16 %v1857, %v1856
    %v1901 = vpack.c.bf16 %v1859, %v1858
    %v1902 = vpack.c.bf16 %v1861, %v1860
    %v1903 = vpack.c.bf16 %v1863, %v1862
    %v1904 = vpack.c.bf16 %v1865, %v1864
    %v1905 = vpack.c.bf16 %v1867, %v1866
    %v1906 = vpack.c.bf16 %v1869, %v1868
    %v1907 = vpack.c.bf16 %v1871, %v1870
    %v1908 = vpack.c.bf16 %v1873, %v1872
    %v1909 = vpack.c.bf16 %v1875, %v1874
    %v1910 = vpack.c.bf16 %v1877, %v1876
    %s1911 = scalar_lea.vmem [#allocation11], 2
    %v1912 = vld [vmem:[%s1911] sm:$0x1]
    %v1914 = vperm.slane %v1912, 0
    %v1932 = vunpack.c.l.b16 %v1879
    %v1933 = vunpack.c.l.b16 %v1880
    %v1934 = vunpack.c.l.b16 %v1881
    %v1935 = vunpack.c.l.b16 %v1882
    %v1936 = vunpack.c.l.b16 %v1883
    %v1937 = vunpack.c.l.b16 %v1884
    %v1938 = vunpack.c.l.b16 %v1885
    %v1939 = vunpack.c.l.b16 %v1886
    %v1940 = vunpack.c.l.b16 %v1887
    %v1941 = vunpack.c.l.b16 %v1888
    %v1942 = vunpack.c.l.b16 %v1889
    %v1943 = vunpack.c.l.b16 %v1890
    %v1944 = vunpack.c.l.b16 %v1891
    %v1945 = vunpack.c.l.b16 %v1892
    %v1946 = vunpack.c.l.b16 %v1893
    %v1947 = vunpack.c.l.b16 %v1894
    %v1948 = vpack.c.b16 %v1933, %v1932
    %v1949 = vpack.c.b16 %v1935, %v1934
    %v1950 = vpack.c.b16 %v1937, %v1936
    %v1951 = vpack.c.b16 %v1939, %v1938
    %v1952 = vpack.c.b16 %v1941, %v1940
    %v1953 = vpack.c.b16 %v1943, %v1942
    %v1954 = vpack.c.b16 %v1945, %v1944
    %v1955 = vpack.c.b16 %v1947, %v1946
    %1964 = vmatpush.bf16.msra.mxu0 %v1955
    %1965 = vmatpush.bf16.msra.mxu0 %v1954
    %1966 = vmatpush.bf16.msra.mxu0 %v1953
    %1967 = vmatpush.bf16.msra.mxu0 %v1952
    %1968 = vmatpush.bf16.msra.mxu0 %v1951
    %1969 = vmatpush.bf16.msra.mxu0 %v1950
    %1970 = vmatpush.bf16.msra.mxu0 %v1949
    %1971 = vmatpush.bf16.msra.mxu0 %v1948
    %1972 = vmatmul.bf16.gmra.mxu0 %v1895
    %v1973 = vpop.f32.mrf.mxu0
    %v1974 = vadd.f32 %v1914, %v1973
    %v1975 = vpop.f32.mrf.mxu0
    %v1976 = vadd.f32 %v1914, %v1975
    %1977 = vmatmul.bf16.gmra.mxu0 %v1896
    %v1978 = vpop.f32.mrf.mxu0
    %v1979 = vadd.f32 %v1914, %v1978
    %v1980 = vpop.f32.mrf.mxu0
    %v1981 = vadd.f32 %v1914, %v1980
    %1982 = vmatmul.bf16.gmra.mxu0 %v1897
    %v1983 = vpop.f32.mrf.mxu0
    %v1984 = vadd.f32 %v1914, %v1983
    %v1985 = vpop.f32.mrf.mxu0
    %v1986 = vadd.f32 %v1914, %v1985
    %1987 = vmatmul.bf16.gmra.mxu0 %v1898
    %v1988 = vpop.f32.mrf.mxu0
    %v1989 = vadd.f32 %v1914, %v1988
    %v1990 = vpop.f32.mrf.mxu0
    %v1991 = vadd.f32 %v1914, %v1990
    %1992 = vmatmul.bf16.gmra.mxu0 %v1899
    %v1993 = vpop.f32.mrf.mxu0
    %v1994 = vadd.f32 %v1914, %v1993
    %v1995 = vpop.f32.mrf.mxu0
    %v1996 = vadd.f32 %v1914, %v1995
    %1997 = vmatmul.bf16.gmra.mxu0 %v1900
    %v1998 = vpop.f32.mrf.mxu0
    %v1999 = vadd.f32 %v1914, %v1998
    %v2000 = vpop.f32.mrf.mxu0
    %v2001 = vadd.f32 %v1914, %v2000
    %2002 = vmatmul.bf16.gmra.mxu0 %v1901
    %v2003 = vpop.f32.mrf.mxu0
    %v2004 = vadd.f32 %v1914, %v2003
    %v2005 = vpop.f32.mrf.mxu0
    %v2006 = vadd.f32 %v1914, %v2005
    %2007 = vmatmul.bf16.gmra.mxu0 %v1902
    %v2008 = vpop.f32.mrf.mxu0
    %v2009 = vadd.f32 %v1914, %v2008
    %v2010 = vpop.f32.mrf.mxu0
    %v2011 = vadd.f32 %v1914, %v2010
    %2012 = vmatmul.bf16.gmra.mxu0 %v1903
    %v2013 = vpop.f32.mrf.mxu0
    %v2014 = vadd.f32 %v1914, %v2013
    %v2015 = vpop.f32.mrf.mxu0
    %v2016 = vadd.f32 %v1914, %v2015
    %2017 = vmatmul.bf16.gmra.mxu0 %v1904
    %v2018 = vpop.f32.mrf.mxu0
    %v2019 = vadd.f32 %v1914, %v2018
    %v2020 = vpop.f32.mrf.mxu0
    %v2021 = vadd.f32 %v1914, %v2020
    %2022 = vmatmul.bf16.gmra.mxu0 %v1905
    %v2023 = vpop.f32.mrf.mxu0
    %v2024 = vadd.f32 %v1914, %v2023
    %v2025 = vpop.f32.mrf.mxu0
    %v2026 = vadd.f32 %v1914, %v2025
    %2027 = vmatmul.bf16.gmra.mxu0 %v1906
    %v2028 = vpop.f32.mrf.mxu0
    %v2029 = vadd.f32 %v1914, %v2028
    %v2030 = vpop.f32.mrf.mxu0
    %v2031 = vadd.f32 %v1914, %v2030
    %2032 = vmatmul.bf16.gmra.mxu0 %v1907
    %v2033 = vpop.f32.mrf.mxu0
    %v2034 = vadd.f32 %v1914, %v2033
    %v2035 = vpop.f32.mrf.mxu0
    %v2036 = vadd.f32 %v1914, %v2035
    %2037 = vmatmul.bf16.gmra.mxu0 %v1908
    %v2038 = vpop.f32.mrf.mxu0
    %v2039 = vadd.f32 %v1914, %v2038
    %v2040 = vpop.f32.mrf.mxu0
    %v2041 = vadd.f32 %v1914, %v2040
    %2042 = vmatmul.bf16.gmra.mxu0 %v1909
    %v2043 = vpop.f32.mrf.mxu0
    %v2044 = vadd.f32 %v1914, %v2043
    %v2045 = vpop.f32.mrf.mxu0
    %v2046 = vadd.f32 %v1914, %v2045
    %2047 = vmatmul.bf16.gmra.mxu0 %v1910
    %v2048 = vpop.f32.mrf.mxu0
    %v2049 = vadd.f32 %v1914, %v2048
    %v2050 = vpop.f32.mrf.mxu0
    %v2051 = vadd.f32 %v1914, %v2050
    %2052 = vdwg.mxu0
    %v2053 = vadd.f32 %v1974, %v1575
    %v2054 = vadd.f32 %v1976, %v1576
    %v2055 = vadd.f32 %v1979, %v1577
    %v2056 = vadd.f32 %v1981, %v1578
    %v2057 = vadd.f32 %v1984, %v1579
    %v2058 = vadd.f32 %v1986, %v1580
    %v2059 = vadd.f32 %v1989, %v1581
    %v2060 = vadd.f32 %v1991, %v1582
    %v2061 = vadd.f32 %v1994, %v1583
    %v2062 = vadd.f32 %v1996, %v1584
    %v2063 = vadd.f32 %v1999, %v1585
    %v2064 = vadd.f32 %v2001, %v1586
    %v2065 = vadd.f32 %v2004, %v1587
    %v2066 = vadd.f32 %v2006, %v1588
    %v2067 = vadd.f32 %v2009, %v1589
    %v2068 = vadd.f32 %v2011, %v1590
    %v2069 = vadd.f32 %v2014, %v1591
    %v2070 = vadd.f32 %v2016, %v1592
    %v2071 = vadd.f32 %v2019, %v1593
    %v2072 = vadd.f32 %v2021, %v1594
    %v2073 = vadd.f32 %v2024, %v1595
    %v2074 = vadd.f32 %v2026, %v1596
    %v2075 = vadd.f32 %v2029, %v1597
    %v2076 = vadd.f32 %v2031, %v1598
    %v2077 = vadd.f32 %v2034, %v1599
    %v2078 = vadd.f32 %v2036, %v1600
    %v2079 = vadd.f32 %v2039, %v1601
    %v2080 = vadd.f32 %v2041, %v1602
    %v2081 = vadd.f32 %v2044, %v1603
    %v2082 = vadd.f32 %v2046, %v1604
    %v2083 = vadd.f32 %v2049, %v1605
    %v2084 = vadd.f32 %v2051, %v1606
    %vm2085 = vcmp.gt.f32.partialorder %v2053, 0.0
    %vm2086 = vcmp.gt.f32.partialorder %v2054, 0.0
    %vm2087 = vcmp.gt.f32.partialorder %v2055, 0.0
    %vm2088 = vcmp.gt.f32.partialorder %v2056, 0.0
    %vm2089 = vcmp.gt.f32.partialorder %v2057, 0.0
    %vm2090 = vcmp.gt.f32.partialorder %v2058, 0.0
    %vm2091 = vcmp.gt.f32.partialorder %v2059, 0.0
    %vm2092 = vcmp.gt.f32.partialorder %v2060, 0.0
    %vm2093 = vcmp.gt.f32.partialorder %v2061, 0.0
    %vm2094 = vcmp.gt.f32.partialorder %v2062, 0.0
    %vm2095 = vcmp.gt.f32.partialorder %v2063, 0.0
    %vm2096 = vcmp.gt.f32.partialorder %v2064, 0.0
    %vm2097 = vcmp.gt.f32.partialorder %v2065, 0.0
    %vm2098 = vcmp.gt.f32.partialorder %v2066, 0.0
    %vm2099 = vcmp.gt.f32.partialorder %v2067, 0.0
    %vm2100 = vcmp.gt.f32.partialorder %v2068, 0.0
    %vm2101 = vcmp.gt.f32.partialorder %v2069, 0.0
    %vm2102 = vcmp.gt.f32.partialorder %v2070, 0.0
    %vm2103 = vcmp.gt.f32.partialorder %v2071, 0.0
    %vm2104 = vcmp.gt.f32.partialorder %v2072, 0.0
    %vm2105 = vcmp.gt.f32.partialorder %v2073, 0.0
    %vm2106 = vcmp.gt.f32.partialorder %v2074, 0.0
    %vm2107 = vcmp.gt.f32.partialorder %v2075, 0.0
    %vm2108 = vcmp.gt.f32.partialorder %v2076, 0.0
    %vm2109 = vcmp.gt.f32.partialorder %v2077, 0.0
    %vm2110 = vcmp.gt.f32.partialorder %v2078, 0.0
    %vm2111 = vcmp.gt.f32.partialorder %v2079, 0.0
    %vm2112 = vcmp.gt.f32.partialorder %v2080, 0.0
    %vm2113 = vcmp.gt.f32.partialorder %v2081, 0.0
    %vm2114 = vcmp.gt.f32.partialorder %v2082, 0.0
    %vm2115 = vcmp.gt.f32.partialorder %v2083, 0.0
    %vm2116 = vcmp.gt.f32.partialorder %v2084, 0.0
    %v2117 = vmul.f32 %v2053, 0.1
    %v2118 = vmul.f32 %v2054, 0.1
    %v2119 = vmul.f32 %v2055, 0.1
    %v2120 = vmul.f32 %v2056, 0.1
    %v2121 = vmul.f32 %v2057, 0.1
    %v2122 = vmul.f32 %v2058, 0.1
    %v2123 = vmul.f32 %v2059, 0.1
    %v2124 = vmul.f32 %v2060, 0.1
    %v2125 = vmul.f32 %v2061, 0.1
    %v2126 = vmul.f32 %v2062, 0.1
    %v2127 = vmul.f32 %v2063, 0.1
    %v2128 = vmul.f32 %v2064, 0.1
    %v2129 = vmul.f32 %v2065, 0.1
    %v2130 = vmul.f32 %v2066, 0.1
    %v2131 = vmul.f32 %v2067, 0.1
    %v2132 = vmul.f32 %v2068, 0.1
    %v2133 = vmul.f32 %v2069, 0.1
    %v2134 = vmul.f32 %v2070, 0.1
    %v2135 = vmul.f32 %v2071, 0.1
    %v2136 = vmul.f32 %v2072, 0.1
    %v2137 = vmul.f32 %v2073, 0.1
    %v2138 = vmul.f32 %v2074, 0.1
    %v2139 = vmul.f32 %v2075, 0.1
    %v2140 = vmul.f32 %v2076, 0.1
    %v2141 = vmul.f32 %v2077, 0.1
    %v2142 = vmul.f32 %v2078, 0.1
    %v2143 = vmul.f32 %v2079, 0.1
    %v2144 = vmul.f32 %v2080, 0.1
    %v2145 = vmul.f32 %v2081, 0.1
    %v2146 = vmul.f32 %v2082, 0.1
    %v2147 = vmul.f32 %v2083, 0.1
    %v2148 = vmul.f32 %v2084, 0.1
    %v2149 = vsel %vm2085, %v2053, %v2117
    %v2150 = vsel %vm2086, %v2054, %v2118
    %v2151 = vsel %vm2087, %v2055, %v2119
    %v2152 = vsel %vm2088, %v2056, %v2120
    %v2153 = vsel %vm2089, %v2057, %v2121
    %v2154 = vsel %vm2090, %v2058, %v2122
    %v2155 = vsel %vm2091, %v2059, %v2123
    %v2156 = vsel %vm2092, %v2060, %v2124
    %v2157 = vsel %vm2093, %v2061, %v2125
    %v2158 = vsel %vm2094, %v2062, %v2126
    %v2159 = vsel %vm2095, %v2063, %v2127
    %v2160 = vsel %vm2096, %v2064, %v2128
    %v2161 = vsel %vm2097, %v2065, %v2129
    %v2162 = vsel %vm2098, %v2066, %v2130
    %v2163 = vsel %vm2099, %v2067, %v2131
    %v2164 = vsel %vm2100, %v2068, %v2132
    %v2165 = vsel %vm2101, %v2069, %v2133
    %v2166 = vsel %vm2102, %v2070, %v2134
    %v2167 = vsel %vm2103, %v2071, %v2135
    %v2168 = vsel %vm2104, %v2072, %v2136
    %v2169 = vsel %vm2105, %v2073, %v2137
    %v2170 = vsel %vm2106, %v2074, %v2138
    %v2171 = vsel %vm2107, %v2075, %v2139
    %v2172 = vsel %vm2108, %v2076, %v2140
    %v2173 = vsel %vm2109, %v2077, %v2141
    %v2174 = vsel %vm2110, %v2078, %v2142
    %v2175 = vsel %vm2111, %v2079, %v2143
    %v2176 = vsel %vm2112, %v2080, %v2144
    %v2177 = vsel %vm2113, %v2081, %v2145
    %v2178 = vsel %vm2114, %v2082, %v2146
    %v2179 = vsel %vm2115, %v2083, %v2147
    %v2180 = vsel %vm2116, %v2084, %v2148
    %v2181 = vld [vmem:[#allocation13] sm:$0xf]
    %v2182 = vld [vmem:[#allocation13 + $0x4] sm:$0xf]
    %v2183 = vld [vmem:[#allocation13 + $0x8] sm:$0xf]
    %v2184 = vld [vmem:[#allocation13 + $0xc] sm:$0xf]
    %v2185 = vld [vmem:[#allocation13 + $0x10] sm:$0xf]
    %v2186 = vld [vmem:[#allocation13 + $0x14] sm:$0xf]
    %v2187 = vld [vmem:[#allocation13 + $0x18] sm:$0xf]
    %v2188 = vld [vmem:[#allocation13 + $0x1c] sm:$0xf]
    %v2189 = vld [vmem:[#allocation13 + $0x20] sm:$0xf]
    %v2190 = vld [vmem:[#allocation13 + $0x24] sm:$0xf]
    %v2191 = vld [vmem:[#allocation13 + $0x28] sm:$0xf]
    %v2192 = vld [vmem:[#allocation13 + $0x2c] sm:$0xf]
    %v2193 = vld [vmem:[#allocation13 + $0x30] sm:$0xf]
    %v2194 = vld [vmem:[#allocation13 + $0x34] sm:$0xf]
    %v2195 = vld [vmem:[#allocation13 + $0x38] sm:$0xf]
    %v2196 = vld [vmem:[#allocation13 + $0x3c] sm:$0xf]
    %v2197 = vpack.c.bf16 %v2150, %v2149
    %v2198 = vpack.c.bf16 %v2152, %v2151
    %v2199 = vpack.c.bf16 %v2154, %v2153
    %v2200 = vpack.c.bf16 %v2156, %v2155
    %v2201 = vpack.c.bf16 %v2158, %v2157
    %v2202 = vpack.c.bf16 %v2160, %v2159
    %v2203 = vpack.c.bf16 %v2162, %v2161
    %v2204 = vpack.c.bf16 %v2164, %v2163
    %v2205 = vpack.c.bf16 %v2166, %v2165
    %v2206 = vpack.c.bf16 %v2168, %v2167
    %v2207 = vpack.c.bf16 %v2170, %v2169
    %v2208 = vpack.c.bf16 %v2172, %v2171
    %v2209 = vpack.c.bf16 %v2174, %v2173
    %v2210 = vpack.c.bf16 %v2176, %v2175
    %v2211 = vpack.c.bf16 %v2178, %v2177
    %v2212 = vpack.c.bf16 %v2180, %v2179
    %v2213 = vld [vmem:[%s8] sm:$0x1]
    %v2215 = vperm.slane %v2213, 0
    %v2233 = vunpack.c.l.b16 %v2181
    %v2234 = vunpack.c.l.b16 %v2182
    %v2235 = vunpack.c.l.b16 %v2183
    %v2236 = vunpack.c.l.b16 %v2184
    %v2237 = vunpack.c.l.b16 %v2185
    %v2238 = vunpack.c.l.b16 %v2186
    %v2239 = vunpack.c.l.b16 %v2187
    %v2240 = vunpack.c.l.b16 %v2188
    %v2241 = vunpack.c.l.b16 %v2189
    %v2242 = vunpack.c.l.b16 %v2190
    %v2243 = vunpack.c.l.b16 %v2191
    %v2244 = vunpack.c.l.b16 %v2192
    %v2245 = vunpack.c.l.b16 %v2193
    %v2246 = vunpack.c.l.b16 %v2194
    %v2247 = vunpack.c.l.b16 %v2195
    %v2248 = vunpack.c.l.b16 %v2196
    %v2249 = vpack.c.b16 %v2234, %v2233
    %v2250 = vpack.c.b16 %v2236, %v2235
    %v2251 = vpack.c.b16 %v2238, %v2237
    %v2252 = vpack.c.b16 %v2240, %v2239
    %v2253 = vpack.c.b16 %v2242, %v2241
    %v2254 = vpack.c.b16 %v2244, %v2243
    %v2255 = vpack.c.b16 %v2246, %v2245
    %v2256 = vpack.c.b16 %v2248, %v2247
    %2265 = vmatpush.bf16.msra.mxu0 %v2256
    %2266 = vmatpush.bf16.msra.mxu0 %v2255
    %2267 = vmatpush.bf16.msra.mxu0 %v2254
    %2268 = vmatpush.bf16.msra.mxu0 %v2253
    %2269 = vmatpush.bf16.msra.mxu0 %v2252
    %2270 = vmatpush.bf16.msra.mxu0 %v2251
    %2271 = vmatpush.bf16.msra.mxu0 %v2250
    %2272 = vmatpush.bf16.msra.mxu0 %v2249
    %2273 = vmatmul.bf16.gmra.mxu0 %v2197
    %v2274 = vpop.f32.mrf.mxu0
    %v2275 = vadd.f32 %v2215, %v2274
    %v2276 = vpop.f32.mrf.mxu0
    %v2277 = vadd.f32 %v2215, %v2276
    %2278 = vmatmul.bf16.gmra.mxu0 %v2198
    %v2279 = vpop.f32.mrf.mxu0
    %v2280 = vadd.f32 %v2215, %v2279
    %v2281 = vpop.f32.mrf.mxu0
    %v2282 = vadd.f32 %v2215, %v2281
    %2283 = vmatmul.bf16.gmra.mxu0 %v2199
    %v2284 = vpop.f32.mrf.mxu0
    %v2285 = vadd.f32 %v2215, %v2284
    %v2286 = vpop.f32.mrf.mxu0
    %v2287 = vadd.f32 %v2215, %v2286
    %2288 = vmatmul.bf16.gmra.mxu0 %v2200
    %v2289 = vpop.f32.mrf.mxu0
    %v2290 = vadd.f32 %v2215, %v2289
    %v2291 = vpop.f32.mrf.mxu0
    %v2292 = vadd.f32 %v2215, %v2291
    %2293 = vmatmul.bf16.gmra.mxu0 %v2201
    %v2294 = vpop.f32.mrf.mxu0
    %v2295 = vadd.f32 %v2215, %v2294
    %v2296 = vpop.f32.mrf.mxu0
    %v2297 = vadd.f32 %v2215, %v2296
    %2298 = vmatmul.bf16.gmra.mxu0 %v2202
    %v2299 = vpop.f32.mrf.mxu0
    %v2300 = vadd.f32 %v2215, %v2299
    %v2301 = vpop.f32.mrf.mxu0
    %v2302 = vadd.f32 %v2215, %v2301
    %2303 = vmatmul.bf16.gmra.mxu0 %v2203
    %v2304 = vpop.f32.mrf.mxu0
    %v2305 = vadd.f32 %v2215, %v2304
    %v2306 = vpop.f32.mrf.mxu0
    %v2307 = vadd.f32 %v2215, %v2306
    %2308 = vmatmul.bf16.gmra.mxu0 %v2204
    %v2309 = vpop.f32.mrf.mxu0
    %v2310 = vadd.f32 %v2215, %v2309
    %v2311 = vpop.f32.mrf.mxu0
    %v2312 = vadd.f32 %v2215, %v2311
    %2313 = vmatmul.bf16.gmra.mxu0 %v2205
    %v2314 = vpop.f32.mrf.mxu0
    %v2315 = vadd.f32 %v2215, %v2314
    %v2316 = vpop.f32.mrf.mxu0
    %v2317 = vadd.f32 %v2215, %v2316
    %2318 = vmatmul.bf16.gmra.mxu0 %v2206
    %v2319 = vpop.f32.mrf.mxu0
    %v2320 = vadd.f32 %v2215, %v2319
    %v2321 = vpop.f32.mrf.mxu0
    %v2322 = vadd.f32 %v2215, %v2321
    %2323 = vmatmul.bf16.gmra.mxu0 %v2207
    %v2324 = vpop.f32.mrf.mxu0
    %v2325 = vadd.f32 %v2215, %v2324
    %v2326 = vpop.f32.mrf.mxu0
    %v2327 = vadd.f32 %v2215, %v2326
    %2328 = vmatmul.bf16.gmra.mxu0 %v2208
    %v2329 = vpop.f32.mrf.mxu0
    %v2330 = vadd.f32 %v2215, %v2329
    %v2331 = vpop.f32.mrf.mxu0
    %v2332 = vadd.f32 %v2215, %v2331
    %2333 = vmatmul.bf16.gmra.mxu0 %v2209
    %v2334 = vpop.f32.mrf.mxu0
    %v2335 = vadd.f32 %v2215, %v2334
    %v2336 = vpop.f32.mrf.mxu0
    %v2337 = vadd.f32 %v2215, %v2336
    %2338 = vmatmul.bf16.gmra.mxu0 %v2210
    %v2339 = vpop.f32.mrf.mxu0
    %v2340 = vadd.f32 %v2215, %v2339
    %v2341 = vpop.f32.mrf.mxu0
    %v2342 = vadd.f32 %v2215, %v2341
    %2343 = vmatmul.bf16.gmra.mxu0 %v2211
    %v2344 = vpop.f32.mrf.mxu0
    %v2345 = vadd.f32 %v2215, %v2344
    %v2346 = vpop.f32.mrf.mxu0
    %v2347 = vadd.f32 %v2215, %v2346
    %2348 = vmatmul.bf16.gmra.mxu0 %v2212
    %v2349 = vpop.f32.mrf.mxu0
    %v2350 = vadd.f32 %v2215, %v2349
    %v2351 = vpop.f32.mrf.mxu0
    %v2352 = vadd.f32 %v2215, %v2351
    %2353 = vdwg.mxu0
    %vm2354 = vcmp.gt.f32.partialorder %v2275, 0.0
    %vm2355 = vcmp.gt.f32.partialorder %v2277, 0.0
    %vm2356 = vcmp.gt.f32.partialorder %v2280, 0.0
    %vm2357 = vcmp.gt.f32.partialorder %v2282, 0.0
    %vm2358 = vcmp.gt.f32.partialorder %v2285, 0.0
    %vm2359 = vcmp.gt.f32.partialorder %v2287, 0.0
    %vm2360 = vcmp.gt.f32.partialorder %v2290, 0.0
    %vm2361 = vcmp.gt.f32.partialorder %v2292, 0.0
    %vm2362 = vcmp.gt.f32.partialorder %v2295, 0.0
    %vm2363 = vcmp.gt.f32.partialorder %v2297, 0.0
    %vm2364 = vcmp.gt.f32.partialorder %v2300, 0.0
    %vm2365 = vcmp.gt.f32.partialorder %v2302, 0.0
    %vm2366 = vcmp.gt.f32.partialorder %v2305, 0.0
    %vm2367 = vcmp.gt.f32.partialorder %v2307, 0.0
    %vm2368 = vcmp.gt.f32.partialorder %v2310, 0.0
    %vm2369 = vcmp.gt.f32.partialorder %v2312, 0.0
    %vm2370 = vcmp.gt.f32.partialorder %v2315, 0.0
    %vm2371 = vcmp.gt.f32.partialorder %v2317, 0.0
    %vm2372 = vcmp.gt.f32.partialorder %v2320, 0.0
    %vm2373 = vcmp.gt.f32.partialorder %v2322, 0.0
    %vm2374 = vcmp.gt.f32.partialorder %v2325, 0.0
    %vm2375 = vcmp.gt.f32.partialorder %v2327, 0.0
    %vm2376 = vcmp.gt.f32.partialorder %v2330, 0.0
    %vm2377 = vcmp.gt.f32.partialorder %v2332, 0.0
    %vm2378 = vcmp.gt.f32.partialorder %v2335, 0.0
    %vm2379 = vcmp.gt.f32.partialorder %v2337, 0.0
    %vm2380 = vcmp.gt.f32.partialorder %v2340, 0.0
    %vm2381 = vcmp.gt.f32.partialorder %v2342, 0.0
    %vm2382 = vcmp.gt.f32.partialorder %v2345, 0.0
    %vm2383 = vcmp.gt.f32.partialorder %v2347, 0.0
    %vm2384 = vcmp.gt.f32.partialorder %v2350, 0.0
    %vm2385 = vcmp.gt.f32.partialorder %v2352, 0.0
    %v2386 = vmul.f32 %v2275, 0.1
    %v2387 = vmul.f32 %v2277, 0.1
    %v2388 = vmul.f32 %v2280, 0.1
    %v2389 = vmul.f32 %v2282, 0.1
    %v2390 = vmul.f32 %v2285, 0.1
    %v2391 = vmul.f32 %v2287, 0.1
    %v2392 = vmul.f32 %v2290, 0.1
    %v2393 = vmul.f32 %v2292, 0.1
    %v2394 = vmul.f32 %v2295, 0.1
    %v2395 = vmul.f32 %v2297, 0.1
    %v2396 = vmul.f32 %v2300, 0.1
    %v2397 = vmul.f32 %v2302, 0.1
    %v2398 = vmul.f32 %v2305, 0.1
    %v2399 = vmul.f32 %v2307, 0.1
    %v2400 = vmul.f32 %v2310, 0.1
    %v2401 = vmul.f32 %v2312, 0.1
    %v2402 = vmul.f32 %v2315, 0.1
    %v2403 = vmul.f32 %v2317, 0.1
    %v2404 = vmul.f32 %v2320, 0.1
    %v2405 = vmul.f32 %v2322, 0.1
    %v2406 = vmul.f32 %v2325, 0.1
    %v2407 = vmul.f32 %v2327, 0.1
    %v2408 = vmul.f32 %v2330, 0.1
    %v2409 = vmul.f32 %v2332, 0.1
    %v2410 = vmul.f32 %v2335, 0.1
    %v2411 = vmul.f32 %v2337, 0.1
    %v2412 = vmul.f32 %v2340, 0.1
    %v2413 = vmul.f32 %v2342, 0.1
    %v2414 = vmul.f32 %v2345, 0.1
    %v2415 = vmul.f32 %v2347, 0.1
    %v2416 = vmul.f32 %v2350, 0.1
    %v2417 = vmul.f32 %v2352, 0.1
    %v2418 = vsel %vm2354, %v2275, %v2386
    %v2419 = vsel %vm2355, %v2277, %v2387
    %v2420 = vsel %vm2356, %v2280, %v2388
    %v2421 = vsel %vm2357, %v2282, %v2389
    %v2422 = vsel %vm2358, %v2285, %v2390
    %v2423 = vsel %vm2359, %v2287, %v2391
    %v2424 = vsel %vm2360, %v2290, %v2392
    %v2425 = vsel %vm2361, %v2292, %v2393
    %v2426 = vsel %vm2362, %v2295, %v2394
    %v2427 = vsel %vm2363, %v2297, %v2395
    %v2428 = vsel %vm2364, %v2300, %v2396
    %v2429 = vsel %vm2365, %v2302, %v2397
    %v2430 = vsel %vm2366, %v2305, %v2398
    %v2431 = vsel %vm2367, %v2307, %v2399
    %v2432 = vsel %vm2368, %v2310, %v2400
    %v2433 = vsel %vm2369, %v2312, %v2401
    %v2434 = vsel %vm2370, %v2315, %v2402
    %v2435 = vsel %vm2371, %v2317, %v2403
    %v2436 = vsel %vm2372, %v2320, %v2404
    %v2437 = vsel %vm2373, %v2322, %v2405
    %v2438 = vsel %vm2374, %v2325, %v2406
    %v2439 = vsel %vm2375, %v2327, %v2407
    %v2440 = vsel %vm2376, %v2330, %v2408
    %v2441 = vsel %vm2377, %v2332, %v2409
    %v2442 = vsel %vm2378, %v2335, %v2410
    %v2443 = vsel %vm2379, %v2337, %v2411
    %v2444 = vsel %vm2380, %v2340, %v2412
    %v2445 = vsel %vm2381, %v2342, %v2413
    %v2446 = vsel %vm2382, %v2345, %v2414
    %v2447 = vsel %vm2383, %v2347, %v2415
    %v2448 = vsel %vm2384, %v2350, %v2416
    %v2449 = vsel %vm2385, %v2352, %v2417
    %v2450 = vld [vmem:[#allocation14] sm:$0xf]
    %v2451 = vld [vmem:[#allocation14 + $0x4] sm:$0xf]
    %v2452 = vld [vmem:[#allocation14 + $0x8] sm:$0xf]
    %v2453 = vld [vmem:[#allocation14 + $0xc] sm:$0xf]
    %v2454 = vld [vmem:[#allocation14 + $0x10] sm:$0xf]
    %v2455 = vld [vmem:[#allocation14 + $0x14] sm:$0xf]
    %v2456 = vld [vmem:[#allocation14 + $0x18] sm:$0xf]
    %v2457 = vld [vmem:[#allocation14 + $0x1c] sm:$0xf]
    %v2458 = vld [vmem:[#allocation14 + $0x20] sm:$0xf]
    %v2459 = vld [vmem:[#allocation14 + $0x24] sm:$0xf]
    %v2460 = vld [vmem:[#allocation14 + $0x28] sm:$0xf]
    %v2461 = vld [vmem:[#allocation14 + $0x2c] sm:$0xf]
    %v2462 = vld [vmem:[#allocation14 + $0x30] sm:$0xf]
    %v2463 = vld [vmem:[#allocation14 + $0x34] sm:$0xf]
    %v2464 = vld [vmem:[#allocation14 + $0x38] sm:$0xf]
    %v2465 = vld [vmem:[#allocation14 + $0x3c] sm:$0xf]
    %v2466 = vpack.c.bf16 %v2419, %v2418
    %v2467 = vpack.c.bf16 %v2421, %v2420
    %v2468 = vpack.c.bf16 %v2423, %v2422
    %v2469 = vpack.c.bf16 %v2425, %v2424
    %v2470 = vpack.c.bf16 %v2427, %v2426
    %v2471 = vpack.c.bf16 %v2429, %v2428
    %v2472 = vpack.c.bf16 %v2431, %v2430
    %v2473 = vpack.c.bf16 %v2433, %v2432
    %v2474 = vpack.c.bf16 %v2435, %v2434
    %v2475 = vpack.c.bf16 %v2437, %v2436
    %v2476 = vpack.c.bf16 %v2439, %v2438
    %v2477 = vpack.c.bf16 %v2441, %v2440
    %v2478 = vpack.c.bf16 %v2443, %v2442
    %v2479 = vpack.c.bf16 %v2445, %v2444
    %v2480 = vpack.c.bf16 %v2447, %v2446
    %v2481 = vpack.c.bf16 %v2449, %v2448
    %v2482 = vld [vmem:[%s10] sm:$0x1]
    %v2484 = vperm.slane %v2482, 0
    %v2502 = vunpack.c.l.b16 %v2450
    %v2503 = vunpack.c.l.b16 %v2451
    %v2504 = vunpack.c.l.b16 %v2452
    %v2505 = vunpack.c.l.b16 %v2453
    %v2506 = vunpack.c.l.b16 %v2454
    %v2507 = vunpack.c.l.b16 %v2455
    %v2508 = vunpack.c.l.b16 %v2456
    %v2509 = vunpack.c.l.b16 %v2457
    %v2510 = vunpack.c.l.b16 %v2458
    %v2511 = vunpack.c.l.b16 %v2459
    %v2512 = vunpack.c.l.b16 %v2460
    %v2513 = vunpack.c.l.b16 %v2461
    %v2514 = vunpack.c.l.b16 %v2462
    %v2515 = vunpack.c.l.b16 %v2463
    %v2516 = vunpack.c.l.b16 %v2464
    %v2517 = vunpack.c.l.b16 %v2465
    %v2518 = vpack.c.b16 %v2503, %v2502
    %v2519 = vpack.c.b16 %v2505, %v2504
    %v2520 = vpack.c.b16 %v2507, %v2506
    %v2521 = vpack.c.b16 %v2509, %v2508
    %v2522 = vpack.c.b16 %v2511, %v2510
    %v2523 = vpack.c.b16 %v2513, %v2512
    %v2524 = vpack.c.b16 %v2515, %v2514
    %v2525 = vpack.c.b16 %v2517, %v2516
    %2534 = vmatpush.bf16.msra.mxu0 %v2525
    %2535 = vmatpush.bf16.msra.mxu0 %v2524
    %2536 = vmatpush.bf16.msra.mxu0 %v2523
    %2537 = vmatpush.bf16.msra.mxu0 %v2522
    %2538 = vmatpush.bf16.msra.mxu0 %v2521
    %2539 = vmatpush.bf16.msra.mxu0 %v2520
    %2540 = vmatpush.bf16.msra.mxu0 %v2519
    %2541 = vmatpush.bf16.msra.mxu0 %v2518
    %2542 = vmatmul.bf16.gmra.mxu0 %v2466
    %v2543 = vpop.f32.mrf.mxu0
    %v2544 = vadd.f32 %v2484, %v2543
    %v2545 = vpop.f32.mrf.mxu0
    %v2546 = vadd.f32 %v2484, %v2545
    %2547 = vmatmul.bf16.gmra.mxu0 %v2467
    %v2548 = vpop.f32.mrf.mxu0
    %v2549 = vadd.f32 %v2484, %v2548
    %v2550 = vpop.f32.mrf.mxu0
    %v2551 = vadd.f32 %v2484, %v2550
    %2552 = vmatmul.bf16.gmra.mxu0 %v2468
    %v2553 = vpop.f32.mrf.mxu0
    %v2554 = vadd.f32 %v2484, %v2553
    %v2555 = vpop.f32.mrf.mxu0
    %v2556 = vadd.f32 %v2484, %v2555
    %2557 = vmatmul.bf16.gmra.mxu0 %v2469
    %v2558 = vpop.f32.mrf.mxu0
    %v2559 = vadd.f32 %v2484, %v2558
    %v2560 = vpop.f32.mrf.mxu0
    %v2561 = vadd.f32 %v2484, %v2560
    %2562 = vmatmul.bf16.gmra.mxu0 %v2470
    %v2563 = vpop.f32.mrf.mxu0
    %v2564 = vadd.f32 %v2484, %v2563
    %v2565 = vpop.f32.mrf.mxu0
    %v2566 = vadd.f32 %v2484, %v2565
    %2567 = vmatmul.bf16.gmra.mxu0 %v2471
    %v2568 = vpop.f32.mrf.mxu0
    %v2569 = vadd.f32 %v2484, %v2568
    %v2570 = vpop.f32.mrf.mxu0
    %v2571 = vadd.f32 %v2484, %v2570
    %2572 = vmatmul.bf16.gmra.mxu0 %v2472
    %v2573 = vpop.f32.mrf.mxu0
    %v2574 = vadd.f32 %v2484, %v2573
    %v2575 = vpop.f32.mrf.mxu0
    %v2576 = vadd.f32 %v2484, %v2575
    %2577 = vmatmul.bf16.gmra.mxu0 %v2473
    %v2578 = vpop.f32.mrf.mxu0
    %v2579 = vadd.f32 %v2484, %v2578
    %v2580 = vpop.f32.mrf.mxu0
    %v2581 = vadd.f32 %v2484, %v2580
    %2582 = vmatmul.bf16.gmra.mxu0 %v2474
    %v2583 = vpop.f32.mrf.mxu0
    %v2584 = vadd.f32 %v2484, %v2583
    %v2585 = vpop.f32.mrf.mxu0
    %v2586 = vadd.f32 %v2484, %v2585
    %2587 = vmatmul.bf16.gmra.mxu0 %v2475
    %v2588 = vpop.f32.mrf.mxu0
    %v2589 = vadd.f32 %v2484, %v2588
    %v2590 = vpop.f32.mrf.mxu0
    %v2591 = vadd.f32 %v2484, %v2590
    %2592 = vmatmul.bf16.gmra.mxu0 %v2476
    %v2593 = vpop.f32.mrf.mxu0
    %v2594 = vadd.f32 %v2484, %v2593
    %v2595 = vpop.f32.mrf.mxu0
    %v2596 = vadd.f32 %v2484, %v2595
    %2597 = vmatmul.bf16.gmra.mxu0 %v2477
    %v2598 = vpop.f32.mrf.mxu0
    %v2599 = vadd.f32 %v2484, %v2598
    %v2600 = vpop.f32.mrf.mxu0
    %v2601 = vadd.f32 %v2484, %v2600
    %2602 = vmatmul.bf16.gmra.mxu0 %v2478
    %v2603 = vpop.f32.mrf.mxu0
    %v2604 = vadd.f32 %v2484, %v2603
    %v2605 = vpop.f32.mrf.mxu0
    %v2606 = vadd.f32 %v2484, %v2605
    %2607 = vmatmul.bf16.gmra.mxu0 %v2479
    %v2608 = vpop.f32.mrf.mxu0
    %v2609 = vadd.f32 %v2484, %v2608
    %v2610 = vpop.f32.mrf.mxu0
    %v2611 = vadd.f32 %v2484, %v2610
    %2612 = vmatmul.bf16.gmra.mxu0 %v2480
    %v2613 = vpop.f32.mrf.mxu0
    %v2614 = vadd.f32 %v2484, %v2613
    %v2615 = vpop.f32.mrf.mxu0
    %v2616 = vadd.f32 %v2484, %v2615
    %2617 = vmatmul.bf16.gmra.mxu0 %v2481
    %v2618 = vpop.f32.mrf.mxu0
    %v2619 = vadd.f32 %v2484, %v2618
    %v2620 = vpop.f32.mrf.mxu0
    %v2621 = vadd.f32 %v2484, %v2620
    %2622 = vdwg.mxu0
    %2623 = vst [vmem:[#allocation16] sm:$0xff] %v2544
    %2624 = vst [vmem:[#allocation16 + $0x8] sm:$0xff] %v2546
    %2625 = vst [vmem:[#allocation16 + $0x10] sm:$0xff] %v2549
    %2626 = vst [vmem:[#allocation16 + $0x18] sm:$0xff] %v2551
    %2627 = vst [vmem:[#allocation16 + $0x20] sm:$0xff] %v2554
    %2628 = vst [vmem:[#allocation16 + $0x28] sm:$0xff] %v2556
    %2629 = vst [vmem:[#allocation16 + $0x30] sm:$0xff] %v2559
    %2630 = vst [vmem:[#allocation16 + $0x38] sm:$0xff] %v2561
    %2631 = vst [vmem:[#allocation16 + $0x40] sm:$0xff] %v2564
    %2632 = vst [vmem:[#allocation16 + $0x48] sm:$0xff] %v2566
    %2633 = vst [vmem:[#allocation16 + $0x50] sm:$0xff] %v2569
    %2634 = vst [vmem:[#allocation16 + $0x58] sm:$0xff] %v2571
    %2635 = vst [vmem:[#allocation16 + $0x60] sm:$0xff] %v2574
    %2636 = vst [vmem:[#allocation16 + $0x68] sm:$0xff] %v2576
    %2637 = vst [vmem:[#allocation16 + $0x70] sm:$0xff] %v2579
    %2638 = vst [vmem:[#allocation16 + $0x78] sm:$0xff] %v2581
    %2639 = vst [vmem:[#allocation16 + $0x80] sm:$0xff] %v2584
    %2640 = vst [vmem:[#allocation16 + $0x88] sm:$0xff] %v2586
    %2641 = vst [vmem:[#allocation16 + $0x90] sm:$0xff] %v2589
    %2642 = vst [vmem:[#allocation16 + $0x98] sm:$0xff] %v2591
    %2643 = vst [vmem:[#allocation16 + $0xa0] sm:$0xff] %v2594
    %2644 = vst [vmem:[#allocation16 + $0xa8] sm:$0xff] %v2596
    %2645 = vst [vmem:[#allocation16 + $0xb0] sm:$0xff] %v2599
    %2646 = vst [vmem:[#allocation16 + $0xb8] sm:$0xff] %v2601
    %2647 = vst [vmem:[#allocation16 + $0xc0] sm:$0xff] %v2604
    %2648 = vst [vmem:[#allocation16 + $0xc8] sm:$0xff] %v2606
    %2649 = vst [vmem:[#allocation16 + $0xd0] sm:$0xff] %v2609
    %2650 = vst [vmem:[#allocation16 + $0xd8] sm:$0xff] %v2611
    %2651 = vst [vmem:[#allocation16 + $0xe0] sm:$0xff] %v2614
    %2652 = vst [vmem:[#allocation16 + $0xe8] sm:$0xff] %v2616
    %2653 = vst [vmem:[#allocation16 + $0xf0] sm:$0xff] %v2619
    %2654 = vst [vmem:[#allocation16 + $0xf8] sm:$0xff] %v2621
    // Predicated region
    $region78: #{tpu_custom_call.1} parent=1 // pred_check
      _
    $region79: #{tpu_custom_call.1} parent=1 // pred_check_branch
      %2656 = sbr.rel (0) target = $region81
    $region80: #{tpu_custom_call.1} parent=1 // pred_region
      %2658 = vsyncadd [#allocation4], 0
      %s2659 = sshll.u32 [#allocation16], 4
      %s2660 = int_to_ptr.vmem [resolvable:$true] %s2659
      %s2661 = sshll.u32 %s11, 4
      %s2662 = int_to_ptr.hbm [resolvable:$true] %s2661
      %2667 = dma.vmem_to_hbm [thread:$0]  %s2660, 4096, %s2662, [#allocation4], 128, 128, 8
    $region81: #{tpu_custom_call.1} parent=1 // pred_fallthru
      _
    // Predicated region
    $region82: #{tpu_custom_call.1} parent=1 // pred_check
      _
    $region83: #{tpu_custom_call.1} parent=1 // pred_check_branch
      %2669 = sbr.rel (0) target = $region85
    $region84: #{tpu_custom_call.1} parent=1 // pred_region
      %2671 = dma.done [#allocation4], 4096
    $region85: #{tpu_custom_call.1} parent=1 // pred_fallthru
      _
    %2672 = vsyncpa [#allocation3], 1
    %2673 = vsyncpa [#allocation6], 1
    %2674 = vsyncpa [#allocation9], 1
    %2675 = vsyncpa [#allocation12], 1
    %2676 = vsyncpa [#allocation15], 1
    %2677 = vsyncpa [#allocation4], 1

</llo_original>
